<compile_context>
chip_gen: v7x
topology: tpu7x:2x2x1
jax: 0.10.0
libtpu: 0.0.40
codegen_flags: <defaults>
</compile_context>

<pallas_src>
import jax
import jax.numpy as jnp
from jax import lax
from jax.experimental import pallas as pl
from jax.experimental.pallas import tpu as pltpu


def _round_up(x, m):
    return (x + m - 1) // m * m


def _sigmoid(x):
    # Single EUP op (tanh) instead of exp + reciprocal.
    return 0.5 * jnp.tanh(0.5 * x) + 0.5


def _make_kernel(tt, bpc, hp, unroll):
    """Builds the kernel for one (batch chunk, time chunk) grid cell."""

    def kernel(x_ref, wih_ref, whh_ref, b_ref, wlin_ref, blin_ref,
               out_ref, h_scr, c_scr, hist_scr, pre_scr):
        # x_ref    : (tt*bpc, D)     flattened (time, batch) rows of this chunk
        # wih_ref  : (D, 4*hp)       input->gates weights (gate-blocked, padded)
        # whh_ref  : (hp, 4*hp)      hidden->gates weights (padded)
        # b_ref    : (1, 4*hp)       b_ih + b_hh (padded)
        # wlin_ref : (hp, L2p)       output Linear weights (fused mean|logvar)
        # blin_ref : (1, L2p)        output Linear bias
        # out_ref  : (tt*bpc, L2p)   fused mean||logvar for this chunk
        # h_scr/c_scr : (bpc, hp)    LSTM state carried across time chunks
        # hist_scr : (tt*bpc, hp)    per-chunk hidden-state history
        # pre_scr  : (tt*bpc, 4*hp)  per-chunk precomputed input gates
        t_chunk = pl.program_id(1)

        @pl.when(t_chunk == 0)
        def _init():
            h_scr[...] = jnp.zeros_like(h_scr)
            c_scr[...] = jnp.zeros_like(c_scr)

        # Phase 1: non-recurrent input projection for the whole chunk as one
        # matmul; bias folded in (broadcast once per chunk, not per step).
        pre_scr[...] = (
            jnp.dot(x_ref[...], wih_ref[...], preferred_element_type=jnp.float32)
            + b_ref[...])

        whh = whh_ref[...]  # loop-invariant, hoisted out of the recurrence

        # Phase 2: sequential LSTM recurrence over the tt steps of this chunk.
        def step(t, carry):
            h, c = carry
            r0 = pl.multiple_of(t * bpc, bpc)   # sublane-aligned start
            gates = pre_scr[pl.ds(r0, bpc), :] + jnp.dot(
                h, whh, preferred_element_type=jnp.float32)
            # PyTorch LSTM gate order: input, forget, cell (g), output.
            # Each slice is lane-aligned (hp is a multiple of 128).
            i_g = _sigmoid(gates[:, 0:hp])
            f_g = _sigmoid(gates[:, hp:2 * hp])
            g_g = jnp.tanh(gates[:, 2 * hp:3 * hp])
            c = f_g * c + i_g * g_g
            # o gate is off the c critical path -> compute after the c update.
            o_g = _sigmoid(gates[:, 3 * hp:4 * hp])
            h = o_g * jnp.tanh(c)
            hist_scr[pl.ds(r0, bpc), :] = h
            return h, c

        h_fin, c_fin = lax.fori_loop(0, tt, step, (h_scr[...], c_scr[...]),
                                     unroll=unroll)
        h_scr[...] = h_fin
        c_scr[...] = c_fin

        # Phase 3: fused output Linear for the whole chunk as one matmul;
        # single lane-dense store instead of 2*tt tiny stores.
        out_ref[...] = (
            jnp.dot(hist_scr[...], wlin_ref[...],
                    preferred_element_type=jnp.float32)
            + blin_ref[...]).astype(out_ref.dtype)

    return kernel


def rnn_vae_gaussian_encoder(x, params, *, time_chunk=32):
    """x: (T, B, D) float32, time-major.  Returns (mean, logvar), (T, B, L) each."""
    T, B, D = x.shape
    wih_t = params["wih_t"]      # (D, 4H)
    whh_t = params["whh_t"]      # (H, 4H)
    b = params["b"]              # (1, 4H)   (= b_ih + b_hh)
    wlin_t = params["wlin_t"]    # (H, 2L)
    blin = params["blin"]        # (1, 2L)
    H = whh_t.shape[0]
    L2 = wlin_t.shape[1]
    L = L2 // 2

    f32 = jnp.float32

    # --- TPU-friendly padded sizes (8 sublanes, 128 lanes) ---
    Bpc = 8                                   # batch rows per grid cell (sublanes)
    nb = pl.cdiv(max(B, 1), Bpc)              # batch chunks (parallel grid axis)
    Bp = nb * Bpc
    Hp = _round_up(H, 128)                    # lane-aligned gate slices
    G = 4 * Hp
    L2p = _round_up(L2, 128)                  # lane-dense fused output

    # --- VMEM budget: cap time chunk so everything fits v7x's 64 MiB / TC ---
    def vmem_bytes(tt):
        fb = 4
        x_buf = 2 * tt * Bpc * D * fb                 # double-buffered input chunk
        out_buf = 2 * tt * Bpc * L2p * fb             # double-buffered output chunk
        weights = (D * G + Hp * G + 8 * G + Hp * L2p + 8 * L2p) * fb  # Buffered(1)
        scratch = (2 * Bpc * Hp + tt * Bpc * Hp + tt * Bpc * G) * fb
        return x_buf + out_buf + weights + scratch

    VMEM_BUDGET = 48 * 1024 * 1024
    TT = max(1, min(time_chunk, T))
    while TT > 1 and vmem_bytes(TT) > VMEM_BUDGET:
        TT //= 2
    Tp = _round_up(T, TT)
    n_chunks = Tp // TT

    est = vmem_bytes(TT)
    # Raise the scoped VMEM limit only when needed (v5e default is 16 MiB);
    # never above a v7x-safe 60 MiB.
    vmem_limit = None if est < (12 << 20) else min(int(est * 1.3) + (2 << 20), 60 << 20)

    # Partial unroll once the per-step live set grows (Hp > 128 or long chunks).
    unroll = TT if (Hp <= 128 and TT <= 16) else min(8, TT)

    # --- pad parameters, preserving the [i|f|g|o] gate block structure ---
    def pad_gates(w, axis):
        parts = jnp.split(w, 4, axis=axis)
        pads = [(0, 0)] * w.ndim
        pads[axis] = (0, Hp - H)
        return jnp.concatenate([jnp.pad(p, pads) for p in parts], axis=axis)

    wih_p = pad_gates(wih_t.astype(f32), axis=1)                                  # (D, G)
    whh_p = pad_gates(jnp.pad(whh_t.astype(f32), ((0, Hp - H), (0, 0))), axis=1)  # (Hp, G)
    b_p = pad_gates(b.astype(f32), axis=1)                                        # (1, G)
    wlin_p = jnp.pad(wlin_t.astype(f32), ((0, Hp - H), (0, L2p - L2)))            # (Hp, L2p)
    blin_p = jnp.pad(blin.astype(f32), ((0, 0), (0, L2p - L2)))                   # (1, L2p)

    # --- pad inputs (batch -> Bp, time -> multiple of TT); lay out so the rows
    # of one (batch chunk, time chunk) block are contiguous ---
    x_p = jnp.pad(x.astype(f32), ((0, Tp - T), (0, Bp - B), (0, 0)))              # (Tp, Bp, D)
    x2d = (x_p.reshape(Tp, nb, Bpc, D)
               .transpose(1, 0, 2, 3)
               .reshape(nb * Tp * Bpc, D))

    kernel = _make_kernel(TT, Bpc, Hp, unroll)

    def run(single_buffer_weights):
        kwargs = {"pipeline_mode": pl.Buffered(1)} if single_buffer_weights else {}
        grid_spec = pltpu.PrefetchScalarGridSpec(
            num_scalar_prefetch=0,
            grid=(nb, n_chunks),
            in_specs=[
                pl.BlockSpec((TT * Bpc, D), lambda bi, ti: (bi * n_chunks + ti, 0)),
                pl.BlockSpec((D, G), lambda bi, ti: (0, 0), **kwargs),       # W_ih^T
                pl.BlockSpec((Hp, G), lambda bi, ti: (0, 0), **kwargs),      # W_hh^T
                pl.BlockSpec((1, G), lambda bi, ti: (0, 0), **kwargs),       # bias
                pl.BlockSpec((Hp, L2p), lambda bi, ti: (0, 0), **kwargs),    # W_lin^T
                pl.BlockSpec((1, L2p), lambda bi, ti: (0, 0), **kwargs),     # b_lin
            ],
            out_specs=pl.BlockSpec((TT * Bpc, L2p),
                                   lambda bi, ti: (bi * n_chunks + ti, 0)),
            scratch_shapes=[
                pltpu.VMEM((Bpc, Hp), f32),        # h carry (persists across chunks)
                pltpu.VMEM((Bpc, Hp), f32),        # c carry
                pltpu.VMEM((TT * Bpc, Hp), f32),   # per-chunk h history
                pltpu.VMEM((TT * Bpc, G), f32),    # per-chunk precomputed gates
            ],
        )
        return pl.pallas_call(
            kernel,
            out_shape=jax.ShapeDtypeStruct((nb * Tp * Bpc, L2p), f32),
            grid_spec=grid_spec,
            compiler_params=pltpu.CompilerParams(
                # batch chunks independent (uses both TCs on v7x when B >= 16);
                # time chunks carry (h, c) -> sequential.
                dimension_semantics=("parallel", "arbitrary"),
                vmem_limit_bytes=vmem_limit,
            ),
        )(x2d, wih_p, whh_p, b_p, wlin_p, blin_p)

    try:
        out2d = run(single_buffer_weights=True)
    except Exception:
        # Fallback if pl.Buffered(1) single-buffering is unsupported on this
        # jax version: identical kernel with default double-buffered weights.
        out2d = run(single_buffer_weights=False)

    out = (out2d.reshape(nb, Tp, Bpc, L2p)
                 .transpose(1, 0, 2, 3)
                 .reshape(Tp, Bp, L2p))[:T, :B, :L2]
    return out[..., :L], out[..., L:]


def reference_forward(x, params):
    """Pure-JAX reference of the same forward pass (lax.scan LSTM)."""
    wih_t, whh_t, b = params["wih_t"], params["whh_t"], params["b"]
    wlin_t, blin = params["wlin_t"], params["blin"]
    H = whh_t.shape[0]
    B = x.shape[1]

    def step(carry, x_t):
        h, c = carry
        gates = x_t @ wih_t + h @ whh_t + b
        i_g = jax.nn.sigmoid(gates[:, 0:H])
        f_g = jax.nn.sigmoid(gates[:, H:2 * H])
        g_g = jnp.tanh(gates[:, 2 * H:3 * H])
        o_g = jax.nn.sigmoid(gates[:, 3 * H:4 * H])
        c = f_g * c + i_g * g_g
        h = o_g * jnp.tanh(c)
        return (h, c), h

    init = (jnp.zeros((B, H), jnp.float32), jnp.zeros((B, H), jnp.float32))
    _, hs = lax.scan(step, init, x)                 # (T, B, H)
    out = hs @ wlin_t + blin                        # (T, B, 2L)
    L = out.shape[-1] // 2
    return out[..., :L], out[..., L:]


def make_params(key, input_dim, hidden_dim, latent_dim):
    """Deterministic synthetic parameters (PyTorch-style uniform init)."""
    k1, k2, k3, k4, k5, k6 = jax.random.split(key, 6)
    bound = 1.0 / jnp.sqrt(hidden_dim)

    def u(k, shape):
        return jax.random.uniform(k, shape, jnp.float32, -bound, bound)

    w_ih = u(k1, (4 * hidden_dim, input_dim))    # torch: (4H, D)
    w_hh = u(k2, (4 * hidden_dim, hidden_dim))   # torch: (4H, H)
    b_ih = u(k3, (4 * hidden_dim,))
    b_hh = u(k4, (4 * hidden_dim,))
    w_lin = u(k5, (2 * latent_dim, hidden_dim))  # torch Linear: (2L, H)
    b_lin = u(k6, (2 * latent_dim,))

    return {
        "wih_t": w_ih.T,                                  # (D, 4H)
        "whh_t": w_hh.T,                                  # (H, 4H)
        "b": (b_ih + b_hh).reshape(1, 4 * hidden_dim),    # (1, 4H)
        "wlin_t": w_lin.T,                                # (H, 2L)
        "blin": b_lin.reshape(1, 2 * latent_dim),         # (1, 2L)
    }


if __name__ == "__main__":
    T, B, D = 8, 2, 4          # seq len, batch, input_dim
    H, L = 32, 8               # rnn_hidden_dims=[32], latent_dim=8

    key = jax.random.PRNGKey(0)
    kx, kp = jax.random.split(key)
    x = jax.random.normal(kx, (T, B, D), jnp.float32)
    params = make_params(kp, D, H, L)

    mean, logvar = rnn_vae_gaussian_encoder(x, params)
    mean = jax.block_until_ready(mean)
    logvar = jax.block_until_ready(logvar)

    mean_ref, logvar_ref = reference_forward(x, params)
    assert mean.shape == (T, B, L) and logvar.shape == (T, B, L)
    assert jnp.allclose(mean, mean_ref, atol=2e-5, rtol=2e-5)
    assert jnp.allclose(logvar, logvar_ref, atol=2e-5, rtol=2e-5)

    print("KERNEL_OK")
</pallas_src>

<mosaic_0001>
module attributes {stable_mosaic.version = 11 : i64} {
  func.func @kernel(%arg0: i32, %arg1: i32, %arg2: memref<64x4xf32, #tpu.memory_space<vmem>>, %arg3: memref<4x512xf32, #tpu.memory_space<vmem>>, %arg4: memref<128x512xf32, #tpu.memory_space<vmem>>, %arg5: memref<1x512xf32, #tpu.memory_space<vmem>>, %arg6: memref<128x128xf32, #tpu.memory_space<vmem>>, %arg7: memref<1x128xf32, #tpu.memory_space<vmem>>, %arg8: memref<64x128xf32, #tpu.memory_space<vmem>>, %arg9: memref<8x128xf32, #tpu.memory_space<vmem>>, %arg10: memref<8x128xf32, #tpu.memory_space<vmem>>, %arg11: memref<64x128xf32, #tpu.memory_space<vmem>>, %arg12: memref<64x512xf32, #tpu.memory_space<vmem>>) attributes {dimension_semantics = [#tpu.dimension_semantics<parallel>, #tpu.dimension_semantics<arbitrary>], iteration_bounds = array<i64: 1, 1>, scalar_prefetch = 0 : i64, scratch_operands = 4 : i64, tpu.core_type = #tpu.core_type<tc>, window_params = [{transform_indices = @transform_0, window_bounds = array<i64: 64, 4>}, {pipeline_mode = #tpu.pipeline_mode<synchronous>, transform_indices = @transform_1, window_bounds = array<i64: 4, 512>}, {pipeline_mode = #tpu.pipeline_mode<synchronous>, transform_indices = @transform_2, window_bounds = array<i64: 128, 512>}, {pipeline_mode = #tpu.pipeline_mode<synchronous>, transform_indices = @transform_3, window_bounds = array<i64: 1, 512>}, {pipeline_mode = #tpu.pipeline_mode<synchronous>, transform_indices = @transform_4, window_bounds = array<i64: 128, 128>}, {pipeline_mode = #tpu.pipeline_mode<synchronous>, transform_indices = @transform_5, window_bounds = array<i64: 1, 128>}, {transform_indices = @transform_6, window_bounds = array<i64: 64, 128>}]} {
    %c0_i32 = arith.constant 0 : i32
    %0 = arith.cmpi eq, %arg1, %c0_i32 : i32
    %1 = arith.extui %0 : i1 to i32
    %c0_i32_0 = arith.constant 0 : i32
    %2 = arith.cmpi ne, %1, %c0_i32_0 : i32
    scf.if %2 {
      %cst_132 = arith.constant 0.000000e+00 : f32
      %334 = vector.broadcast %cst_132 : f32 to vector<8x128xf32>
      %c0_133 = arith.constant 0 : index
      %c0_134 = arith.constant 0 : index
      %335 = vector.load %arg9[%c0_133, %c0_134] : memref<8x128xf32, #tpu.memory_space<vmem>>, vector<8x128xf32>
      tpu.vector_store %arg9[%c0_133, %c0_134], %334 {strides = array<i32>} : memref<8x128xf32, #tpu.memory_space<vmem>>, vector<8x128xf32>,
      %cst_135 = arith.constant 0.000000e+00 : f32
      %336 = vector.broadcast %cst_135 : f32 to vector<8x128xf32>
      %c0_136 = arith.constant 0 : index
      %c0_137 = arith.constant 0 : index
      %337 = vector.load %arg10[%c0_136, %c0_137] : memref<8x128xf32, #tpu.memory_space<vmem>>, vector<8x128xf32>
      tpu.vector_store %arg10[%c0_136, %c0_137], %336 {strides = array<i32>} : memref<8x128xf32, #tpu.memory_space<vmem>>, vector<8x128xf32>,
    } else {
    }
    %c0 = arith.constant 0 : index
    %c0_1 = arith.constant 0 : index
    %3 = vector.load %arg2[%c0, %c0_1] : memref<64x4xf32, #tpu.memory_space<vmem>>, vector<64x4xf32>
    %c0_2 = arith.constant 0 : index
    %c0_3 = arith.constant 0 : index
    %4 = vector.load %arg3[%c0_2, %c0_3] : memref<4x512xf32, #tpu.memory_space<vmem>>, vector<4x512xf32>
    %cst = arith.constant dense<0.000000e+00> : vector<64x512xf32>
    %5 = tpu.matmul %3, %4, %cst {dimension_numbers = #tpu.dot_dimension_numbers<[1], [0], [0], [1], [0, 0, 1, 1], [], []>} : vector<64x4xf32>, vector<4x512xf32>, vector<64x512xf32> -> vector<64x512xf32>
    %c0_4 = arith.constant 0 : index
    %c0_5 = arith.constant 0 : index
    %6 = vector.load %arg5[%c0_4, %c0_5] : memref<1x512xf32, #tpu.memory_space<vmem>>, vector<1x512xf32>
    %7 = vector.broadcast %6 : vector<1x512xf32> to vector<64x512xf32>
    %8 = arith.addf %5, %7 : vector<64x512xf32>
    %c0_6 = arith.constant 0 : index
    %c0_7 = arith.constant 0 : index
    %9 = vector.load %arg12[%c0_6, %c0_7] : memref<64x512xf32, #tpu.memory_space<vmem>>, vector<64x512xf32>
    tpu.vector_store %arg12[%c0_6, %c0_7], %8 {strides = array<i32>} : memref<64x512xf32, #tpu.memory_space<vmem>>, vector<64x512xf32>,
    %c0_8 = arith.constant 0 : index
    %c0_9 = arith.constant 0 : index
    %10 = vector.load %arg4[%c0_8, %c0_9] : memref<128x512xf32, #tpu.memory_space<vmem>>, vector<128x512xf32>
    %c0_10 = arith.constant 0 : index
    %c0_11 = arith.constant 0 : index
    %11 = vector.load %arg9[%c0_10, %c0_11] : memref<8x128xf32, #tpu.memory_space<vmem>>, vector<8x128xf32>
    %c0_12 = arith.constant 0 : index
    %c0_13 = arith.constant 0 : index
    %12 = vector.load %arg10[%c0_12, %c0_13] : memref<8x128xf32, #tpu.memory_space<vmem>>, vector<8x128xf32>
    %c0_i32_14 = arith.constant 0 : i32
    %c8_i32 = arith.constant 8 : i32
    %13 = arith.muli %c0_i32_14, %c8_i32 : i32
    %14 = tpu.assume_multiple %13, 8 : i32
    %15 = arith.index_cast %14 : i32 to index
    %c0_15 = arith.constant 0 : index
    %16 = vector.load %arg12[%15, %c0_15] : memref<64x512xf32, #tpu.memory_space<vmem>>, vector<8x512xf32>
    %cst_16 = arith.constant dense<0.000000e+00> : vector<8x512xf32>
    %17 = tpu.matmul %11, %10, %cst_16 {dimension_numbers = #tpu.dot_dimension_numbers<[1], [0], [0], [1], [0, 0, 1, 1], [], []>} : vector<8x128xf32>, vector<128x512xf32>, vector<8x512xf32> -> vector<8x512xf32>
    %18 = arith.addf %16, %17 : vector<8x512xf32>
    %19 = vector.extract_strided_slice %18 {offsets = [0, 0], sizes = [8, 128], strides = [1, 1]} : vector<8x512xf32> to vector<8x128xf32>
    %cst_17 = arith.constant 5.000000e-01 : f32
    %20 = vector.broadcast %cst_17 : f32 to vector<8x128xf32>
    %21 = arith.mulf %20, %19 : vector<8x128xf32>
    %22 = math.tanh %21 : vector<8x128xf32>
    %cst_18 = arith.constant 5.000000e-01 : f32
    %23 = vector.broadcast %cst_18 : f32 to vector<8x128xf32>
    %24 = arith.mulf %23, %22 : vector<8x128xf32>
    %cst_19 = arith.constant 5.000000e-01 : f32
    %25 = vector.broadcast %cst_19 : f32 to vector<8x128xf32>
    %26 = arith.addf %24, %25 : vector<8x128xf32>
    %27 = vector.extract_strided_slice %18 {offsets = [0, 128], sizes = [8, 128], strides = [1, 1]} : vector<8x512xf32> to vector<8x128xf32>
    %cst_20 = arith.constant 5.000000e-01 : f32
    %28 = vector.broadcast %cst_20 : f32 to vector<8x128xf32>
    %29 = arith.mulf %28, %27 : vector<8x128xf32>
    %30 = math.tanh %29 : vector<8x128xf32>
    %cst_21 = arith.constant 5.000000e-01 : f32
    %31 = vector.broadcast %cst_21 : f32 to vector<8x128xf32>
    %32 = arith.mulf %31, %30 : vector<8x128xf32>
    %cst_22 = arith.constant 5.000000e-01 : f32
    %33 = vector.broadcast %cst_22 : f32 to vector<8x128xf32>
    %34 = arith.addf %32, %33 : vector<8x128xf32>
    %35 = vector.extract_strided_slice %18 {offsets = [0, 256], sizes = [8, 128], strides = [1, 1]} : vector<8x512xf32> to vector<8x128xf32>
    %36 = math.tanh %35 : vector<8x128xf32>
    %37 = arith.mulf %34, %12 : vector<8x128xf32>
    %38 = arith.mulf %26, %36 : vector<8x128xf32>
    %39 = arith.addf %37, %38 : vector<8x128xf32>
    %40 = vector.extract_strided_slice %18 {offsets = [0, 384], sizes = [8, 128], strides = [1, 1]} : vector<8x512xf32> to vector<8x128xf32>
    %cst_23 = arith.constant 5.000000e-01 : f32
    %41 = vector.broadcast %cst_23 : f32 to vector<8x128xf32>
    %42 = arith.mulf %41, %40 : vector<8x128xf32>
    %43 = math.tanh %42 : vector<8x128xf32>
    %cst_24 = arith.constant 5.000000e-01 : f32
    %44 = vector.broadcast %cst_24 : f32 to vector<8x128xf32>
    %45 = arith.mulf %44, %43 : vector<8x128xf32>
    %cst_25 = arith.constant 5.000000e-01 : f32
    %46 = vector.broadcast %cst_25 : f32 to vector<8x128xf32>
    %47 = arith.addf %45, %46 : vector<8x128xf32>
    %48 = math.tanh %39 : vector<8x128xf32>
    %49 = arith.mulf %47, %48 : vector<8x128xf32>
    %50 = arith.index_cast %14 : i32 to index
    %c0_26 = arith.constant 0 : index
    %51 = vector.load %arg11[%50, %c0_26] : memref<64x128xf32, #tpu.memory_space<vmem>>, vector<8x128xf32>
    tpu.vector_store %arg11[%50, %c0_26], %49 {strides = array<i32>} : memref<64x128xf32, #tpu.memory_space<vmem>>, vector<8x128xf32>,
    %c1_i32 = arith.constant 1 : i32
    %c8_i32_27 = arith.constant 8 : i32
    %52 = arith.muli %c1_i32, %c8_i32_27 : i32
    %53 = tpu.assume_multiple %52, 8 : i32
    %54 = arith.index_cast %53 : i32 to index
    %c0_28 = arith.constant 0 : index
    %55 = vector.load %arg12[%54, %c0_28] : memref<64x512xf32, #tpu.memory_space<vmem>>, vector<8x512xf32>
    %cst_29 = arith.constant dense<0.000000e+00> : vector<8x512xf32>
    %56 = tpu.matmul %49, %10, %cst_29 {dimension_numbers = #tpu.dot_dimension_numbers<[1], [0], [0], [1], [0, 0, 1, 1], [], []>} : vector<8x128xf32>, vector<128x512xf32>, vector<8x512xf32> -> vector<8x512xf32>
    %57 = arith.addf %55, %56 : vector<8x512xf32>
    %58 = vector.extract_strided_slice %57 {offsets = [0, 0], sizes = [8, 128], strides = [1, 1]} : vector<8x512xf32> to vector<8x128xf32>
    %cst_30 = arith.constant 5.000000e-01 : f32
    %59 = vector.broadcast %cst_30 : f32 to vector<8x128xf32>
    %60 = arith.mulf %59, %58 : vector<8x128xf32>
    %61 = math.tanh %60 : vector<8x128xf32>
    %cst_31 = arith.constant 5.000000e-01 : f32
    %62 = vector.broadcast %cst_31 : f32 to vector<8x128xf32>
    %63 = arith.mulf %62, %61 : vector<8x128xf32>
    %cst_32 = arith.constant 5.000000e-01 : f32
    %64 = vector.broadcast %cst_32 : f32 to vector<8x128xf32>
    %65 = arith.addf %63, %64 : vector<8x128xf32>
    %66 = vector.extract_strided_slice %57 {offsets = [0, 128], sizes = [8, 128], strides = [1, 1]} : vector<8x512xf32> to vector<8x128xf32>
    %cst_33 = arith.constant 5.000000e-01 : f32
    %67 = vector.broadcast %cst_33 : f32 to vector<8x128xf32>
    %68 = arith.mulf %67, %66 : vector<8x128xf32>
    %69 = math.tanh %68 : vector<8x128xf32>
    %cst_34 = arith.constant 5.000000e-01 : f32
    %70 = vector.broadcast %cst_34 : f32 to vector<8x128xf32>
    %71 = arith.mulf %70, %69 : vector<8x128xf32>
    %cst_35 = arith.constant 5.000000e-01 : f32
    %72 = vector.broadcast %cst_35 : f32 to vector<8x128xf32>
    %73 = arith.addf %71, %72 : vector<8x128xf32>
    %74 = vector.extract_strided_slice %57 {offsets = [0, 256], sizes = [8, 128], strides = [1, 1]} : vector<8x512xf32> to vector<8x128xf32>
    %75 = math.tanh %74 : vector<8x128xf32>
    %76 = arith.mulf %73, %39 : vector<8x128xf32>
    %77 = arith.mulf %65, %75 : vector<8x128xf32>
    %78 = arith.addf %76, %77 : vector<8x128xf32>
    %79 = vector.extract_strided_slice %57 {offsets = [0, 384], sizes = [8, 128], strides = [1, 1]} : vector<8x512xf32> to vector<8x128xf32>
    %cst_36 = arith.constant 5.000000e-01 : f32
    %80 = vector.broadcast %cst_36 : f32 to vector<8x128xf32>
    %81 = arith.mulf %80, %79 : vector<8x128xf32>
    %82 = math.tanh %81 : vector<8x128xf32>
    %cst_37 = arith.constant 5.000000e-01 : f32
    %83 = vector.broadcast %cst_37 : f32 to vector<8x128xf32>
    %84 = arith.mulf %83, %82 : vector<8x128xf32>
    %cst_38 = arith.constant 5.000000e-01 : f32
    %85 = vector.broadcast %cst_38 : f32 to vector<8x128xf32>
    %86 = arith.addf %84, %85 : vector<8x128xf32>
    %87 = math.tanh %78 : vector<8x128xf32>
    %88 = arith.mulf %86, %87 : vector<8x128xf32>
    %89 = arith.index_cast %53 : i32 to index
    %c0_39 = arith.constant 0 : index
    %90 = vector.load %arg11[%89, %c0_39] : memref<64x128xf32, #tpu.memory_space<vmem>>, vector<8x128xf32>
    tpu.vector_store %arg11[%89, %c0_39], %88 {strides = array<i32>} : memref<64x128xf32, #tpu.memory_space<vmem>>, vector<8x128xf32>,
    %c2_i32 = arith.constant 2 : i32
    %c8_i32_40 = arith.constant 8 : i32
    %91 = arith.muli %c2_i32, %c8_i32_40 : i32
    %92 = tpu.assume_multiple %91, 8 : i32
    %93 = arith.index_cast %92 : i32 to index
    %c0_41 = arith.constant 0 : index
    %94 = vector.load %arg12[%93, %c0_41] : memref<64x512xf32, #tpu.memory_space<vmem>>, vector<8x512xf32>
    %cst_42 = arith.constant dense<0.000000e+00> : vector<8x512xf32>
    %95 = tpu.matmul %88, %10, %cst_42 {dimension_numbers = #tpu.dot_dimension_numbers<[1], [0], [0], [1], [0, 0, 1, 1], [], []>} : vector<8x128xf32>, vector<128x512xf32>, vector<8x512xf32> -> vector<8x512xf32>
    %96 = arith.addf %94, %95 : vector<8x512xf32>
    %97 = vector.extract_strided_slice %96 {offsets = [0, 0], sizes = [8, 128], strides = [1, 1]} : vector<8x512xf32> to vector<8x128xf32>
    %cst_43 = arith.constant 5.000000e-01 : f32
    %98 = vector.broadcast %cst_43 : f32 to vector<8x128xf32>
    %99 = arith.mulf %98, %97 : vector<8x128xf32>
    %100 = math.tanh %99 : vector<8x128xf32>
    %cst_44 = arith.constant 5.000000e-01 : f32
    %101 = vector.broadcast %cst_44 : f32 to vector<8x128xf32>
    %102 = arith.mulf %101, %100 : vector<8x128xf32>
    %cst_45 = arith.constant 5.000000e-01 : f32
    %103 = vector.broadcast %cst_45 : f32 to vector<8x128xf32>
    %104 = arith.addf %102, %103 : vector<8x128xf32>
    %105 = vector.extract_strided_slice %96 {offsets = [0, 128], sizes = [8, 128], strides = [1, 1]} : vector<8x512xf32> to vector<8x128xf32>
    %cst_46 = arith.constant 5.000000e-01 : f32
    %106 = vector.broadcast %cst_46 : f32 to vector<8x128xf32>
    %107 = arith.mulf %106, %105 : vector<8x128xf32>
    %108 = math.tanh %107 : vector<8x128xf32>
    %cst_47 = arith.constant 5.000000e-01 : f32
    %109 = vector.broadcast %cst_47 : f32 to vector<8x128xf32>
    %110 = arith.mulf %109, %108 : vector<8x128xf32>
    %cst_48 = arith.constant 5.000000e-01 : f32
    %111 = vector.broadcast %cst_48 : f32 to vector<8x128xf32>
    %112 = arith.addf %110, %111 : vector<8x128xf32>
    %113 = vector.extract_strided_slice %96 {offsets = [0, 256], sizes = [8, 128], strides = [1, 1]} : vector<8x512xf32> to vector<8x128xf32>
    %114 = math.tanh %113 : vector<8x128xf32>
    %115 = arith.mulf %112, %78 : vector<8x128xf32>
    %116 = arith.mulf %104, %114 : vector<8x128xf32>
    %117 = arith.addf %115, %116 : vector<8x128xf32>
    %118 = vector.extract_strided_slice %96 {offsets = [0, 384], sizes = [8, 128], strides = [1, 1]} : vector<8x512xf32> to vector<8x128xf32>
    %cst_49 = arith.constant 5.000000e-01 : f32
    %119 = vector.broadcast %cst_49 : f32 to vector<8x128xf32>
    %120 = arith.mulf %119, %118 : vector<8x128xf32>
    %121 = math.tanh %120 : vector<8x128xf32>
    %cst_50 = arith.constant 5.000000e-01 : f32
    %122 = vector.broadcast %cst_50 : f32 to vector<8x128xf32>
    %123 = arith.mulf %122, %121 : vector<8x128xf32>
    %cst_51 = arith.constant 5.000000e-01 : f32
    %124 = vector.broadcast %cst_51 : f32 to vector<8x128xf32>
    %125 = arith.addf %123, %124 : vector<8x128xf32>
    %126 = math.tanh %117 : vector<8x128xf32>
    %127 = arith.mulf %125, %126 : vector<8x128xf32>
    %128 = arith.index_cast %92 : i32 to index
    %c0_52 = arith.constant 0 : index
    %129 = vector.load %arg11[%128, %c0_52] : memref<64x128xf32, #tpu.memory_space<vmem>>, vector<8x128xf32>
    tpu.vector_store %arg11[%128, %c0_52], %127 {strides = array<i32>} : memref<64x128xf32, #tpu.memory_space<vmem>>, vector<8x128xf32>,
    %c3_i32 = arith.constant 3 : i32
    %c8_i32_53 = arith.constant 8 : i32
    %130 = arith.muli %c3_i32, %c8_i32_53 : i32
    %131 = tpu.assume_multiple %130, 8 : i32
    %132 = arith.index_cast %131 : i32 to index
    %c0_54 = arith.constant 0 : index
    %133 = vector.load %arg12[%132, %c0_54] : memref<64x512xf32, #tpu.memory_space<vmem>>, vector<8x512xf32>
    %cst_55 = arith.constant dense<0.000000e+00> : vector<8x512xf32>
    %134 = tpu.matmul %127, %10, %cst_55 {dimension_numbers = #tpu.dot_dimension_numbers<[1], [0], [0], [1], [0, 0, 1, 1], [], []>} : vector<8x128xf32>, vector<128x512xf32>, vector<8x512xf32> -> vector<8x512xf32>
    %135 = arith.addf %133, %134 : vector<8x512xf32>
    %136 = vector.extract_strided_slice %135 {offsets = [0, 0], sizes = [8, 128], strides = [1, 1]} : vector<8x512xf32> to vector<8x128xf32>
    %cst_56 = arith.constant 5.000000e-01 : f32
    %137 = vector.broadcast %cst_56 : f32 to vector<8x128xf32>
    %138 = arith.mulf %137, %136 : vector<8x128xf32>
    %139 = math.tanh %138 : vector<8x128xf32>
    %cst_57 = arith.constant 5.000000e-01 : f32
    %140 = vector.broadcast %cst_57 : f32 to vector<8x128xf32>
    %141 = arith.mulf %140, %139 : vector<8x128xf32>
    %cst_58 = arith.constant 5.000000e-01 : f32
    %142 = vector.broadcast %cst_58 : f32 to vector<8x128xf32>
    %143 = arith.addf %141, %142 : vector<8x128xf32>
    %144 = vector.extract_strided_slice %135 {offsets = [0, 128], sizes = [8, 128], strides = [1, 1]} : vector<8x512xf32> to vector<8x128xf32>
    %cst_59 = arith.constant 5.000000e-01 : f32
    %145 = vector.broadcast %cst_59 : f32 to vector<8x128xf32>
    %146 = arith.mulf %145, %144 : vector<8x128xf32>
    %147 = math.tanh %146 : vector<8x128xf32>
    %cst_60 = arith.constant 5.000000e-01 : f32
    %148 = vector.broadcast %cst_60 : f32 to vector<8x128xf32>
    %149 = arith.mulf %148, %147 : vector<8x128xf32>
    %cst_61 = arith.constant 5.000000e-01 : f32
    %150 = vector.broadcast %cst_61 : f32 to vector<8x128xf32>
    %151 = arith.addf %149, %150 : vector<8x128xf32>
    %152 = vector.extract_strided_slice %135 {offsets = [0, 256], sizes = [8, 128], strides = [1, 1]} : vector<8x512xf32> to vector<8x128xf32>
    %153 = math.tanh %152 : vector<8x128xf32>
    %154 = arith.mulf %151, %117 : vector<8x128xf32>
    %155 = arith.mulf %143, %153 : vector<8x128xf32>
    %156 = arith.addf %154, %155 : vector<8x128xf32>
    %157 = vector.extract_strided_slice %135 {offsets = [0, 384], sizes = [8, 128], strides = [1, 1]} : vector<8x512xf32> to vector<8x128xf32>
    %cst_62 = arith.constant 5.000000e-01 : f32
    %158 = vector.broadcast %cst_62 : f32 to vector<8x128xf32>
    %159 = arith.mulf %158, %157 : vector<8x128xf32>
    %160 = math.tanh %159 : vector<8x128xf32>
    %cst_63 = arith.constant 5.000000e-01 : f32
    %161 = vector.broadcast %cst_63 : f32 to vector<8x128xf32>
    %162 = arith.mulf %161, %160 : vector<8x128xf32>
    %cst_64 = arith.constant 5.000000e-01 : f32
    %163 = vector.broadcast %cst_64 : f32 to vector<8x128xf32>
    %164 = arith.addf %162, %163 : vector<8x128xf32>
    %165 = math.tanh %156 : vector<8x128xf32>
    %166 = arith.mulf %164, %165 : vector<8x128xf32>
    %167 = arith.index_cast %131 : i32 to index
    %c0_65 = arith.constant 0 : index
    %168 = vector.load %arg11[%167, %c0_65] : memref<64x128xf32, #tpu.memory_space<vmem>>, vector<8x128xf32>
    tpu.vector_store %arg11[%167, %c0_65], %166 {strides = array<i32>} : memref<64x128xf32, #tpu.memory_space<vmem>>, vector<8x128xf32>,
    %c4_i32 = arith.constant 4 : i32
    %c8_i32_66 = arith.constant 8 : i32
    %169 = arith.muli %c4_i32, %c8_i32_66 : i32
    %170 = tpu.assume_multiple %169, 8 : i32
    %171 = arith.index_cast %170 : i32 to index
    %c0_67 = arith.constant 0 : index
    %172 = vector.load %arg12[%171, %c0_67] : memref<64x512xf32, #tpu.memory_space<vmem>>, vector<8x512xf32>
    %cst_68 = arith.constant dense<0.000000e+00> : vector<8x512xf32>
    %173 = tpu.matmul %166, %10, %cst_68 {dimension_numbers = #tpu.dot_dimension_numbers<[1], [0], [0], [1], [0, 0, 1, 1], [], []>} : vector<8x128xf32>, vector<128x512xf32>, vector<8x512xf32> -> vector<8x512xf32>
    %174 = arith.addf %172, %173 : vector<8x512xf32>
    %175 = vector.extract_strided_slice %174 {offsets = [0, 0], sizes = [8, 128], strides = [1, 1]} : vector<8x512xf32> to vector<8x128xf32>
    %cst_69 = arith.constant 5.000000e-01 : f32
    %176 = vector.broadcast %cst_69 : f32 to vector<8x128xf32>
    %177 = arith.mulf %176, %175 : vector<8x128xf32>
    %178 = math.tanh %177 : vector<8x128xf32>
    %cst_70 = arith.constant 5.000000e-01 : f32
    %179 = vector.broadcast %cst_70 : f32 to vector<8x128xf32>
    %180 = arith.mulf %179, %178 : vector<8x128xf32>
    %cst_71 = arith.constant 5.000000e-01 : f32
    %181 = vector.broadcast %cst_71 : f32 to vector<8x128xf32>
    %182 = arith.addf %180, %181 : vector<8x128xf32>
    %183 = vector.extract_strided_slice %174 {offsets = [0, 128], sizes = [8, 128], strides = [1, 1]} : vector<8x512xf32> to vector<8x128xf32>
    %cst_72 = arith.constant 5.000000e-01 : f32
    %184 = vector.broadcast %cst_72 : f32 to vector<8x128xf32>
    %185 = arith.mulf %184, %183 : vector<8x128xf32>
    %186 = math.tanh %185 : vector<8x128xf32>
    %cst_73 = arith.constant 5.000000e-01 : f32
    %187 = vector.broadcast %cst_73 : f32 to vector<8x128xf32>
    %188 = arith.mulf %187, %186 : vector<8x128xf32>
    %cst_74 = arith.constant 5.000000e-01 : f32
    %189 = vector.broadcast %cst_74 : f32 to vector<8x128xf32>
    %190 = arith.addf %188, %189 : vector<8x128xf32>
    %191 = vector.extract_strided_slice %174 {offsets = [0, 256], sizes = [8, 128], strides = [1, 1]} : vector<8x512xf32> to vector<8x128xf32>
    %192 = math.tanh %191 : vector<8x128xf32>
    %193 = arith.mulf %190, %156 : vector<8x128xf32>
    %194 = arith.mulf %182, %192 : vector<8x128xf32>
    %195 = arith.addf %193, %194 : vector<8x128xf32>
    %196 = vector.extract_strided_slice %174 {offsets = [0, 384], sizes = [8, 128], strides = [1, 1]} : vector<8x512xf32> to vector<8x128xf32>
    %cst_75 = arith.constant 5.000000e-01 : f32
    %197 = vector.broadcast %cst_75 : f32 to vector<8x128xf32>
    %198 = arith.mulf %197, %196 : vector<8x128xf32>
    %199 = math.tanh %198 : vector<8x128xf32>
    %cst_76 = arith.constant 5.000000e-01 : f32
    %200 = vector.broadcast %cst_76 : f32 to vector<8x128xf32>
    %201 = arith.mulf %200, %199 : vector<8x128xf32>
    %cst_77 = arith.constant 5.000000e-01 : f32
    %202 = vector.broadcast %cst_77 : f32 to vector<8x128xf32>
    %203 = arith.addf %201, %202 : vector<8x128xf32>
    %204 = math.tanh %195 : vector<8x128xf32>
    %205 = arith.mulf %203, %204 : vector<8x128xf32>
    %206 = arith.index_cast %170 : i32 to index
    %c0_78 = arith.constant 0 : index
    %207 = vector.load %arg11[%206, %c0_78] : memref<64x128xf32, #tpu.memory_space<vmem>>, vector<8x128xf32>
    tpu.vector_store %arg11[%206, %c0_78], %205 {strides = array<i32>} : memref<64x128xf32, #tpu.memory_space<vmem>>, vector<8x128xf32>,
    %c5_i32 = arith.constant 5 : i32
    %c8_i32_79 = arith.constant 8 : i32
    %208 = arith.muli %c5_i32, %c8_i32_79 : i32
    %209 = tpu.assume_multiple %208, 8 : i32
    %210 = arith.index_cast %209 : i32 to index
    %c0_80 = arith.constant 0 : index
    %211 = vector.load %arg12[%210, %c0_80] : memref<64x512xf32, #tpu.memory_space<vmem>>, vector<8x512xf32>
    %cst_81 = arith.constant dense<0.000000e+00> : vector<8x512xf32>
    %212 = tpu.matmul %205, %10, %cst_81 {dimension_numbers = #tpu.dot_dimension_numbers<[1], [0], [0], [1], [0, 0, 1, 1], [], []>} : vector<8x128xf32>, vector<128x512xf32>, vector<8x512xf32> -> vector<8x512xf32>
    %213 = arith.addf %211, %212 : vector<8x512xf32>
    %214 = vector.extract_strided_slice %213 {offsets = [0, 0], sizes = [8, 128], strides = [1, 1]} : vector<8x512xf32> to vector<8x128xf32>
    %cst_82 = arith.constant 5.000000e-01 : f32
    %215 = vector.broadcast %cst_82 : f32 to vector<8x128xf32>
    %216 = arith.mulf %215, %214 : vector<8x128xf32>
    %217 = math.tanh %216 : vector<8x128xf32>
    %cst_83 = arith.constant 5.000000e-01 : f32
    %218 = vector.broadcast %cst_83 : f32 to vector<8x128xf32>
    %219 = arith.mulf %218, %217 : vector<8x128xf32>
    %cst_84 = arith.constant 5.000000e-01 : f32
    %220 = vector.broadcast %cst_84 : f32 to vector<8x128xf32>
    %221 = arith.addf %219, %220 : vector<8x128xf32>
    %222 = vector.extract_strided_slice %213 {offsets = [0, 128], sizes = [8, 128], strides = [1, 1]} : vector<8x512xf32> to vector<8x128xf32>
    %cst_85 = arith.constant 5.000000e-01 : f32
    %223 = vector.broadcast %cst_85 : f32 to vector<8x128xf32>
    %224 = arith.mulf %223, %222 : vector<8x128xf32>
    %225 = math.tanh %224 : vector<8x128xf32>
    %cst_86 = arith.constant 5.000000e-01 : f32
    %226 = vector.broadcast %cst_86 : f32 to vector<8x128xf32>
    %227 = arith.mulf %226, %225 : vector<8x128xf32>
    %cst_87 = arith.constant 5.000000e-01 : f32
    %228 = vector.broadcast %cst_87 : f32 to vector<8x128xf32>
    %229 = arith.addf %227, %228 : vector<8x128xf32>
    %230 = vector.extract_strided_slice %213 {offsets = [0, 256], sizes = [8, 128], strides = [1, 1]} : vector<8x512xf32> to vector<8x128xf32>
    %231 = math.tanh %230 : vector<8x128xf32>
    %232 = arith.mulf %229, %195 : vector<8x128xf32>
    %233 = arith.mulf %221, %231 : vector<8x128xf32>
    %234 = arith.addf %232, %233 : vector<8x128xf32>
    %235 = vector.extract_strided_slice %213 {offsets = [0, 384], sizes = [8, 128], strides = [1, 1]} : vector<8x512xf32> to vector<8x128xf32>
    %cst_88 = arith.constant 5.000000e-01 : f32
    %236 = vector.broadcast %cst_88 : f32 to vector<8x128xf32>
    %237 = arith.mulf %236, %235 : vector<8x128xf32>
    %238 = math.tanh %237 : vector<8x128xf32>
    %cst_89 = arith.constant 5.000000e-01 : f32
    %239 = vector.broadcast %cst_89 : f32 to vector<8x128xf32>
    %240 = arith.mulf %239, %238 : vector<8x128xf32>
    %cst_90 = arith.constant 5.000000e-01 : f32
    %241 = vector.broadcast %cst_90 : f32 to vector<8x128xf32>
    %242 = arith.addf %240, %241 : vector<8x128xf32>
    %243 = math.tanh %234 : vector<8x128xf32>
    %244 = arith.mulf %242, %243 : vector<8x128xf32>
    %245 = arith.index_cast %209 : i32 to index
    %c0_91 = arith.constant 0 : index
    %246 = vector.load %arg11[%245, %c0_91] : memref<64x128xf32, #tpu.memory_space<vmem>>, vector<8x128xf32>
    tpu.vector_store %arg11[%245, %c0_91], %244 {strides = array<i32>} : memref<64x128xf32, #tpu.memory_space<vmem>>, vector<8x128xf32>,
    %c6_i32 = arith.constant 6 : i32
    %c8_i32_92 = arith.constant 8 : i32
    %247 = arith.muli %c6_i32, %c8_i32_92 : i32
    %248 = tpu.assume_multiple %247, 8 : i32
    %249 = arith.index_cast %248 : i32 to index
    %c0_93 = arith.constant 0 : index
    %250 = vector.load %arg12[%249, %c0_93] : memref<64x512xf32, #tpu.memory_space<vmem>>, vector<8x512xf32>
    %cst_94 = arith.constant dense<0.000000e+00> : vector<8x512xf32>
    %251 = tpu.matmul %244, %10, %cst_94 {dimension_numbers = #tpu.dot_dimension_numbers<[1], [0], [0], [1], [0, 0, 1, 1], [], []>} : vector<8x128xf32>, vector<128x512xf32>, vector<8x512xf32> -> vector<8x512xf32>
    %252 = arith.addf %250, %251 : vector<8x512xf32>
    %253 = vector.extract_strided_slice %252 {offsets = [0, 0], sizes = [8, 128], strides = [1, 1]} : vector<8x512xf32> to vector<8x128xf32>
    %cst_95 = arith.constant 5.000000e-01 : f32
    %254 = vector.broadcast %cst_95 : f32 to vector<8x128xf32>
    %255 = arith.mulf %254, %253 : vector<8x128xf32>
    %256 = math.tanh %255 : vector<8x128xf32>
    %cst_96 = arith.constant 5.000000e-01 : f32
    %257 = vector.broadcast %cst_96 : f32 to vector<8x128xf32>
    %258 = arith.mulf %257, %256 : vector<8x128xf32>
    %cst_97 = arith.constant 5.000000e-01 : f32
    %259 = vector.broadcast %cst_97 : f32 to vector<8x128xf32>
    %260 = arith.addf %258, %259 : vector<8x128xf32>
    %261 = vector.extract_strided_slice %252 {offsets = [0, 128], sizes = [8, 128], strides = [1, 1]} : vector<8x512xf32> to vector<8x128xf32>
    %cst_98 = arith.constant 5.000000e-01 : f32
    %262 = vector.broadcast %cst_98 : f32 to vector<8x128xf32>
    %263 = arith.mulf %262, %261 : vector<8x128xf32>
    %264 = math.tanh %263 : vector<8x128xf32>
    %cst_99 = arith.constant 5.000000e-01 : f32
    %265 = vector.broadcast %cst_99 : f32 to vector<8x128xf32>
    %266 = arith.mulf %265, %264 : vector<8x128xf32>
    %cst_100 = arith.constant 5.000000e-01 : f32
    %267 = vector.broadcast %cst_100 : f32 to vector<8x128xf32>
    %268 = arith.addf %266, %267 : vector<8x128xf32>
    %269 = vector.extract_strided_slice %252 {offsets = [0, 256], sizes = [8, 128], strides = [1, 1]} : vector<8x512xf32> to vector<8x128xf32>
    %270 = math.tanh %269 : vector<8x128xf32>
    %271 = arith.mulf %268, %234 : vector<8x128xf32>
    %272 = arith.mulf %260, %270 : vector<8x128xf32>
    %273 = arith.addf %271, %272 : vector<8x128xf32>
    %274 = vector.extract_strided_slice %252 {offsets = [0, 384], sizes = [8, 128], strides = [1, 1]} : vector<8x512xf32> to vector<8x128xf32>
    %cst_101 = arith.constant 5.000000e-01 : f32
    %275 = vector.broadcast %cst_101 : f32 to vector<8x128xf32>
    %276 = arith.mulf %275, %274 : vector<8x128xf32>
    %277 = math.tanh %276 : vector<8x128xf32>
    %cst_102 = arith.constant 5.000000e-01 : f32
    %278 = vector.broadcast %cst_102 : f32 to vector<8x128xf32>
    %279 = arith.mulf %278, %277 : vector<8x128xf32>
    %cst_103 = arith.constant 5.000000e-01 : f32
    %280 = vector.broadcast %cst_103 : f32 to vector<8x128xf32>
    %281 = arith.addf %279, %280 : vector<8x128xf32>
    %282 = math.tanh %273 : vector<8x128xf32>
    %283 = arith.mulf %281, %282 : vector<8x128xf32>
    %284 = arith.index_cast %248 : i32 to index
    %c0_104 = arith.constant 0 : index
    %285 = vector.load %arg11[%284, %c0_104] : memref<64x128xf32, #tpu.memory_space<vmem>>, vector<8x128xf32>
    tpu.vector_store %arg11[%284, %c0_104], %283 {strides = array<i32>} : memref<64x128xf32, #tpu.memory_space<vmem>>, vector<8x128xf32>,
    %c7_i32 = arith.constant 7 : i32
    %c8_i32_105 = arith.constant 8 : i32
    %286 = arith.muli %c7_i32, %c8_i32_105 : i32
    %287 = tpu.assume_multiple %286, 8 : i32
    %288 = arith.index_cast %287 : i32 to index
    %c0_106 = arith.constant 0 : index
    %289 = vector.load %arg12[%288, %c0_106] : memref<64x512xf32, #tpu.memory_space<vmem>>, vector<8x512xf32>
    %cst_107 = arith.constant dense<0.000000e+00> : vector<8x512xf32>
    %290 = tpu.matmul %283, %10, %cst_107 {dimension_numbers = #tpu.dot_dimension_numbers<[1], [0], [0], [1], [0, 0, 1, 1], [], []>} : vector<8x128xf32>, vector<128x512xf32>, vector<8x512xf32> -> vector<8x512xf32>
    %291 = arith.addf %289, %290 : vector<8x512xf32>
    %292 = vector.extract_strided_slice %291 {offsets = [0, 0], sizes = [8, 128], strides = [1, 1]} : vector<8x512xf32> to vector<8x128xf32>
    %cst_108 = arith.constant 5.000000e-01 : f32
    %293 = vector.broadcast %cst_108 : f32 to vector<8x128xf32>
    %294 = arith.mulf %293, %292 : vector<8x128xf32>
    %295 = math.tanh %294 : vector<8x128xf32>
    %cst_109 = arith.constant 5.000000e-01 : f32
    %296 = vector.broadcast %cst_109 : f32 to vector<8x128xf32>
    %297 = arith.mulf %296, %295 : vector<8x128xf32>
    %cst_110 = arith.constant 5.000000e-01 : f32
    %298 = vector.broadcast %cst_110 : f32 to vector<8x128xf32>
    %299 = arith.addf %297, %298 : vector<8x128xf32>
    %300 = vector.extract_strided_slice %291 {offsets = [0, 128], sizes = [8, 128], strides = [1, 1]} : vector<8x512xf32> to vector<8x128xf32>
    %cst_111 = arith.constant 5.000000e-01 : f32
    %301 = vector.broadcast %cst_111 : f32 to vector<8x128xf32>
    %302 = arith.mulf %301, %300 : vector<8x128xf32>
    %303 = math.tanh %302 : vector<8x128xf32>
    %cst_112 = arith.constant 5.000000e-01 : f32
    %304 = vector.broadcast %cst_112 : f32 to vector<8x128xf32>
    %305 = arith.mulf %304, %303 : vector<8x128xf32>
    %cst_113 = arith.constant 5.000000e-01 : f32
    %306 = vector.broadcast %cst_113 : f32 to vector<8x128xf32>
    %307 = arith.addf %305, %306 : vector<8x128xf32>
    %308 = vector.extract_strided_slice %291 {offsets = [0, 256], sizes = [8, 128], strides = [1, 1]} : vector<8x512xf32> to vector<8x128xf32>
    %309 = math.tanh %308 : vector<8x128xf32>
    %310 = arith.mulf %307, %273 : vector<8x128xf32>
    %311 = arith.mulf %299, %309 : vector<8x128xf32>
    %312 = arith.addf %310, %311 : vector<8x128xf32>
    %313 = vector.extract_strided_slice %291 {offsets = [0, 384], sizes = [8, 128], strides = [1, 1]} : vector<8x512xf32> to vector<8x128xf32>
    %cst_114 = arith.constant 5.000000e-01 : f32
    %314 = vector.broadcast %cst_114 : f32 to vector<8x128xf32>
    %315 = arith.mulf %314, %313 : vector<8x128xf32>
    %316 = math.tanh %315 : vector<8x128xf32>
    %cst_115 = arith.constant 5.000000e-01 : f32
    %317 = vector.broadcast %cst_115 : f32 to vector<8x128xf32>
    %318 = arith.mulf %317, %316 : vector<8x128xf32>
    %cst_116 = arith.constant 5.000000e-01 : f32
    %319 = vector.broadcast %cst_116 : f32 to vector<8x128xf32>
    %320 = arith.addf %318, %319 : vector<8x128xf32>
    %321 = math.tanh %312 : vector<8x128xf32>
    %322 = arith.mulf %320, %321 : vector<8x128xf32>
    %323 = arith.index_cast %287 : i32 to index
    %c0_117 = arith.constant 0 : index
    %324 = vector.load %arg11[%323, %c0_117] : memref<64x128xf32, #tpu.memory_space<vmem>>, vector<8x128xf32>
    tpu.vector_store %arg11[%323, %c0_117], %322 {strides = array<i32>} : memref<64x128xf32, #tpu.memory_space<vmem>>, vector<8x128xf32>,
    %c8_i32_118 = arith.constant 8 : i32
    %c0_119 = arith.constant 0 : index
    %c0_120 = arith.constant 0 : index
    %325 = vector.load %arg9[%c0_119, %c0_120] : memref<8x128xf32, #tpu.memory_space<vmem>>, vector<8x128xf32>
    tpu.vector_store %arg9[%c0_119, %c0_120], %322 {strides = array<i32>} : memref<8x128xf32, #tpu.memory_space<vmem>>, vector<8x128xf32>,
    %c0_121 = arith.constant 0 : index
    %c0_122 = arith.constant 0 : index
    %326 = vector.load %arg10[%c0_121, %c0_122] : memref<8x128xf32, #tpu.memory_space<vmem>>, vector<8x128xf32>
    tpu.vector_store %arg10[%c0_121, %c0_122], %312 {strides = array<i32>} : memref<8x128xf32, #tpu.memory_space<vmem>>, vector<8x128xf32>,
    %c0_123 = arith.constant 0 : index
    %c0_124 = arith.constant 0 : index
    %327 = vector.load %arg11[%c0_123, %c0_124] : memref<64x128xf32, #tpu.memory_space<vmem>>, vector<64x128xf32>
    %c0_125 = arith.constant 0 : index
    %c0_126 = arith.constant 0 : index
    %328 = vector.load %arg6[%c0_125, %c0_126] : memref<128x128xf32, #tpu.memory_space<vmem>>, vector<128x128xf32>
    %cst_127 = arith.constant dense<0.000000e+00> : vector<64x128xf32>
    %329 = tpu.matmul %327, %328, %cst_127 {dimension_numbers = #tpu.dot_dimension_numbers<[1], [0], [0], [1], [0, 0, 1, 1], [], []>} : vector<64x128xf32>, vector<128x128xf32>, vector<64x128xf32> -> vector<64x128xf32>
    %c0_128 = arith.constant 0 : index
    %c0_129 = arith.constant 0 : index
    %330 = vector.load %arg7[%c0_128, %c0_129] : memref<1x128xf32, #tpu.memory_space<vmem>>, vector<1x128xf32>
    %331 = vector.broadcast %330 : vector<1x128xf32> to vector<64x128xf32>
    %332 = arith.addf %329, %331 : vector<64x128xf32>
    %c0_130 = arith.constant 0 : index
    %c0_131 = arith.constant 0 : index
    %333 = vector.load %arg8[%c0_130, %c0_131] : memref<64x128xf32, #tpu.memory_space<vmem>>, vector<64x128xf32>
    tpu.vector_store %arg8[%c0_130, %c0_131], %332 {strides = array<i32>} : memref<64x128xf32, #tpu.memory_space<vmem>>, vector<64x128xf32>,
    return
  }
  func.func @transform_0(%arg0: i32, %arg1: i32) -> (i32, i32) {
    %c1_i32 = arith.constant 1 : i32
    %0 = arith.muli %arg0, %c1_i32 : i32
    %1 = arith.addi %0, %arg1 : i32
    %c0_i32 = arith.constant 0 : i32
    %c0_i32_0 = arith.constant 0 : i32
    return %1, %c0_i32 : i32, i32
  }
  func.func @transform_1(%arg0: i32, %arg1: i32) -> (i32, i32) {
    %c0_i32 = arith.constant 0 : i32
    %c0_i32_0 = arith.constant 0 : i32
    %c0_i32_1 = arith.constant 0 : i32
    return %c0_i32, %c0_i32_0 : i32, i32
  }
  func.func @transform_2(%arg0: i32, %arg1: i32) -> (i32, i32) {
    %c0_i32 = arith.constant 0 : i32
    %c0_i32_0 = arith.constant 0 : i32
    %c0_i32_1 = arith.constant 0 : i32
    return %c0_i32, %c0_i32_0 : i32, i32
  }
  func.func @transform_3(%arg0: i32, %arg1: i32) -> (i32, i32) {
    %c0_i32 = arith.constant 0 : i32
    %c0_i32_0 = arith.constant 0 : i32
    %c0_i32_1 = arith.constant 0 : i32
    return %c0_i32, %c0_i32_0 : i32, i32
  }
  func.func @transform_4(%arg0: i32, %arg1: i32) -> (i32, i32) {
    %c0_i32 = arith.constant 0 : i32
    %c0_i32_0 = arith.constant 0 : i32
    %c0_i32_1 = arith.constant 0 : i32
    return %c0_i32, %c0_i32_0 : i32, i32
  }
  func.func @transform_5(%arg0: i32, %arg1: i32) -> (i32, i32) {
    %c0_i32 = arith.constant 0 : i32
    %c0_i32_0 = arith.constant 0 : i32
    %c0_i32_1 = arith.constant 0 : i32
    return %c0_i32, %c0_i32_0 : i32, i32
  }
  func.func @transform_6(%arg0: i32, %arg1: i32) -> (i32, i32) {
    %c1_i32 = arith.constant 1 : i32
    %0 = arith.muli %arg0, %c1_i32 : i32
    %1 = arith.addi %0, %arg1 : i32
    %c0_i32 = arith.constant 0 : i32
    %c0_i32_0 = arith.constant 0 : i32
    return %1, %c0_i32 : i32, i32
  }
}

module attributes {stable_mosaic.version = 11 : i64} {
  func.func @kernel(%arg0: i32, %arg1: i32, %arg2: memref<64x4xf32, #tpu.memory_space<vmem>>, %arg3: memref<4x512xf32, #tpu.memory_space<vmem>>, %arg4: memref<128x512xf32, #tpu.memory_space<vmem>>, %arg5: memref<1x512xf32, #tpu.memory_space<vmem>>, %arg6: memref<128x128xf32, #tpu.memory_space<vmem>>, %arg7: memref<1x128xf32, #tpu.memory_space<vmem>>, %arg8: memref<64x128xf32, #tpu.memory_space<vmem>>, %arg9: memref<8x128xf32, #tpu.memory_space<vmem>>, %arg10: memref<8x128xf32, #tpu.memory_space<vmem>>, %arg11: memref<64x128xf32, #tpu.memory_space<vmem>>, %arg12: memref<64x512xf32, #tpu.memory_space<vmem>>) attributes {dimension_semantics = [#tpu.dimension_semantics<parallel>, #tpu.dimension_semantics<arbitrary>], iteration_bounds = array<i64: 1, 1>, scalar_prefetch = 0 : i64, scratch_operands = 4 : i64, tpu.core_type = #tpu.core_type<tc>, window_params = [{transform_indices = @transform_0, window_bounds = array<i64: 64, 4>}, {pipeline_mode = #tpu.pipeline_mode<synchronous>, transform_indices = @transform_1, window_bounds = array<i64: 4, 512>}, {pipeline_mode = #tpu.pipeline_mode<synchronous>, transform_indices = @transform_2, window_bounds = array<i64: 128, 512>}, {pipeline_mode = #tpu.pipeline_mode<synchronous>, transform_indices = @transform_3, window_bounds = array<i64: 1, 512>}, {pipeline_mode = #tpu.pipeline_mode<synchronous>, transform_indices = @transform_4, window_bounds = array<i64: 128, 128>}, {pipeline_mode = #tpu.pipeline_mode<synchronous>, transform_indices = @transform_5, window_bounds = array<i64: 1, 128>}, {transform_indices = @transform_6, window_bounds = array<i64: 64, 128>}]} {
    %c0_i32 = arith.constant 0 : i32
    %0 = arith.cmpi eq, %arg1, %c0_i32 : i32
    %1 = arith.extui %0 : i1 to i32
    %c0_i32_0 = arith.constant 0 : i32
    %2 = arith.cmpi ne, %1, %c0_i32_0 : i32
    scf.if %2 {
      %cst_132 = arith.constant 0.000000e+00 : f32
      %334 = vector.broadcast %cst_132 : f32 to vector<8x128xf32>
      %c0_133 = arith.constant 0 : index
      %c0_134 = arith.constant 0 : index
      %335 = vector.load %arg9[%c0_133, %c0_134] : memref<8x128xf32, #tpu.memory_space<vmem>>, vector<8x128xf32>
      tpu.vector_store %arg9[%c0_133, %c0_134], %334 {strides = array<i32>} : memref<8x128xf32, #tpu.memory_space<vmem>>, vector<8x128xf32>,
      %cst_135 = arith.constant 0.000000e+00 : f32
      %336 = vector.broadcast %cst_135 : f32 to vector<8x128xf32>
      %c0_136 = arith.constant 0 : index
      %c0_137 = arith.constant 0 : index
      %337 = vector.load %arg10[%c0_136, %c0_137] : memref<8x128xf32, #tpu.memory_space<vmem>>, vector<8x128xf32>
      tpu.vector_store %arg10[%c0_136, %c0_137], %336 {strides = array<i32>} : memref<8x128xf32, #tpu.memory_space<vmem>>, vector<8x128xf32>,
    } else {
    }
    %c0 = arith.constant 0 : index
    %c0_1 = arith.constant 0 : index
    %3 = vector.load %arg2[%c0, %c0_1] : memref<64x4xf32, #tpu.memory_space<vmem>>, vector<64x4xf32>
    %c0_2 = arith.constant 0 : index
    %c0_3 = arith.constant 0 : index
    %4 = vector.load %arg3[%c0_2, %c0_3] : memref<4x512xf32, #tpu.memory_space<vmem>>, vector<4x512xf32>
    %cst = arith.constant dense<0.000000e+00> : vector<64x512xf32>
    %5 = tpu.matmul %3, %4, %cst {dimension_numbers = #tpu.dot_dimension_numbers<[1], [0], [0], [1], [0, 0, 1, 1], [], []>} : vector<64x4xf32>, vector<4x512xf32>, vector<64x512xf32> -> vector<64x512xf32>
    %c0_4 = arith.constant 0 : index
    %c0_5 = arith.constant 0 : index
    %6 = vector.load %arg5[%c0_4, %c0_5] : memref<1x512xf32, #tpu.memory_space<vmem>>, vector<1x512xf32>
    %7 = vector.broadcast %6 : vector<1x512xf32> to vector<64x512xf32>
    %8 = arith.addf %5, %7 : vector<64x512xf32>
    %c0_6 = arith.constant 0 : index
    %c0_7 = arith.constant 0 : index
    %9 = vector.load %arg12[%c0_6, %c0_7] : memref<64x512xf32, #tpu.memory_space<vmem>>, vector<64x512xf32>
    tpu.vector_store %arg12[%c0_6, %c0_7], %8 {strides = array<i32>} : memref<64x512xf32, #tpu.memory_space<vmem>>, vector<64x512xf32>,
    %c0_8 = arith.constant 0 : index
    %c0_9 = arith.constant 0 : index
    %10 = vector.load %arg4[%c0_8, %c0_9] : memref<128x512xf32, #tpu.memory_space<vmem>>, vector<128x512xf32>
    %c0_10 = arith.constant 0 : index
    %c0_11 = arith.constant 0 : index
    %11 = vector.load %arg9[%c0_10, %c0_11] : memref<8x128xf32, #tpu.memory_space<vmem>>, vector<8x128xf32>
    %c0_12 = arith.constant 0 : index
    %c0_13 = arith.constant 0 : index
    %12 = vector.load %arg10[%c0_12, %c0_13] : memref<8x128xf32, #tpu.memory_space<vmem>>, vector<8x128xf32>
    %c0_i32_14 = arith.constant 0 : i32
    %c8_i32 = arith.constant 8 : i32
    %13 = arith.muli %c0_i32_14, %c8_i32 : i32
    %14 = tpu.assume_multiple %13, 8 : i32
    %15 = arith.index_cast %14 : i32 to index
    %c0_15 = arith.constant 0 : index
    %16 = vector.load %arg12[%15, %c0_15] : memref<64x512xf32, #tpu.memory_space<vmem>>, vector<8x512xf32>
    %cst_16 = arith.constant dense<0.000000e+00> : vector<8x512xf32>
    %17 = tpu.matmul %11, %10, %cst_16 {dimension_numbers = #tpu.dot_dimension_numbers<[1], [0], [0], [1], [0, 0, 1, 1], [], []>} : vector<8x128xf32>, vector<128x512xf32>, vector<8x512xf32> -> vector<8x512xf32>
    %18 = arith.addf %16, %17 : vector<8x512xf32>
    %19 = vector.extract_strided_slice %18 {offsets = [0, 0], sizes = [8, 128], strides = [1, 1]} : vector<8x512xf32> to vector<8x128xf32>
    %cst_17 = arith.constant 5.000000e-01 : f32
    %20 = vector.broadcast %cst_17 : f32 to vector<8x128xf32>
    %21 = arith.mulf %20, %19 : vector<8x128xf32>
    %22 = math.tanh %21 : vector<8x128xf32>
    %cst_18 = arith.constant 5.000000e-01 : f32
    %23 = vector.broadcast %cst_18 : f32 to vector<8x128xf32>
    %24 = arith.mulf %23, %22 : vector<8x128xf32>
    %cst_19 = arith.constant 5.000000e-01 : f32
    %25 = vector.broadcast %cst_19 : f32 to vector<8x128xf32>
    %26 = arith.addf %24, %25 : vector<8x128xf32>
    %27 = vector.extract_strided_slice %18 {offsets = [0, 128], sizes = [8, 128], strides = [1, 1]} : vector<8x512xf32> to vector<8x128xf32>
    %cst_20 = arith.constant 5.000000e-01 : f32
    %28 = vector.broadcast %cst_20 : f32 to vector<8x128xf32>
    %29 = arith.mulf %28, %27 : vector<8x128xf32>
    %30 = math.tanh %29 : vector<8x128xf32>
    %cst_21 = arith.constant 5.000000e-01 : f32
    %31 = vector.broadcast %cst_21 : f32 to vector<8x128xf32>
    %32 = arith.mulf %31, %30 : vector<8x128xf32>
    %cst_22 = arith.constant 5.000000e-01 : f32
    %33 = vector.broadcast %cst_22 : f32 to vector<8x128xf32>
    %34 = arith.addf %32, %33 : vector<8x128xf32>
    %35 = vector.extract_strided_slice %18 {offsets = [0, 256], sizes = [8, 128], strides = [1, 1]} : vector<8x512xf32> to vector<8x128xf32>
    %36 = math.tanh %35 : vector<8x128xf32>
    %37 = arith.mulf %34, %12 : vector<8x128xf32>
    %38 = arith.mulf %26, %36 : vector<8x128xf32>
    %39 = arith.addf %37, %38 : vector<8x128xf32>
    %40 = vector.extract_strided_slice %18 {offsets = [0, 384], sizes = [8, 128], strides = [1, 1]} : vector<8x512xf32> to vector<8x128xf32>
    %cst_23 = arith.constant 5.000000e-01 : f32
    %41 = vector.broadcast %cst_23 : f32 to vector<8x128xf32>
    %42 = arith.mulf %41, %40 : vector<8x128xf32>
    %43 = math.tanh %42 : vector<8x128xf32>
    %cst_24 = arith.constant 5.000000e-01 : f32
    %44 = vector.broadcast %cst_24 : f32 to vector<8x128xf32>
    %45 = arith.mulf %44, %43 : vector<8x128xf32>
    %cst_25 = arith.constant 5.000000e-01 : f32
    %46 = vector.broadcast %cst_25 : f32 to vector<8x128xf32>
    %47 = arith.addf %45, %46 : vector<8x128xf32>
    %48 = math.tanh %39 : vector<8x128xf32>
    %49 = arith.mulf %47, %48 : vector<8x128xf32>
    %50 = arith.index_cast %14 : i32 to index
    %c0_26 = arith.constant 0 : index
    %51 = vector.load %arg11[%50, %c0_26] : memref<64x128xf32, #tpu.memory_space<vmem>>, vector<8x128xf32>
    tpu.vector_store %arg11[%50, %c0_26], %49 {strides = array<i32>} : memref<64x128xf32, #tpu.memory_space<vmem>>, vector<8x128xf32>,
    %c1_i32 = arith.constant 1 : i32
    %c8_i32_27 = arith.constant 8 : i32
    %52 = arith.muli %c1_i32, %c8_i32_27 : i32
    %53 = tpu.assume_multiple %52, 8 : i32
    %54 = arith.index_cast %53 : i32 to index
    %c0_28 = arith.constant 0 : index
    %55 = vector.load %arg12[%54, %c0_28] : memref<64x512xf32, #tpu.memory_space<vmem>>, vector<8x512xf32>
    %cst_29 = arith.constant dense<0.000000e+00> : vector<8x512xf32>
    %56 = tpu.matmul %49, %10, %cst_29 {dimension_numbers = #tpu.dot_dimension_numbers<[1], [0], [0], [1], [0, 0, 1, 1], [], []>} : vector<8x128xf32>, vector<128x512xf32>, vector<8x512xf32> -> vector<8x512xf32>
    %57 = arith.addf %55, %56 : vector<8x512xf32>
    %58 = vector.extract_strided_slice %57 {offsets = [0, 0], sizes = [8, 128], strides = [1, 1]} : vector<8x512xf32> to vector<8x128xf32>
    %cst_30 = arith.constant 5.000000e-01 : f32
    %59 = vector.broadcast %cst_30 : f32 to vector<8x128xf32>
    %60 = arith.mulf %59, %58 : vector<8x128xf32>
    %61 = math.tanh %60 : vector<8x128xf32>
    %cst_31 = arith.constant 5.000000e-01 : f32
    %62 = vector.broadcast %cst_31 : f32 to vector<8x128xf32>
    %63 = arith.mulf %62, %61 : vector<8x128xf32>
    %cst_32 = arith.constant 5.000000e-01 : f32
    %64 = vector.broadcast %cst_32 : f32 to vector<8x128xf32>
    %65 = arith.addf %63, %64 : vector<8x128xf32>
    %66 = vector.extract_strided_slice %57 {offsets = [0, 128], sizes = [8, 128], strides = [1, 1]} : vector<8x512xf32> to vector<8x128xf32>
    %cst_33 = arith.constant 5.000000e-01 : f32
    %67 = vector.broadcast %cst_33 : f32 to vector<8x128xf32>
    %68 = arith.mulf %67, %66 : vector<8x128xf32>
    %69 = math.tanh %68 : vector<8x128xf32>
    %cst_34 = arith.constant 5.000000e-01 : f32
    %70 = vector.broadcast %cst_34 : f32 to vector<8x128xf32>
    %71 = arith.mulf %70, %69 : vector<8x128xf32>
    %cst_35 = arith.constant 5.000000e-01 : f32
    %72 = vector.broadcast %cst_35 : f32 to vector<8x128xf32>
    %73 = arith.addf %71, %72 : vector<8x128xf32>
    %74 = vector.extract_strided_slice %57 {offsets = [0, 256], sizes = [8, 128], strides = [1, 1]} : vector<8x512xf32> to vector<8x128xf32>
    %75 = math.tanh %74 : vector<8x128xf32>
    %76 = arith.mulf %73, %39 : vector<8x128xf32>
    %77 = arith.mulf %65, %75 : vector<8x128xf32>
    %78 = arith.addf %76, %77 : vector<8x128xf32>
    %79 = vector.extract_strided_slice %57 {offsets = [0, 384], sizes = [8, 128], strides = [1, 1]} : vector<8x512xf32> to vector<8x128xf32>
    %cst_36 = arith.constant 5.000000e-01 : f32
    %80 = vector.broadcast %cst_36 : f32 to vector<8x128xf32>
    %81 = arith.mulf %80, %79 : vector<8x128xf32>
    %82 = math.tanh %81 : vector<8x128xf32>
    %cst_37 = arith.constant 5.000000e-01 : f32
    %83 = vector.broadcast %cst_37 : f32 to vector<8x128xf32>
    %84 = arith.mulf %83, %82 : vector<8x128xf32>
    %cst_38 = arith.constant 5.000000e-01 : f32
    %85 = vector.broadcast %cst_38 : f32 to vector<8x128xf32>
    %86 = arith.addf %84, %85 : vector<8x128xf32>
    %87 = math.tanh %78 : vector<8x128xf32>
    %88 = arith.mulf %86, %87 : vector<8x128xf32>
    %89 = arith.index_cast %53 : i32 to index
    %c0_39 = arith.constant 0 : index
    %90 = vector.load %arg11[%89, %c0_39] : memref<64x128xf32, #tpu.memory_space<vmem>>, vector<8x128xf32>
    tpu.vector_store %arg11[%89, %c0_39], %88 {strides = array<i32>} : memref<64x128xf32, #tpu.memory_space<vmem>>, vector<8x128xf32>,
    %c2_i32 = arith.constant 2 : i32
    %c8_i32_40 = arith.constant 8 : i32
    %91 = arith.muli %c2_i32, %c8_i32_40 : i32
    %92 = tpu.assume_multiple %91, 8 : i32
    %93 = arith.index_cast %92 : i32 to index
    %c0_41 = arith.constant 0 : index
    %94 = vector.load %arg12[%93, %c0_41] : memref<64x512xf32, #tpu.memory_space<vmem>>, vector<8x512xf32>
    %cst_42 = arith.constant dense<0.000000e+00> : vector<8x512xf32>
    %95 = tpu.matmul %88, %10, %cst_42 {dimension_numbers = #tpu.dot_dimension_numbers<[1], [0], [0], [1], [0, 0, 1, 1], [], []>} : vector<8x128xf32>, vector<128x512xf32>, vector<8x512xf32> -> vector<8x512xf32>
    %96 = arith.addf %94, %95 : vector<8x512xf32>
    %97 = vector.extract_strided_slice %96 {offsets = [0, 0], sizes = [8, 128], strides = [1, 1]} : vector<8x512xf32> to vector<8x128xf32>
    %cst_43 = arith.constant 5.000000e-01 : f32
    %98 = vector.broadcast %cst_43 : f32 to vector<8x128xf32>
    %99 = arith.mulf %98, %97 : vector<8x128xf32>
    %100 = math.tanh %99 : vector<8x128xf32>
    %cst_44 = arith.constant 5.000000e-01 : f32
    %101 = vector.broadcast %cst_44 : f32 to vector<8x128xf32>
    %102 = arith.mulf %101, %100 : vector<8x128xf32>
    %cst_45 = arith.constant 5.000000e-01 : f32
    %103 = vector.broadcast %cst_45 : f32 to vector<8x128xf32>
    %104 = arith.addf %102, %103 : vector<8x128xf32>
    %105 = vector.extract_strided_slice %96 {offsets = [0, 128], sizes = [8, 128], strides = [1, 1]} : vector<8x512xf32> to vector<8x128xf32>
    %cst_46 = arith.constant 5.000000e-01 : f32
    %106 = vector.broadcast %cst_46 : f32 to vector<8x128xf32>
    %107 = arith.mulf %106, %105 : vector<8x128xf32>
    %108 = math.tanh %107 : vector<8x128xf32>
    %cst_47 = arith.constant 5.000000e-01 : f32
    %109 = vector.broadcast %cst_47 : f32 to vector<8x128xf32>
    %110 = arith.mulf %109, %108 : vector<8x128xf32>
    %cst_48 = arith.constant 5.000000e-01 : f32
    %111 = vector.broadcast %cst_48 : f32 to vector<8x128xf32>
    %112 = arith.addf %110, %111 : vector<8x128xf32>
    %113 = vector.extract_strided_slice %96 {offsets = [0, 256], sizes = [8, 128], strides = [1, 1]} : vector<8x512xf32> to vector<8x128xf32>
    %114 = math.tanh %113 : vector<8x128xf32>
    %115 = arith.mulf %112, %78 : vector<8x128xf32>
    %116 = arith.mulf %104, %114 : vector<8x128xf32>
    %117 = arith.addf %115, %116 : vector<8x128xf32>
    %118 = vector.extract_strided_slice %96 {offsets = [0, 384], sizes = [8, 128], strides = [1, 1]} : vector<8x512xf32> to vector<8x128xf32>
    %cst_49 = arith.constant 5.000000e-01 : f32
    %119 = vector.broadcast %cst_49 : f32 to vector<8x128xf32>
    %120 = arith.mulf %119, %118 : vector<8x128xf32>
    %121 = math.tanh %120 : vector<8x128xf32>
    %cst_50 = arith.constant 5.000000e-01 : f32
    %122 = vector.broadcast %cst_50 : f32 to vector<8x128xf32>
    %123 = arith.mulf %122, %121 : vector<8x128xf32>
    %cst_51 = arith.constant 5.000000e-01 : f32
    %124 = vector.broadcast %cst_51 : f32 to vector<8x128xf32>
    %125 = arith.addf %123, %124 : vector<8x128xf32>
    %126 = math.tanh %117 : vector<8x128xf32>
    %127 = arith.mulf %125, %126 : vector<8x128xf32>
    %128 = arith.index_cast %92 : i32 to index
    %c0_52 = arith.constant 0 : index
    %129 = vector.load %arg11[%128, %c0_52] : memref<64x128xf32, #tpu.memory_space<vmem>>, vector<8x128xf32>
    tpu.vector_store %arg11[%128, %c0_52], %127 {strides = array<i32>} : memref<64x128xf32, #tpu.memory_space<vmem>>, vector<8x128xf32>,
    %c3_i32 = arith.constant 3 : i32
    %c8_i32_53 = arith.constant 8 : i32
    %130 = arith.muli %c3_i32, %c8_i32_53 : i32
    %131 = tpu.assume_multiple %130, 8 : i32
    %132 = arith.index_cast %131 : i32 to index
    %c0_54 = arith.constant 0 : index
    %133 = vector.load %arg12[%132, %c0_54] : memref<64x512xf32, #tpu.memory_space<vmem>>, vector<8x512xf32>
    %cst_55 = arith.constant dense<0.000000e+00> : vector<8x512xf32>
    %134 = tpu.matmul %127, %10, %cst_55 {dimension_numbers = #tpu.dot_dimension_numbers<[1], [0], [0], [1], [0, 0, 1, 1], [], []>} : vector<8x128xf32>, vector<128x512xf32>, vector<8x512xf32> -> vector<8x512xf32>
    %135 = arith.addf %133, %134 : vector<8x512xf32>
    %136 = vector.extract_strided_slice %135 {offsets = [0, 0], sizes = [8, 128], strides = [1, 1]} : vector<8x512xf32> to vector<8x128xf32>
    %cst_56 = arith.constant 5.000000e-01 : f32
    %137 = vector.broadcast %cst_56 : f32 to vector<8x128xf32>
    %138 = arith.mulf %137, %136 : vector<8x128xf32>
    %139 = math.tanh %138 : vector<8x128xf32>
    %cst_57 = arith.constant 5.000000e-01 : f32
    %140 = vector.broadcast %cst_57 : f32 to vector<8x128xf32>
    %141 = arith.mulf %140, %139 : vector<8x128xf32>
    %cst_58 = arith.constant 5.000000e-01 : f32
    %142 = vector.broadcast %cst_58 : f32 to vector<8x128xf32>
    %143 = arith.addf %141, %142 : vector<8x128xf32>
    %144 = vector.extract_strided_slice %135 {offsets = [0, 128], sizes = [8, 128], strides = [1, 1]} : vector<8x512xf32> to vector<8x128xf32>
    %cst_59 = arith.constant 5.000000e-01 : f32
    %145 = vector.broadcast %cst_59 : f32 to vector<8x128xf32>
    %146 = arith.mulf %145, %144 : vector<8x128xf32>
    %147 = math.tanh %146 : vector<8x128xf32>
    %cst_60 = arith.constant 5.000000e-01 : f32
    %148 = vector.broadcast %cst_60 : f32 to vector<8x128xf32>
    %149 = arith.mulf %148, %147 : vector<8x128xf32>
    %cst_61 = arith.constant 5.000000e-01 : f32
    %150 = vector.broadcast %cst_61 : f32 to vector<8x128xf32>
    %151 = arith.addf %149, %150 : vector<8x128xf32>
    %152 = vector.extract_strided_slice %135 {offsets = [0, 256], sizes = [8, 128], strides = [1, 1]} : vector<8x512xf32> to vector<8x128xf32>
    %153 = math.tanh %152 : vector<8x128xf32>
    %154 = arith.mulf %151, %117 : vector<8x128xf32>
    %155 = arith.mulf %143, %153 : vector<8x128xf32>
    %156 = arith.addf %154, %155 : vector<8x128xf32>
    %157 = vector.extract_strided_slice %135 {offsets = [0, 384], sizes = [8, 128], strides = [1, 1]} : vector<8x512xf32> to vector<8x128xf32>
    %cst_62 = arith.constant 5.000000e-01 : f32
    %158 = vector.broadcast %cst_62 : f32 to vector<8x128xf32>
    %159 = arith.mulf %158, %157 : vector<8x128xf32>
    %160 = math.tanh %159 : vector<8x128xf32>
    %cst_63 = arith.constant 5.000000e-01 : f32
    %161 = vector.broadcast %cst_63 : f32 to vector<8x128xf32>
    %162 = arith.mulf %161, %160 : vector<8x128xf32>
    %cst_64 = arith.constant 5.000000e-01 : f32
    %163 = vector.broadcast %cst_64 : f32 to vector<8x128xf32>
    %164 = arith.addf %162, %163 : vector<8x128xf32>
    %165 = math.tanh %156 : vector<8x128xf32>
    %166 = arith.mulf %164, %165 : vector<8x128xf32>
    %167 = arith.index_cast %131 : i32 to index
    %c0_65 = arith.constant 0 : index
    %168 = vector.load %arg11[%167, %c0_65] : memref<64x128xf32, #tpu.memory_space<vmem>>, vector<8x128xf32>
    tpu.vector_store %arg11[%167, %c0_65], %166 {strides = array<i32>} : memref<64x128xf32, #tpu.memory_space<vmem>>, vector<8x128xf32>,
    %c4_i32 = arith.constant 4 : i32
    %c8_i32_66 = arith.constant 8 : i32
    %169 = arith.muli %c4_i32, %c8_i32_66 : i32
    %170 = tpu.assume_multiple %169, 8 : i32
    %171 = arith.index_cast %170 : i32 to index
    %c0_67 = arith.constant 0 : index
    %172 = vector.load %arg12[%171, %c0_67] : memref<64x512xf32, #tpu.memory_space<vmem>>, vector<8x512xf32>
    %cst_68 = arith.constant dense<0.000000e+00> : vector<8x512xf32>
    %173 = tpu.matmul %166, %10, %cst_68 {dimension_numbers = #tpu.dot_dimension_numbers<[1], [0], [0], [1], [0, 0, 1, 1], [], []>} : vector<8x128xf32>, vector<128x512xf32>, vector<8x512xf32> -> vector<8x512xf32>
    %174 = arith.addf %172, %173 : vector<8x512xf32>
    %175 = vector.extract_strided_slice %174 {offsets = [0, 0], sizes = [8, 128], strides = [1, 1]} : vector<8x512xf32> to vector<8x128xf32>
    %cst_69 = arith.constant 5.000000e-01 : f32
    %176 = vector.broadcast %cst_69 : f32 to vector<8x128xf32>
    %177 = arith.mulf %176, %175 : vector<8x128xf32>
    %178 = math.tanh %177 : vector<8x128xf32>
    %cst_70 = arith.constant 5.000000e-01 : f32
    %179 = vector.broadcast %cst_70 : f32 to vector<8x128xf32>
    %180 = arith.mulf %179, %178 : vector<8x128xf32>
    %cst_71 = arith.constant 5.000000e-01 : f32
    %181 = vector.broadcast %cst_71 : f32 to vector<8x128xf32>
    %182 = arith.addf %180, %181 : vector<8x128xf32>
    %183 = vector.extract_strided_slice %174 {offsets = [0, 128], sizes = [8, 128], strides = [1, 1]} : vector<8x512xf32> to vector<8x128xf32>
    %cst_72 = arith.constant 5.000000e-01 : f32
    %184 = vector.broadcast %cst_72 : f32 to vector<8x128xf32>
    %185 = arith.mulf %184, %183 : vector<8x128xf32>
    %186 = math.tanh %185 : vector<8x128xf32>
    %cst_73 = arith.constant 5.000000e-01 : f32
    %187 = vector.broadcast %cst_73 : f32 to vector<8x128xf32>
    %188 = arith.mulf %187, %186 : vector<8x128xf32>
    %cst_74 = arith.constant 5.000000e-01 : f32
    %189 = vector.broadcast %cst_74 : f32 to vector<8x128xf32>
    %190 = arith.addf %188, %189 : vector<8x128xf32>
    %191 = vector.extract_strided_slice %174 {offsets = [0, 256], sizes = [8, 128], strides = [1, 1]} : vector<8x512xf32> to vector<8x128xf32>
    %192 = math.tanh %191 : vector<8x128xf32>
    %193 = arith.mulf %190, %156 : vector<8x128xf32>
    %194 = arith.mulf %182, %192 : vector<8x128xf32>
    %195 = arith.addf %193, %194 : vector<8x128xf32>
    %196 = vector.extract_strided_slice %174 {offsets = [0, 384], sizes = [8, 128], strides = [1, 1]} : vector<8x512xf32> to vector<8x128xf32>
    %cst_75 = arith.constant 5.000000e-01 : f32
    %197 = vector.broadcast %cst_75 : f32 to vector<8x128xf32>
    %198 = arith.mulf %197, %196 : vector<8x128xf32>
    %199 = math.tanh %198 : vector<8x128xf32>
    %cst_76 = arith.constant 5.000000e-01 : f32
    %200 = vector.broadcast %cst_76 : f32 to vector<8x128xf32>
    %201 = arith.mulf %200, %199 : vector<8x128xf32>
    %cst_77 = arith.constant 5.000000e-01 : f32
    %202 = vector.broadcast %cst_77 : f32 to vector<8x128xf32>
    %203 = arith.addf %201, %202 : vector<8x128xf32>
    %204 = math.tanh %195 : vector<8x128xf32>
    %205 = arith.mulf %203, %204 : vector<8x128xf32>
    %206 = arith.index_cast %170 : i32 to index
    %c0_78 = arith.constant 0 : index
    %207 = vector.load %arg11[%206, %c0_78] : memref<64x128xf32, #tpu.memory_space<vmem>>, vector<8x128xf32>
    tpu.vector_store %arg11[%206, %c0_78], %205 {strides = array<i32>} : memref<64x128xf32, #tpu.memory_space<vmem>>, vector<8x128xf32>,
    %c5_i32 = arith.constant 5 : i32
    %c8_i32_79 = arith.constant 8 : i32
    %208 = arith.muli %c5_i32, %c8_i32_79 : i32
    %209 = tpu.assume_multiple %208, 8 : i32
    %210 = arith.index_cast %209 : i32 to index
    %c0_80 = arith.constant 0 : index
    %211 = vector.load %arg12[%210, %c0_80] : memref<64x512xf32, #tpu.memory_space<vmem>>, vector<8x512xf32>
    %cst_81 = arith.constant dense<0.000000e+00> : vector<8x512xf32>
    %212 = tpu.matmul %205, %10, %cst_81 {dimension_numbers = #tpu.dot_dimension_numbers<[1], [0], [0], [1], [0, 0, 1, 1], [], []>} : vector<8x128xf32>, vector<128x512xf32>, vector<8x512xf32> -> vector<8x512xf32>
    %213 = arith.addf %211, %212 : vector<8x512xf32>
    %214 = vector.extract_strided_slice %213 {offsets = [0, 0], sizes = [8, 128], strides = [1, 1]} : vector<8x512xf32> to vector<8x128xf32>
    %cst_82 = arith.constant 5.000000e-01 : f32
    %215 = vector.broadcast %cst_82 : f32 to vector<8x128xf32>
    %216 = arith.mulf %215, %214 : vector<8x128xf32>
    %217 = math.tanh %216 : vector<8x128xf32>
    %cst_83 = arith.constant 5.000000e-01 : f32
    %218 = vector.broadcast %cst_83 : f32 to vector<8x128xf32>
    %219 = arith.mulf %218, %217 : vector<8x128xf32>
    %cst_84 = arith.constant 5.000000e-01 : f32
    %220 = vector.broadcast %cst_84 : f32 to vector<8x128xf32>
    %221 = arith.addf %219, %220 : vector<8x128xf32>
    %222 = vector.extract_strided_slice %213 {offsets = [0, 128], sizes = [8, 128], strides = [1, 1]} : vector<8x512xf32> to vector<8x128xf32>
    %cst_85 = arith.constant 5.000000e-01 : f32
    %223 = vector.broadcast %cst_85 : f32 to vector<8x128xf32>
    %224 = arith.mulf %223, %222 : vector<8x128xf32>
    %225 = math.tanh %224 : vector<8x128xf32>
    %cst_86 = arith.constant 5.000000e-01 : f32
    %226 = vector.broadcast %cst_86 : f32 to vector<8x128xf32>
    %227 = arith.mulf %226, %225 : vector<8x128xf32>
    %cst_87 = arith.constant 5.000000e-01 : f32
    %228 = vector.broadcast %cst_87 : f32 to vector<8x128xf32>
    %229 = arith.addf %227, %228 : vector<8x128xf32>
    %230 = vector.extract_strided_slice %213 {offsets = [0, 256], sizes = [8, 128], strides = [1, 1]} : vector<8x512xf32> to vector<8x128xf32>
    %231 = math.tanh %230 : vector<8x128xf32>
    %232 = arith.mulf %229, %195 : vector<8x128xf32>
    %233 = arith.mulf %221, %231 : vector<8x128xf32>
    %234 = arith.addf %232, %233 : vector<8x128xf32>
    %235 = vector.extract_strided_slice %213 {offsets = [0, 384], sizes = [8, 128], strides = [1, 1]} : vector<8x512xf32> to vector<8x128xf32>
    %cst_88 = arith.constant 5.000000e-01 : f32
    %236 = vector.broadcast %cst_88 : f32 to vector<8x128xf32>
    %237 = arith.mulf %236, %235 : vector<8x128xf32>
    %238 = math.tanh %237 : vector<8x128xf32>
    %cst_89 = arith.constant 5.000000e-01 : f32
    %239 = vector.broadcast %cst_89 : f32 to vector<8x128xf32>
    %240 = arith.mulf %239, %238 : vector<8x128xf32>
    %cst_90 = arith.constant 5.000000e-01 : f32
    %241 = vector.broadcast %cst_90 : f32 to vector<8x128xf32>
    %242 = arith.addf %240, %241 : vector<8x128xf32>
    %243 = math.tanh %234 : vector<8x128xf32>
    %244 = arith.mulf %242, %243 : vector<8x128xf32>
    %245 = arith.index_cast %209 : i32 to index
    %c0_91 = arith.constant 0 : index
    %246 = vector.load %arg11[%245, %c0_91] : memref<64x128xf32, #tpu.memory_space<vmem>>, vector<8x128xf32>
    tpu.vector_store %arg11[%245, %c0_91], %244 {strides = array<i32>} : memref<64x128xf32, #tpu.memory_space<vmem>>, vector<8x128xf32>,
    %c6_i32 = arith.constant 6 : i32
    %c8_i32_92 = arith.constant 8 : i32
    %247 = arith.muli %c6_i32, %c8_i32_92 : i32
    %248 = tpu.assume_multiple %247, 8 : i32
    %249 = arith.index_cast %248 : i32 to index
    %c0_93 = arith.constant 0 : index
    %250 = vector.load %arg12[%249, %c0_93] : memref<64x512xf32, #tpu.memory_space<vmem>>, vector<8x512xf32>
    %cst_94 = arith.constant dense<0.000000e+00> : vector<8x512xf32>
    %251 = tpu.matmul %244, %10, %cst_94 {dimension_numbers = #tpu.dot_dimension_numbers<[1], [0], [0], [1], [0, 0, 1, 1], [], []>} : vector<8x128xf32>, vector<128x512xf32>, vector<8x512xf32> -> vector<8x512xf32>
    %252 = arith.addf %250, %251 : vector<8x512xf32>
    %253 = vector.extract_strided_slice %252 {offsets = [0, 0], sizes = [8, 128], strides = [1, 1]} : vector<8x512xf32> to vector<8x128xf32>
    %cst_95 = arith.constant 5.000000e-01 : f32
    %254 = vector.broadcast %cst_95 : f32 to vector<8x128xf32>
    %255 = arith.mulf %254, %253 : vector<8x128xf32>
    %256 = math.tanh %255 : vector<8x128xf32>
    %cst_96 = arith.constant 5.000000e-01 : f32
    %257 = vector.broadcast %cst_96 : f32 to vector<8x128xf32>
    %258 = arith.mulf %257, %256 : vector<8x128xf32>
    %cst_97 = arith.constant 5.000000e-01 : f32
    %259 = vector.broadcast %cst_97 : f32 to vector<8x128xf32>
    %260 = arith.addf %258, %259 : vector<8x128xf32>
    %261 = vector.extract_strided_slice %252 {offsets = [0, 128], sizes = [8, 128], strides = [1, 1]} : vector<8x512xf32> to vector<8x128xf32>
    %cst_98 = arith.constant 5.000000e-01 : f32
    %262 = vector.broadcast %cst_98 : f32 to vector<8x128xf32>
    %263 = arith.mulf %262, %261 : vector<8x128xf32>
    %264 = math.tanh %263 : vector<8x128xf32>
    %cst_99 = arith.constant 5.000000e-01 : f32
    %265 = vector.broadcast %cst_99 : f32 to vector<8x128xf32>
    %266 = arith.mulf %265, %264 : vector<8x128xf32>
    %cst_100 = arith.constant 5.000000e-01 : f32
    %267 = vector.broadcast %cst_100 : f32 to vector<8x128xf32>
    %268 = arith.addf %266, %267 : vector<8x128xf32>
    %269 = vector.extract_strided_slice %252 {offsets = [0, 256], sizes = [8, 128], strides = [1, 1]} : vector<8x512xf32> to vector<8x128xf32>
    %270 = math.tanh %269 : vector<8x128xf32>
    %271 = arith.mulf %268, %234 : vector<8x128xf32>
    %272 = arith.mulf %260, %270 : vector<8x128xf32>
    %273 = arith.addf %271, %272 : vector<8x128xf32>
    %274 = vector.extract_strided_slice %252 {offsets = [0, 384], sizes = [8, 128], strides = [1, 1]} : vector<8x512xf32> to vector<8x128xf32>
    %cst_101 = arith.constant 5.000000e-01 : f32
    %275 = vector.broadcast %cst_101 : f32 to vector<8x128xf32>
    %276 = arith.mulf %275, %274 : vector<8x128xf32>
    %277 = math.tanh %276 : vector<8x128xf32>
    %cst_102 = arith.constant 5.000000e-01 : f32
    %278 = vector.broadcast %cst_102 : f32 to vector<8x128xf32>
    %279 = arith.mulf %278, %277 : vector<8x128xf32>
    %cst_103 = arith.constant 5.000000e-01 : f32
    %280 = vector.broadcast %cst_103 : f32 to vector<8x128xf32>
    %281 = arith.addf %279, %280 : vector<8x128xf32>
    %282 = math.tanh %273 : vector<8x128xf32>
    %283 = arith.mulf %281, %282 : vector<8x128xf32>
    %284 = arith.index_cast %248 : i32 to index
    %c0_104 = arith.constant 0 : index
    %285 = vector.load %arg11[%284, %c0_104] : memref<64x128xf32, #tpu.memory_space<vmem>>, vector<8x128xf32>
    tpu.vector_store %arg11[%284, %c0_104], %283 {strides = array<i32>} : memref<64x128xf32, #tpu.memory_space<vmem>>, vector<8x128xf32>,
    %c7_i32 = arith.constant 7 : i32
    %c8_i32_105 = arith.constant 8 : i32
    %286 = arith.muli %c7_i32, %c8_i32_105 : i32
    %287 = tpu.assume_multiple %286, 8 : i32
    %288 = arith.index_cast %287 : i32 to index
    %c0_106 = arith.constant 0 : index
    %289 = vector.load %arg12[%288, %c0_106] : memref<64x512xf32, #tpu.memory_space<vmem>>, vector<8x512xf32>
    %cst_107 = arith.constant dense<0.000000e+00> : vector<8x512xf32>
    %290 = tpu.matmul %283, %10, %cst_107 {dimension_numbers = #tpu.dot_dimension_numbers<[1], [0], [0], [1], [0, 0, 1, 1], [], []>} : vector<8x128xf32>, vector<128x512xf32>, vector<8x512xf32> -> vector<8x512xf32>
    %291 = arith.addf %289, %290 : vector<8x512xf32>
    %292 = vector.extract_strided_slice %291 {offsets = [0, 0], sizes = [8, 128], strides = [1, 1]} : vector<8x512xf32> to vector<8x128xf32>
    %cst_108 = arith.constant 5.000000e-01 : f32
    %293 = vector.broadcast %cst_108 : f32 to vector<8x128xf32>
    %294 = arith.mulf %293, %292 : vector<8x128xf32>
    %295 = math.tanh %294 : vector<8x128xf32>
    %cst_109 = arith.constant 5.000000e-01 : f32
    %296 = vector.broadcast %cst_109 : f32 to vector<8x128xf32>
    %297 = arith.mulf %296, %295 : vector<8x128xf32>
    %cst_110 = arith.constant 5.000000e-01 : f32
    %298 = vector.broadcast %cst_110 : f32 to vector<8x128xf32>
    %299 = arith.addf %297, %298 : vector<8x128xf32>
    %300 = vector.extract_strided_slice %291 {offsets = [0, 128], sizes = [8, 128], strides = [1, 1]} : vector<8x512xf32> to vector<8x128xf32>
    %cst_111 = arith.constant 5.000000e-01 : f32
    %301 = vector.broadcast %cst_111 : f32 to vector<8x128xf32>
    %302 = arith.mulf %301, %300 : vector<8x128xf32>
    %303 = math.tanh %302 : vector<8x128xf32>
    %cst_112 = arith.constant 5.000000e-01 : f32
    %304 = vector.broadcast %cst_112 : f32 to vector<8x128xf32>
    %305 = arith.mulf %304, %303 : vector<8x128xf32>
    %cst_113 = arith.constant 5.000000e-01 : f32
    %306 = vector.broadcast %cst_113 : f32 to vector<8x128xf32>
    %307 = arith.addf %305, %306 : vector<8x128xf32>
    %308 = vector.extract_strided_slice %291 {offsets = [0, 256], sizes = [8, 128], strides = [1, 1]} : vector<8x512xf32> to vector<8x128xf32>
    %309 = math.tanh %308 : vector<8x128xf32>
    %310 = arith.mulf %307, %273 : vector<8x128xf32>
    %311 = arith.mulf %299, %309 : vector<8x128xf32>
    %312 = arith.addf %310, %311 : vector<8x128xf32>
    %313 = vector.extract_strided_slice %291 {offsets = [0, 384], sizes = [8, 128], strides = [1, 1]} : vector<8x512xf32> to vector<8x128xf32>
    %cst_114 = arith.constant 5.000000e-01 : f32
    %314 = vector.broadcast %cst_114 : f32 to vector<8x128xf32>
    %315 = arith.mulf %314, %313 : vector<8x128xf32>
    %316 = math.tanh %315 : vector<8x128xf32>
    %cst_115 = arith.constant 5.000000e-01 : f32
    %317 = vector.broadcast %cst_115 : f32 to vector<8x128xf32>
    %318 = arith.mulf %317, %316 : vector<8x128xf32>
    %cst_116 = arith.constant 5.000000e-01 : f32
    %319 = vector.broadcast %cst_116 : f32 to vector<8x128xf32>
    %320 = arith.addf %318, %319 : vector<8x128xf32>
    %321 = math.tanh %312 : vector<8x128xf32>
    %322 = arith.mulf %320, %321 : vector<8x128xf32>
    %323 = arith.index_cast %287 : i32 to index
    %c0_117 = arith.constant 0 : index
    %324 = vector.load %arg11[%323, %c0_117] : memref<64x128xf32, #tpu.memory_space<vmem>>, vector<8x128xf32>
    tpu.vector_store %arg11[%323, %c0_117], %322 {strides = array<i32>} : memref<64x128xf32, #tpu.memory_space<vmem>>, vector<8x128xf32>,
    %c8_i32_118 = arith.constant 8 : i32
    %c0_119 = arith.constant 0 : index
    %c0_120 = arith.constant 0 : index
    %325 = vector.load %arg9[%c0_119, %c0_120] : memref<8x128xf32, #tpu.memory_space<vmem>>, vector<8x128xf32>
    tpu.vector_store %arg9[%c0_119, %c0_120], %322 {strides = array<i32>} : memref<8x128xf32, #tpu.memory_space<vmem>>, vector<8x128xf32>,
    %c0_121 = arith.constant 0 : index
    %c0_122 = arith.constant 0 : index
    %326 = vector.load %arg10[%c0_121, %c0_122] : memref<8x128xf32, #tpu.memory_space<vmem>>, vector<8x128xf32>
    tpu.vector_store %arg10[%c0_121, %c0_122], %312 {strides = array<i32>} : memref<8x128xf32, #tpu.memory_space<vmem>>, vector<8x128xf32>,
    %c0_123 = arith.constant 0 : index
    %c0_124 = arith.constant 0 : index
    %327 = vector.load %arg11[%c0_123, %c0_124] : memref<64x128xf32, #tpu.memory_space<vmem>>, vector<64x128xf32>
    %c0_125 = arith.constant 0 : index
    %c0_126 = arith.constant 0 : index
    %328 = vector.load %arg6[%c0_125, %c0_126] : memref<128x128xf32, #tpu.memory_space<vmem>>, vector<128x128xf32>
    %cst_127 = arith.constant dense<0.000000e+00> : vector<64x128xf32>
    %329 = tpu.matmul %327, %328, %cst_127 {dimension_numbers = #tpu.dot_dimension_numbers<[1], [0], [0], [1], [0, 0, 1, 1], [], []>} : vector<64x128xf32>, vector<128x128xf32>, vector<64x128xf32> -> vector<64x128xf32>
    %c0_128 = arith.constant 0 : index
    %c0_129 = arith.constant 0 : index
    %330 = vector.load %arg7[%c0_128, %c0_129] : memref<1x128xf32, #tpu.memory_space<vmem>>, vector<1x128xf32>
    %331 = vector.broadcast %330 : vector<1x128xf32> to vector<64x128xf32>
    %332 = arith.addf %329, %331 : vector<64x128xf32>
    %c0_130 = arith.constant 0 : index
    %c0_131 = arith.constant 0 : index
    %333 = vector.load %arg8[%c0_130, %c0_131] : memref<64x128xf32, #tpu.memory_space<vmem>>, vector<64x128xf32>
    tpu.vector_store %arg8[%c0_130, %c0_131], %332 {strides = array<i32>} : memref<64x128xf32, #tpu.memory_space<vmem>>, vector<64x128xf32>,
    return
  }
  func.func @transform_0(%arg0: i32, %arg1: i32) -> (i32, i32) {
    %c1_i32 = arith.constant 1 : i32
    %0 = arith.muli %arg0, %c1_i32 : i32
    %1 = arith.addi %0, %arg1 : i32
    %c0_i32 = arith.constant 0 : i32
    %c0_i32_0 = arith.constant 0 : i32
    return %1, %c0_i32 : i32, i32
  }
  func.func @transform_1(%arg0: i32, %arg1: i32) -> (i32, i32) {
    %c0_i32 = arith.constant 0 : i32
    %c0_i32_0 = arith.constant 0 : i32
    %c0_i32_1 = arith.constant 0 : i32
    return %c0_i32, %c0_i32_0 : i32, i32
  }
  func.func @transform_2(%arg0: i32, %arg1: i32) -> (i32, i32) {
    %c0_i32 = arith.constant 0 : i32
    %c0_i32_0 = arith.constant 0 : i32
    %c0_i32_1 = arith.constant 0 : i32
    return %c0_i32, %c0_i32_0 : i32, i32
  }
  func.func @transform_3(%arg0: i32, %arg1: i32) -> (i32, i32) {
    %c0_i32 = arith.constant 0 : i32
    %c0_i32_0 = arith.constant 0 : i32
    %c0_i32_1 = arith.constant 0 : i32
    return %c0_i32, %c0_i32_0 : i32, i32
  }
  func.func @transform_4(%arg0: i32, %arg1: i32) -> (i32, i32) {
    %c0_i32 = arith.constant 0 : i32
    %c0_i32_0 = arith.constant 0 : i32
    %c0_i32_1 = arith.constant 0 : i32
    return %c0_i32, %c0_i32_0 : i32, i32
  }
  func.func @transform_5(%arg0: i32, %arg1: i32) -> (i32, i32) {
    %c0_i32 = arith.constant 0 : i32
    %c0_i32_0 = arith.constant 0 : i32
    %c0_i32_1 = arith.constant 0 : i32
    return %c0_i32, %c0_i32_0 : i32, i32
  }
  func.func @transform_6(%arg0: i32, %arg1: i32) -> (i32, i32) {
    %c1_i32 = arith.constant 1 : i32
    %0 = arith.muli %arg0, %c1_i32 : i32
    %1 = arith.addi %0, %arg1 : i32
    %c0_i32 = arith.constant 0 : i32
    %c0_i32_0 = arith.constant 0 : i32
    return %1, %c0_i32 : i32, i32
  }
}

</mosaic_0001>

<llo_original>
// kernel: tpu_custom_call.1
$region0: #{tpu_custom_call.1}
  #allocation0 [shape = 'u32[]', space=smem, size = 0x4, offset = 0x4, fixed_abs, tag = 'smem constant byte address 0x4 - core index']
  #allocation1 [shape = 'u32[144,128]{1,0:T(1,128)}', space=vmem, size = 0x12000, scoped, tag = 'internal scratch']
  #allocation2 [shape = 'f32[8,128]{1,0:T(8,128)}', space=vmem, size = 0x1000, scoped, tag = 'scratch operand']
  #allocation3 [shape = 'f32[8,128]{1,0:T(8,128)}', space=vmem, size = 0x1000, scoped, tag = 'scratch operand']
  #allocation4 [shape = 'f32[64,128]{1,0:T(8,128)}', space=vmem, size = 0x8000, scoped, tag = 'scratch operand']
  #allocation5 [shape = 'f32[64,512]{1,0:T(8,128)}', space=vmem, size = 0x20000, scoped, tag = 'scratch operand']
  %s0 = inlined_call_operand.vmem [shape: f32[64,4], index: 0, kind: input, shape index: {}]
  %s1 = inlined_call_operand.vmem [shape: f32[4,512], index: 1, kind: input, shape index: {}]
  %s2 = inlined_call_operand.hbm [shape: f32[128,512], index: 2, kind: input, shape index: {}]
  %s3 = inlined_call_operand.vmem [shape: f32[1,512], index: 3, kind: input, shape index: {}]
  %s4 = inlined_call_operand.hbm [shape: f32[128,128], index: 4, kind: input, shape index: {}]
  %s5 = inlined_call_operand.vmem [shape: f32[1,128], index: 5, kind: input, shape index: {}]
  %s6 = inlined_call_operand.hbm [shape: f32[64,128], index: 6, kind: output, shape index: {}]
  %s7 = sld [smem:[#allocation0]]
  $region46: #{tpu_custom_call.1} parent=0
    _
  %s9 = ssub.s32 1, %s7
  %s10 = scalar_select 0, %s9, %s7
  $region1: #{tpu_custom_call.1} parent=0
    #allocation6 [shape = 'u8[262144]{0}', space=vmem, size = 0x40000, scoped, tag = 'input window, operand 2, single buffered']
    #allocation7 [shape = 's32[1]{0}', space=sflag, size = 0x4, scoped, tag = 'scoped memory for tpu_custom_call.1']
    #allocation8 [shape = 's32[1]{0}', space=sflag, size = 0x4, scoped, tag = 'scoped memory for tpu_custom_call.1']
    #allocation9 [shape = 'u8[65536]{0}', space=vmem, size = 0x10000, scoped, tag = 'input window, operand 4, single buffered']
    #allocation10 [shape = 's32[1]{0}', space=sflag, size = 0x4, scoped, tag = 'scoped memory for tpu_custom_call.1']
    #allocation11 [shape = 'u8[32768]{0}', space=vmem, size = 0x8000, scoped, tag = 'output window, operand 0, single buffered']
    %11 = vsyncpa [#allocation7], 0
    %12 = vsyncpa [#allocation10], 0
    %13 = vsyncpa [#allocation8], 0
    // Predicated region
    $region2: #{tpu_custom_call.1} parent=1 // pred_check
      _
    $region3: #{tpu_custom_call.1} parent=1 // pred_check_branch
      %15 = sbr.rel (0) target = $region5
    $region4: #{tpu_custom_call.1} parent=1 // pred_region
      %s16 = sadd.s32 0, 0
      %s17 = smul.u32 8, %s16
      %p18 = scmp.lt.s32.totalorder %s17, 7
      %s19 = scalar_select %p18, %s17, 7
      %s20 = smul.addr %s19, 8
      %s21 = scalar_lea.vmem %s0, %s20
      %s22 = sadd.s32 0, 0
      %s23 = smul.u32 8, %s22
    $region5: #{tpu_custom_call.1} parent=1 // pred_fallthru
      _
    // Predicated region
    $region6: #{tpu_custom_call.1} parent=1 // pred_check
      _
    $region7: #{tpu_custom_call.1} parent=1 // pred_check_branch
      %25 = sbr.rel (0) target = $region9
    $region8: #{tpu_custom_call.1} parent=1 // pred_region
      _
    $region9: #{tpu_custom_call.1} parent=1 // pred_fallthru
      _
    // Predicated region
    $region10: #{tpu_custom_call.1} parent=1 // pred_check
      _
    $region11: #{tpu_custom_call.1} parent=1 // pred_check_branch
      %27 = sbr.rel (0) target = $region13
    $region12: #{tpu_custom_call.1} parent=1 // pred_region
      %s29 = ssub.s32 8192, 8192
      %30 = vsyncadd [#allocation7], %s29
      %s31 = sshll.u32 [#allocation6], 4
      %s32 = int_to_ptr.vmem [resolvable:$true] %s31
      %37 = dma.hbm_to_vmem [thread:$0]  %s2, 8192, %s32, [#allocation7], 512, 512, 32
    $region13: #{tpu_custom_call.1} parent=1 // pred_fallthru
      _
    // Predicated region
    $region14: #{tpu_custom_call.1} parent=1 // pred_check
      _
    $region15: #{tpu_custom_call.1} parent=1 // pred_check_branch
      %39 = sbr.rel (0) target = $region17
    $region16: #{tpu_custom_call.1} parent=1 // pred_region
      _
    $region17: #{tpu_custom_call.1} parent=1 // pred_fallthru
      _
    // Predicated region
    $region18: #{tpu_custom_call.1} parent=1 // pred_check
      _
    $region19: #{tpu_custom_call.1} parent=1 // pred_check_branch
      %41 = sbr.rel (0) target = $region21
    $region20: #{tpu_custom_call.1} parent=1 // pred_region
      %s43 = ssub.s32 2048, 2048
      %44 = vsyncadd [#allocation10], %s43
      %s45 = sshll.u32 [#allocation9], 4
      %s46 = int_to_ptr.vmem [resolvable:$true] %s45
      %51 = dma.hbm_to_vmem [thread:$0]  %s4, 2048, %s46, [#allocation10], 128, 128, 8
    $region21: #{tpu_custom_call.1} parent=1 // pred_fallthru
      _
    // Predicated region
    $region22: #{tpu_custom_call.1} parent=1 // pred_check
      _
    $region23: #{tpu_custom_call.1} parent=1 // pred_check_branch
      %53 = sbr.rel (0) target = $region25
    $region24: #{tpu_custom_call.1} parent=1 // pred_region
      _
    $region25: #{tpu_custom_call.1} parent=1 // pred_fallthru
      _
    // Predicated region
    $region26: #{tpu_custom_call.1} parent=1 // pred_check
      _
    $region27: #{tpu_custom_call.1} parent=1 // pred_check_branch
      %55 = sbr.rel (0) target = $region29
    $region28: #{tpu_custom_call.1} parent=1 // pred_region
      %56 = dma.done [#allocation7], 8192
    $region29: #{tpu_custom_call.1} parent=1 // pred_fallthru
      _
    // Predicated region
    $region30: #{tpu_custom_call.1} parent=1 // pred_check
      _
    $region31: #{tpu_custom_call.1} parent=1 // pred_check_branch
      %58 = sbr.rel (0) target = $region33
    $region32: #{tpu_custom_call.1} parent=1 // pred_region
      %59 = dma.done [#allocation10], 2048
    $region33: #{tpu_custom_call.1} parent=1 // pred_fallthru
      _
    %s60 = sadd.s32 0, 0
    %s61 = smul.u32 8, %s60
    %p62 = scmp.lt.s32.totalorder %s61, 7
    %s63 = scalar_select %p62, %s61, 7
    %s64 = smul.addr %s63, 8
    %s65 = scalar_lea.vmem %s0, %s64
    %s66 = sadd.s32 0, 0
    %s67 = smul.u32 8, %s66
    %p68 = scmp.lt.s32.totalorder %s67, 7
    %s69 = scalar_select %p68, %s67, 7
    %s70 = smul.addr %s69, 8
    %s71 = scalar_lea.vmem %s0, %s70
    %s72 = sadd.s32 0, 0
    %s73 = smul.u32 8, %s72
    %s74 = sadd.s32 0, 0
    %s75 = smul.u32 8, %s74
    %p76 = scmp.eq.s32.totalorder 0, 0
    // Predicated region
    $region34: #{tpu_custom_call.1} parent=1 // pred_check
      %p77 = pneg %p76
    $region35: #{tpu_custom_call.1} parent=1 // pred_check_branch
      %79 = sbr.rel (%p77) target = $region37
    $region36: #{tpu_custom_call.1} parent=1 // pred_region
      %80 = vst [vmem:[#allocation2] sm:$0xff] 0.0
      %81 = vst [vmem:[#allocation3] sm:$0xff] 0.0
    $region37: #{tpu_custom_call.1} parent=1 // pred_fallthru
      _
    %v82 = vld [vmem:[%s71] sm:$0xff]
    %v83 = vld [vmem:[%s71 + $0x8] sm:$0xff]
    %v84 = vld [vmem:[%s71 + $0x10] sm:$0xff]
    %v85 = vld [vmem:[%s71 + $0x18] sm:$0xff]
    %v86 = vld [vmem:[%s71 + $0x20] sm:$0xff]
    %v87 = vld [vmem:[%s71 + $0x28] sm:$0xff]
    %v88 = vld [vmem:[%s71 + $0x30] sm:$0xff]
    %v89 = vld [vmem:[%s71 + $0x38] sm:$0xff]
    %v90 = vld [vmem:[%s1] sm:$0xff]
    %v91 = vld [vmem:[%s1 + $0x8] sm:$0xff]
    %v92 = vld [vmem:[%s3] sm:$0xf]
    %v94 = vlaneseq
    %v95 = vshrl.u32 %v94, 7
    %v96 = vsub.s32 0, %v95
    %v97 = vrot.slane %v92, %v96
    %v98 = vlaneseq
    %v99 = vshrl.u32 %v98, 7
    %v100 = vsub.s32 1, %v99
    %v101 = vrot.slane %v92, %v100
    %v102 = vlaneseq
    %v103 = vshrl.u32 %v102, 7
    %v104 = vsub.s32 2, %v103
    %v105 = vrot.slane %v92, %v104
    %v106 = vlaneseq
    %v107 = vshrl.u32 %v106, 7
    %v108 = vsub.s32 3, %v107
    %v109 = vrot.slane %v92, %v108
    %v116 = vcombine.high %v90, %v90
    %v117 = vcombine.high %v91, %v91
    %vm118 = vcmask 31744
    %v120 = vsel %vm118, %v82, 0
    %v123 = vsel %vm118, %v83, 0
    %v126 = vsel %vm118, %v84, 0
    %v129 = vsel %vm118, %v85, 0
    %v132 = vsel %vm118, %v86, 0
    %v135 = vsel %vm118, %v87, 0
    %v138 = vsel %vm118, %v88, 0
    %v141 = vsel %vm118, %v89, 0
    %vm143 = vcmask 1043456
    %v144 = vsel %vm143, %v90, 0
    %v146 = vsel %vm143, %v116, 0
    %v148 = vsel %vm143, %v91, 0
    %v150 = vsel %vm143, %v117, 0
    %152 = vmatprep.subr.mxu0 %v146
    %153 = vmatpush1.msra.mxu0 %v144
    %154 = vmatprep.subr.mxu0 0.0
    %155 = vmatpush1.msra.mxu0 0.0
    %156 = vmatprep.subr.mxu0 0.0
    %157 = vmatpush1.msra.mxu0 0.0
    %158 = vmatprep.subr.mxu0 0.0
    %159 = vmatpush1.msra.mxu0 0.0
    %160 = vmatprep.subr.mxu0 0.0
    %161 = vmatpush1.msra.mxu0 0.0
    %162 = vmatprep.subr.mxu0 0.0
    %163 = vmatpush1.msra.mxu0 0.0
    %164 = vmatprep.subr.mxu0 0.0
    %165 = vmatpush1.msra.mxu0 0.0
    %166 = vmatprep.subr.mxu0 0.0
    %167 = vmatpush1.msra.mxu0 0.0
    %168 = vmatprep.subr.mxu0 0.0
    %169 = vmatpush1.msra.mxu0 0.0
    %170 = vmatprep.subr.mxu0 0.0
    %171 = vmatpush1.msra.mxu0 0.0
    %172 = vmatprep.subr.mxu0 0.0
    %173 = vmatpush1.msra.mxu0 0.0
    %174 = vmatprep.subr.mxu0 0.0
    %175 = vmatpush1.msra.mxu0 0.0
    %176 = vmatprep.subr.mxu0 0.0
    %177 = vmatpush1.msra.mxu0 0.0
    %178 = vmatprep.subr.mxu0 0.0
    %179 = vmatpush1.msra.mxu0 0.0
    %180 = vmatprep.subr.mxu0 0.0
    %181 = vmatpush1.msra.mxu0 0.0
    %182 = vmatprep.subr.mxu0 0.0
    %183 = vmatpush1.msra.mxu0 0.0
    %184 = vmatprep.subr.mxu0 0.0
    %185 = vmatpush1.msra.mxu0 0.0
    %186 = vmatprep.subr.mxu0 0.0
    %187 = vmatpush1.msra.mxu0 0.0
    %188 = vmatprep.subr.mxu0 0.0
    %189 = vmatpush1.msra.mxu0 0.0
    %190 = vmatprep.subr.mxu0 0.0
    %191 = vmatpush1.msra.mxu0 0.0
    %192 = vmatprep.subr.mxu0 0.0
    %193 = vmatpush1.msra.mxu0 0.0
    %194 = vmatprep.subr.mxu0 0.0
    %195 = vmatpush1.msra.mxu0 0.0
    %196 = vmatprep.subr.mxu0 0.0
    %197 = vmatpush1.msra.mxu0 0.0
    %198 = vmatprep.subr.mxu0 0.0
    %199 = vmatpush1.msra.mxu0 0.0
    %200 = vmatprep.subr.mxu0 0.0
    %201 = vmatpush1.msra.mxu0 0.0
    %202 = vmatprep.subr.mxu0 0.0
    %203 = vmatpush1.msra.mxu0 0.0
    %204 = vmatprep.subr.mxu0 0.0
    %205 = vmatpush1.msra.mxu0 0.0
    %206 = vmatprep.subr.mxu0 0.0
    %207 = vmatpush1.msra.mxu0 0.0
    %208 = vmatprep.subr.mxu0 0.0
    %209 = vmatpush1.msra.mxu0 0.0
    %210 = vmatprep.subr.mxu0 0.0
    %211 = vmatpush1.msra.mxu0 0.0
    %212 = vmatprep.subr.mxu0 0.0
    %213 = vmatpush1.msra.mxu0 0.0
    %214 = vmatprep.subr.mxu0 0.0
    %215 = vmatpush1.msra.mxu0 0.0
    %216 = vmatprep.mubr.f32.mxu0 0.0
    %217 = vmatmul.mubr.f32.gmra.mrb[0].mxu0 %v120
    %v218 = vpop.f32.mrb[0].mxu0
    %v219 = vadd.f32 %v97, %v218
    %v220 = vpop.f32.mrb[0].mxu0
    %v221 = vadd.f32 %v101, %v220
    %222 = vmatprep.mubr.f32.mxu0 0.0
    %223 = vmatmul.mubr.f32.gmra.mrb[0].mxu0 %v123
    %v224 = vpop.f32.mrb[0].mxu0
    %v225 = vadd.f32 %v97, %v224
    %v226 = vpop.f32.mrb[0].mxu0
    %v227 = vadd.f32 %v101, %v226
    %228 = vmatprep.mubr.f32.mxu0 0.0
    %229 = vmatmul.mubr.f32.gmra.mrb[0].mxu0 %v126
    %v230 = vpop.f32.mrb[0].mxu0
    %v231 = vadd.f32 %v97, %v230
    %v232 = vpop.f32.mrb[0].mxu0
    %v233 = vadd.f32 %v101, %v232
    %234 = vmatprep.mubr.f32.mxu0 0.0
    %235 = vmatmul.mubr.f32.gmra.mrb[0].mxu0 %v129
    %v236 = vpop.f32.mrb[0].mxu0
    %v237 = vadd.f32 %v97, %v236
    %v238 = vpop.f32.mrb[0].mxu0
    %v239 = vadd.f32 %v101, %v238
    %240 = vmatprep.mubr.f32.mxu0 0.0
    %241 = vmatmul.mubr.f32.gmra.mrb[0].mxu0 %v132
    %v242 = vpop.f32.mrb[0].mxu0
    %v243 = vadd.f32 %v97, %v242
    %v244 = vpop.f32.mrb[0].mxu0
    %v245 = vadd.f32 %v101, %v244
    %246 = vmatprep.mubr.f32.mxu0 0.0
    %247 = vmatmul.mubr.f32.gmra.mrb[0].mxu0 %v135
    %v248 = vpop.f32.mrb[0].mxu0
    %v249 = vadd.f32 %v97, %v248
    %v250 = vpop.f32.mrb[0].mxu0
    %v251 = vadd.f32 %v101, %v250
    %252 = vmatprep.mubr.f32.mxu0 0.0
    %253 = vmatmul.mubr.f32.gmra.mrb[0].mxu0 %v138
    %v254 = vpop.f32.mrb[0].mxu0
    %v255 = vadd.f32 %v97, %v254
    %v256 = vpop.f32.mrb[0].mxu0
    %v257 = vadd.f32 %v101, %v256
    %258 = vmatprep.mubr.f32.mxu0 0.0
    %259 = vmatmul.mubr.f32.gmra.mrb[0].mxu0 %v141
    %v260 = vpop.f32.mrb[0].mxu0
    %v261 = vadd.f32 %v97, %v260
    %v262 = vpop.f32.mrb[0].mxu0
    %v263 = vadd.f32 %v101, %v262
    %264 = vdwg.mxu0
    %265 = vmatprep.subr.mxu0 %v150
    %266 = vmatpush1.msra.mxu0 %v148
    %267 = vmatprep.subr.mxu0 0.0
    %268 = vmatpush1.msra.mxu0 0.0
    %269 = vmatprep.subr.mxu0 0.0
    %270 = vmatpush1.msra.mxu0 0.0
    %271 = vmatprep.subr.mxu0 0.0
    %272 = vmatpush1.msra.mxu0 0.0
    %273 = vmatprep.subr.mxu0 0.0
    %274 = vmatpush1.msra.mxu0 0.0
    %275 = vmatprep.subr.mxu0 0.0
    %276 = vmatpush1.msra.mxu0 0.0
    %277 = vmatprep.subr.mxu0 0.0
    %278 = vmatpush1.msra.mxu0 0.0
    %279 = vmatprep.subr.mxu0 0.0
    %280 = vmatpush1.msra.mxu0 0.0
    %281 = vmatprep.subr.mxu0 0.0
    %282 = vmatpush1.msra.mxu0 0.0
    %283 = vmatprep.subr.mxu0 0.0
    %284 = vmatpush1.msra.mxu0 0.0
    %285 = vmatprep.subr.mxu0 0.0
    %286 = vmatpush1.msra.mxu0 0.0
    %287 = vmatprep.subr.mxu0 0.0
    %288 = vmatpush1.msra.mxu0 0.0
    %289 = vmatprep.subr.mxu0 0.0
    %290 = vmatpush1.msra.mxu0 0.0
    %291 = vmatprep.subr.mxu0 0.0
    %292 = vmatpush1.msra.mxu0 0.0
    %293 = vmatprep.subr.mxu0 0.0
    %294 = vmatpush1.msra.mxu0 0.0
    %295 = vmatprep.subr.mxu0 0.0
    %296 = vmatpush1.msra.mxu0 0.0
    %297 = vmatprep.subr.mxu0 0.0
    %298 = vmatpush1.msra.mxu0 0.0
    %299 = vmatprep.subr.mxu0 0.0
    %300 = vmatpush1.msra.mxu0 0.0
    %301 = vmatprep.subr.mxu0 0.0
    %302 = vmatpush1.msra.mxu0 0.0
    %303 = vmatprep.subr.mxu0 0.0
    %304 = vmatpush1.msra.mxu0 0.0
    %305 = vmatprep.subr.mxu0 0.0
    %306 = vmatpush1.msra.mxu0 0.0
    %307 = vmatprep.subr.mxu0 0.0
    %308 = vmatpush1.msra.mxu0 0.0
    %309 = vmatprep.subr.mxu0 0.0
    %310 = vmatpush1.msra.mxu0 0.0
    %311 = vmatprep.subr.mxu0 0.0
    %312 = vmatpush1.msra.mxu0 0.0
    %313 = vmatprep.subr.mxu0 0.0
    %314 = vmatpush1.msra.mxu0 0.0
    %315 = vmatprep.subr.mxu0 0.0
    %316 = vmatpush1.msra.mxu0 0.0
    %317 = vmatprep.subr.mxu0 0.0
    %318 = vmatpush1.msra.mxu0 0.0
    %319 = vmatprep.subr.mxu0 0.0
    %320 = vmatpush1.msra.mxu0 0.0
    %321 = vmatprep.subr.mxu0 0.0
    %322 = vmatpush1.msra.mxu0 0.0
    %323 = vmatprep.subr.mxu0 0.0
    %324 = vmatpush1.msra.mxu0 0.0
    %325 = vmatprep.subr.mxu0 0.0
    %326 = vmatpush1.msra.mxu0 0.0
    %327 = vmatprep.subr.mxu0 0.0
    %328 = vmatpush1.msra.mxu0 0.0
    %329 = vmatprep.mubr.f32.mxu0 0.0
    %330 = vmatmul.mubr.f32.gmra.mrb[0].mxu0 %v120
    %v331 = vpop.f32.mrb[0].mxu0
    %v332 = vadd.f32 %v105, %v331
    %v333 = vpop.f32.mrb[0].mxu0
    %v334 = vadd.f32 %v109, %v333
    %335 = vmatprep.mubr.f32.mxu0 0.0
    %336 = vmatmul.mubr.f32.gmra.mrb[0].mxu0 %v123
    %v337 = vpop.f32.mrb[0].mxu0
    %v338 = vadd.f32 %v105, %v337
    %v339 = vpop.f32.mrb[0].mxu0
    %v340 = vadd.f32 %v109, %v339
    %341 = vmatprep.mubr.f32.mxu0 0.0
    %342 = vmatmul.mubr.f32.gmra.mrb[0].mxu0 %v126
    %v343 = vpop.f32.mrb[0].mxu0
    %v344 = vadd.f32 %v105, %v343
    %v345 = vpop.f32.mrb[0].mxu0
    %v346 = vadd.f32 %v109, %v345
    %347 = vmatprep.mubr.f32.mxu0 0.0
    %348 = vmatmul.mubr.f32.gmra.mrb[0].mxu0 %v129
    %v349 = vpop.f32.mrb[0].mxu0
    %v350 = vadd.f32 %v105, %v349
    %v351 = vpop.f32.mrb[0].mxu0
    %v352 = vadd.f32 %v109, %v351
    %353 = vmatprep.mubr.f32.mxu0 0.0
    %354 = vmatmul.mubr.f32.gmra.mrb[0].mxu0 %v132
    %v355 = vpop.f32.mrb[0].mxu0
    %v356 = vadd.f32 %v105, %v355
    %v357 = vpop.f32.mrb[0].mxu0
    %v358 = vadd.f32 %v109, %v357
    %359 = vmatprep.mubr.f32.mxu0 0.0
    %360 = vmatmul.mubr.f32.gmra.mrb[0].mxu0 %v135
    %v361 = vpop.f32.mrb[0].mxu0
    %v362 = vadd.f32 %v105, %v361
    %v363 = vpop.f32.mrb[0].mxu0
    %v364 = vadd.f32 %v109, %v363
    %365 = vmatprep.mubr.f32.mxu0 0.0
    %366 = vmatmul.mubr.f32.gmra.mrb[0].mxu0 %v138
    %v367 = vpop.f32.mrb[0].mxu0
    %v368 = vadd.f32 %v105, %v367
    %v369 = vpop.f32.mrb[0].mxu0
    %v370 = vadd.f32 %v109, %v369
    %371 = vmatprep.mubr.f32.mxu0 0.0
    %372 = vmatmul.mubr.f32.gmra.mrb[0].mxu0 %v141
    %v373 = vpop.f32.mrb[0].mxu0
    %v374 = vadd.f32 %v105, %v373
    %v375 = vpop.f32.mrb[0].mxu0
    %v376 = vadd.f32 %v109, %v375
    %377 = vdwg.mxu0
    %378 = vst [vmem:[#allocation5] sm:$0xff] %v219
    %379 = vst [vmem:[#allocation5 + $0x8] sm:$0xff] %v221
    %380 = vst [vmem:[#allocation5 + $0x10] sm:$0xff] %v332
    %381 = vst [vmem:[#allocation5 + $0x18] sm:$0xff] %v334
    %382 = vst [vmem:[#allocation5 + $0x20] sm:$0xff] %v225
    %383 = vst [vmem:[#allocation5 + $0x28] sm:$0xff] %v227
    %384 = vst [vmem:[#allocation5 + $0x30] sm:$0xff] %v338
    %385 = vst [vmem:[#allocation5 + $0x38] sm:$0xff] %v340
    %386 = vst [vmem:[#allocation5 + $0x40] sm:$0xff] %v231
    %387 = vst [vmem:[#allocation5 + $0x48] sm:$0xff] %v233
    %388 = vst [vmem:[#allocation5 + $0x50] sm:$0xff] %v344
    %389 = vst [vmem:[#allocation5 + $0x58] sm:$0xff] %v346
    %390 = vst [vmem:[#allocation5 + $0x60] sm:$0xff] %v237
    %391 = vst [vmem:[#allocation5 + $0x68] sm:$0xff] %v239
    %392 = vst [vmem:[#allocation5 + $0x70] sm:$0xff] %v350
    %393 = vst [vmem:[#allocation5 + $0x78] sm:$0xff] %v352
    %394 = vst [vmem:[#allocation5 + $0x80] sm:$0xff] %v243
    %395 = vst [vmem:[#allocation5 + $0x88] sm:$0xff] %v245
    %396 = vst [vmem:[#allocation5 + $0x90] sm:$0xff] %v356
    %397 = vst [vmem:[#allocation5 + $0x98] sm:$0xff] %v358
    %398 = vst [vmem:[#allocation5 + $0xa0] sm:$0xff] %v249
    %399 = vst [vmem:[#allocation5 + $0xa8] sm:$0xff] %v251
    %400 = vst [vmem:[#allocation5 + $0xb0] sm:$0xff] %v362
    %401 = vst [vmem:[#allocation5 + $0xb8] sm:$0xff] %v364
    %402 = vst [vmem:[#allocation5 + $0xc0] sm:$0xff] %v255
    %403 = vst [vmem:[#allocation5 + $0xc8] sm:$0xff] %v257
    %404 = vst [vmem:[#allocation5 + $0xd0] sm:$0xff] %v368
    %405 = vst [vmem:[#allocation5 + $0xd8] sm:$0xff] %v370
    %406 = vst [vmem:[#allocation5 + $0xe0] sm:$0xff] %v261
    %407 = vst [vmem:[#allocation5 + $0xe8] sm:$0xff] %v263
    %408 = vst [vmem:[#allocation5 + $0xf0] sm:$0xff] %v374
    %409 = vst [vmem:[#allocation5 + $0xf8] sm:$0xff] %v376
    %v410 = vld [vmem:[#allocation6] sm:$0xff]
    %v411 = vld [vmem:[#allocation6 + $0x8] sm:$0xff]
    %v412 = vld [vmem:[#allocation6 + $0x10] sm:$0xff]
    %v413 = vld [vmem:[#allocation6 + $0x18] sm:$0xff]
    %v414 = vld [vmem:[#allocation6 + $0x20] sm:$0xff]
    %v415 = vld [vmem:[#allocation6 + $0x28] sm:$0xff]
    %v416 = vld [vmem:[#allocation6 + $0x30] sm:$0xff]
    %v417 = vld [vmem:[#allocation6 + $0x38] sm:$0xff]
    %v418 = vld [vmem:[#allocation6 + $0x40] sm:$0xff]
    %v419 = vld [vmem:[#allocation6 + $0x48] sm:$0xff]
    %v420 = vld [vmem:[#allocation6 + $0x50] sm:$0xff]
    %v421 = vld [vmem:[#allocation6 + $0x58] sm:$0xff]
    %v422 = vld [vmem:[#allocation6 + $0x60] sm:$0xff]
    %v423 = vld [vmem:[#allocation6 + $0x68] sm:$0xff]
    %v424 = vld [vmem:[#allocation6 + $0x70] sm:$0xff]
    %v425 = vld [vmem:[#allocation6 + $0x78] sm:$0xff]
    %v426 = vld [vmem:[#allocation6 + $0x80] sm:$0xff]
    %v427 = vld [vmem:[#allocation6 + $0x88] sm:$0xff]
    %v428 = vld [vmem:[#allocation6 + $0x90] sm:$0xff]
    %v429 = vld [vmem:[#allocation6 + $0x98] sm:$0xff]
    %v430 = vld [vmem:[#allocation6 + $0xa0] sm:$0xff]
    %v431 = vld [vmem:[#allocation6 + $0xa8] sm:$0xff]
    %v432 = vld [vmem:[#allocation6 + $0xb0] sm:$0xff]
    %v433 = vld [vmem:[#allocation6 + $0xb8] sm:$0xff]
    %v434 = vld [vmem:[#allocation6 + $0xc0] sm:$0xff]
    %v435 = vld [vmem:[#allocation6 + $0xc8] sm:$0xff]
    %v436 = vld [vmem:[#allocation6 + $0xd0] sm:$0xff]
    %v437 = vld [vmem:[#allocation6 + $0xd8] sm:$0xff]
    %v438 = vld [vmem:[#allocation6 + $0xe0] sm:$0xff]
    %v439 = vld [vmem:[#allocation6 + $0xe8] sm:$0xff]
    %v440 = vld [vmem:[#allocation6 + $0xf0] sm:$0xff]
    %v441 = vld [vmem:[#allocation6 + $0xf8] sm:$0xff]
    %v442 = vld [vmem:[#allocation6 + $0x100] sm:$0xff]
    %v443 = vld [vmem:[#allocation6 + $0x108] sm:$0xff]
    %v444 = vld [vmem:[#allocation6 + $0x110] sm:$0xff]
    %v445 = vld [vmem:[#allocation6 + $0x118] sm:$0xff]
    %v446 = vld [vmem:[#allocation6 + $0x120] sm:$0xff]
    %v447 = vld [vmem:[#allocation6 + $0x128] sm:$0xff]
    %v448 = vld [vmem:[#allocation6 + $0x130] sm:$0xff]
    %v449 = vld [vmem:[#allocation6 + $0x138] sm:$0xff]
    %v450 = vld [vmem:[#allocation6 + $0x140] sm:$0xff]
    %v451 = vld [vmem:[#allocation6 + $0x148] sm:$0xff]
    %v452 = vld [vmem:[#allocation6 + $0x150] sm:$0xff]
    %v453 = vld [vmem:[#allocation6 + $0x158] sm:$0xff]
    %v454 = vld [vmem:[#allocation6 + $0x160] sm:$0xff]
    %v455 = vld [vmem:[#allocation6 + $0x168] sm:$0xff]
    %v456 = vld [vmem:[#allocation6 + $0x170] sm:$0xff]
    %v457 = vld [vmem:[#allocation6 + $0x178] sm:$0xff]
    %v458 = vld [vmem:[#allocation6 + $0x180] sm:$0xff]
    %v459 = vld [vmem:[#allocation6 + $0x188] sm:$0xff]
    %v460 = vld [vmem:[#allocation6 + $0x190] sm:$0xff]
    %v461 = vld [vmem:[#allocation6 + $0x198] sm:$0xff]
    %v462 = vld [vmem:[#allocation6 + $0x1a0] sm:$0xff]
    %v463 = vld [vmem:[#allocation6 + $0x1a8] sm:$0xff]
    %v464 = vld [vmem:[#allocation6 + $0x1b0] sm:$0xff]
    %v465 = vld [vmem:[#allocation6 + $0x1b8] sm:$0xff]
    %v466 = vld [vmem:[#allocation6 + $0x1c0] sm:$0xff]
    %v467 = vld [vmem:[#allocation6 + $0x1c8] sm:$0xff]
    %v468 = vld [vmem:[#allocation6 + $0x1d0] sm:$0xff]
    %v469 = vld [vmem:[#allocation6 + $0x1d8] sm:$0xff]
    %v470 = vld [vmem:[#allocation6 + $0x1e0] sm:$0xff]
    %v471 = vld [vmem:[#allocation6 + $0x1e8] sm:$0xff]
    %v472 = vld [vmem:[#allocation6 + $0x1f0] sm:$0xff]
    %v473 = vld [vmem:[#allocation6 + $0x1f8] sm:$0xff]
    %v474 = vld [vmem:[#allocation2] sm:$0xff]
    %v475 = vld [vmem:[#allocation3] sm:$0xff]
    %s476 = smul.u32 0, 4
    %s477 = smul.addr %s476, 8
    %s478 = scalar_lea.vmem [#allocation5], %s477
    %v479 = vld [vmem:[%s478] sm:$0xff]
    %v480 = vld [vmem:[%s478 + $0x8] sm:$0xff]
    %v481 = vld [vmem:[%s478 + $0x10] sm:$0xff]
    %v482 = vld [vmem:[%s478 + $0x18] sm:$0xff]
    %483 = vmatprep.subr.mxu0 %v411
    %484 = vmatpush1.msra.mxu0 %v410
    %485 = vmatprep.subr.mxu0 %v415
    %486 = vmatpush1.msra.mxu0 %v414
    %487 = vmatprep.subr.mxu0 %v419
    %488 = vmatpush1.msra.mxu0 %v418
    %489 = vmatprep.subr.mxu0 %v423
    %490 = vmatpush1.msra.mxu0 %v422
    %491 = vmatprep.subr.mxu0 %v427
    %492 = vmatpush1.msra.mxu0 %v426
    %493 = vmatprep.subr.mxu0 %v431
    %494 = vmatpush1.msra.mxu0 %v430
    %495 = vmatprep.subr.mxu0 %v435
    %496 = vmatpush1.msra.mxu0 %v434
    %497 = vmatprep.subr.mxu0 %v439
    %498 = vmatpush1.msra.mxu0 %v438
    %499 = vmatprep.subr.mxu0 %v443
    %500 = vmatpush1.msra.mxu0 %v442
    %501 = vmatprep.subr.mxu0 %v447
    %502 = vmatpush1.msra.mxu0 %v446
    %503 = vmatprep.subr.mxu0 %v451
    %504 = vmatpush1.msra.mxu0 %v450
    %505 = vmatprep.subr.mxu0 %v455
    %506 = vmatpush1.msra.mxu0 %v454
    %507 = vmatprep.subr.mxu0 %v459
    %508 = vmatpush1.msra.mxu0 %v458
    %509 = vmatprep.subr.mxu0 %v463
    %510 = vmatpush1.msra.mxu0 %v462
    %511 = vmatprep.subr.mxu0 %v467
    %512 = vmatpush1.msra.mxu0 %v466
    %513 = vmatprep.subr.mxu0 %v471
    %514 = vmatpush1.msra.mxu0 %v470
    %515 = vmatprep.subr.mxu0 0.0
    %516 = vmatpush1.msra.mxu0 0.0
    %517 = vmatprep.subr.mxu0 0.0
    %518 = vmatpush1.msra.mxu0 0.0
    %519 = vmatprep.subr.mxu0 0.0
    %520 = vmatpush1.msra.mxu0 0.0
    %521 = vmatprep.subr.mxu0 0.0
    %522 = vmatpush1.msra.mxu0 0.0
    %523 = vmatprep.subr.mxu0 0.0
    %524 = vmatpush1.msra.mxu0 0.0
    %525 = vmatprep.subr.mxu0 0.0
    %526 = vmatpush1.msra.mxu0 0.0
    %527 = vmatprep.subr.mxu0 0.0
    %528 = vmatpush1.msra.mxu0 0.0
    %529 = vmatprep.subr.mxu0 0.0
    %530 = vmatpush1.msra.mxu0 0.0
    %531 = vmatprep.subr.mxu0 0.0
    %532 = vmatpush1.msra.mxu0 0.0
    %533 = vmatprep.subr.mxu0 0.0
    %534 = vmatpush1.msra.mxu0 0.0
    %535 = vmatprep.subr.mxu0 0.0
    %536 = vmatpush1.msra.mxu0 0.0
    %537 = vmatprep.subr.mxu0 0.0
    %538 = vmatpush1.msra.mxu0 0.0
    %539 = vmatprep.subr.mxu0 0.0
    %540 = vmatpush1.msra.mxu0 0.0
    %541 = vmatprep.subr.mxu0 0.0
    %542 = vmatpush1.msra.mxu0 0.0
    %543 = vmatprep.subr.mxu0 0.0
    %544 = vmatpush1.msra.mxu0 0.0
    %545 = vmatprep.subr.mxu0 0.0
    %546 = vmatpush1.msra.mxu0 0.0
    %547 = vmatprep.mubr.f32.mxu0 0.0
    %548 = vmatmul.mubr.f32.gmra.mrb[0].mxu0 %v474
    %v549 = vpop.f32.mrb[0].mxu0
    %v550 = vadd.f32 0.0, %v549
    %v551 = vpop.f32.mrb[0].mxu0
    %v552 = vadd.f32 0.0, %v551
    %553 = vdwg.mxu0
    %554 = vmatprep.subr.mxu0 %v413
    %555 = vmatpush1.msra.mxu0 %v412
    %556 = vmatprep.subr.mxu0 %v417
    %557 = vmatpush1.msra.mxu0 %v416
    %558 = vmatprep.subr.mxu0 %v421
    %559 = vmatpush1.msra.mxu0 %v420
    %560 = vmatprep.subr.mxu0 %v425
    %561 = vmatpush1.msra.mxu0 %v424
    %562 = vmatprep.subr.mxu0 %v429
    %563 = vmatpush1.msra.mxu0 %v428
    %564 = vmatprep.subr.mxu0 %v433
    %565 = vmatpush1.msra.mxu0 %v432
    %566 = vmatprep.subr.mxu0 %v437
    %567 = vmatpush1.msra.mxu0 %v436
    %568 = vmatprep.subr.mxu0 %v441
    %569 = vmatpush1.msra.mxu0 %v440
    %570 = vmatprep.subr.mxu0 %v445
    %571 = vmatpush1.msra.mxu0 %v444
    %572 = vmatprep.subr.mxu0 %v449
    %573 = vmatpush1.msra.mxu0 %v448
    %574 = vmatprep.subr.mxu0 %v453
    %575 = vmatpush1.msra.mxu0 %v452
    %576 = vmatprep.subr.mxu0 %v457
    %577 = vmatpush1.msra.mxu0 %v456
    %578 = vmatprep.subr.mxu0 %v461
    %579 = vmatpush1.msra.mxu0 %v460
    %580 = vmatprep.subr.mxu0 %v465
    %581 = vmatpush1.msra.mxu0 %v464
    %582 = vmatprep.subr.mxu0 %v469
    %583 = vmatpush1.msra.mxu0 %v468
    %584 = vmatprep.subr.mxu0 %v473
    %585 = vmatpush1.msra.mxu0 %v472
    %586 = vmatprep.subr.mxu0 0.0
    %587 = vmatpush1.msra.mxu0 0.0
    %588 = vmatprep.subr.mxu0 0.0
    %589 = vmatpush1.msra.mxu0 0.0
    %590 = vmatprep.subr.mxu0 0.0
    %591 = vmatpush1.msra.mxu0 0.0
    %592 = vmatprep.subr.mxu0 0.0
    %593 = vmatpush1.msra.mxu0 0.0
    %594 = vmatprep.subr.mxu0 0.0
    %595 = vmatpush1.msra.mxu0 0.0
    %596 = vmatprep.subr.mxu0 0.0
    %597 = vmatpush1.msra.mxu0 0.0
    %598 = vmatprep.subr.mxu0 0.0
    %599 = vmatpush1.msra.mxu0 0.0
    %600 = vmatprep.subr.mxu0 0.0
    %601 = vmatpush1.msra.mxu0 0.0
    %602 = vmatprep.subr.mxu0 0.0
    %603 = vmatpush1.msra.mxu0 0.0
    %604 = vmatprep.subr.mxu0 0.0
    %605 = vmatpush1.msra.mxu0 0.0
    %606 = vmatprep.subr.mxu0 0.0
    %607 = vmatpush1.msra.mxu0 0.0
    %608 = vmatprep.subr.mxu0 0.0
    %609 = vmatpush1.msra.mxu0 0.0
    %610 = vmatprep.subr.mxu0 0.0
    %611 = vmatpush1.msra.mxu0 0.0
    %612 = vmatprep.subr.mxu0 0.0
    %613 = vmatpush1.msra.mxu0 0.0
    %614 = vmatprep.subr.mxu0 0.0
    %615 = vmatpush1.msra.mxu0 0.0
    %616 = vmatprep.subr.mxu0 0.0
    %617 = vmatpush1.msra.mxu0 0.0
    %618 = vmatprep.mubr.f32.mxu0 0.0
    %619 = vmatmul.mubr.f32.gmra.mrb[0].mxu0 %v474
    %v620 = vpop.f32.mrb[0].mxu0
    %v621 = vadd.f32 0.0, %v620
    %v622 = vpop.f32.mrb[0].mxu0
    %v623 = vadd.f32 0.0, %v622
    %624 = vdwg.mxu0
    %v625 = vadd.f32 %v479, %v550
    %v626 = vadd.f32 %v480, %v552
    %v627 = vadd.f32 %v481, %v621
    %v628 = vadd.f32 %v482, %v623
    %v629 = vmul.f32 %v625, 0.5
    %v630 = vtanh.pop %v629
    %v631 = vmul.f32 %v630, 0.5
    %v632 = vadd.f32 %v631, 0.5
    %v633 = vmul.f32 %v626, 0.5
    %v634 = vtanh.pop %v633
    %v635 = vmul.f32 %v634, 0.5
    %v636 = vadd.f32 %v635, 0.5
    %v637 = vtanh.pop %v627
    %v638 = vmul.f32 %v636, %v475
    %v639 = vmul.f32 %v632, %v637
    %v640 = vadd.f32 %v638, %v639
    %v641 = vmul.f32 %v628, 0.5
    %v642 = vtanh.pop %v641
    %v643 = vmul.f32 %v642, 0.5
    %v644 = vadd.f32 %v643, 0.5
    %v645 = vtanh.pop %v640
    %v646 = vmul.f32 %v644, %v645
    %647 = vst [vmem:[#allocation4] sm:$0xff] %v646
    %s648 = smul.u32 1, 4
    %s649 = smul.addr %s648, 8
    %s650 = scalar_lea.vmem [#allocation5], %s649
    %v651 = vld [vmem:[%s650] sm:$0xff]
    %v652 = vld [vmem:[%s650 + $0x8] sm:$0xff]
    %v653 = vld [vmem:[%s650 + $0x10] sm:$0xff]
    %v654 = vld [vmem:[%s650 + $0x18] sm:$0xff]
    %655 = vmatprep.subr.mxu0 %v411
    %656 = vmatpush1.msra.mxu0 %v410
    %657 = vmatprep.subr.mxu0 %v415
    %658 = vmatpush1.msra.mxu0 %v414
    %659 = vmatprep.subr.mxu0 %v419
    %660 = vmatpush1.msra.mxu0 %v418
    %661 = vmatprep.subr.mxu0 %v423
    %662 = vmatpush1.msra.mxu0 %v422
    %663 = vmatprep.subr.mxu0 %v427
    %664 = vmatpush1.msra.mxu0 %v426
    %665 = vmatprep.subr.mxu0 %v431
    %666 = vmatpush1.msra.mxu0 %v430
    %667 = vmatprep.subr.mxu0 %v435
    %668 = vmatpush1.msra.mxu0 %v434
    %669 = vmatprep.subr.mxu0 %v439
    %670 = vmatpush1.msra.mxu0 %v438
    %671 = vmatprep.subr.mxu0 %v443
    %672 = vmatpush1.msra.mxu0 %v442
    %673 = vmatprep.subr.mxu0 %v447
    %674 = vmatpush1.msra.mxu0 %v446
    %675 = vmatprep.subr.mxu0 %v451
    %676 = vmatpush1.msra.mxu0 %v450
    %677 = vmatprep.subr.mxu0 %v455
    %678 = vmatpush1.msra.mxu0 %v454
    %679 = vmatprep.subr.mxu0 %v459
    %680 = vmatpush1.msra.mxu0 %v458
    %681 = vmatprep.subr.mxu0 %v463
    %682 = vmatpush1.msra.mxu0 %v462
    %683 = vmatprep.subr.mxu0 %v467
    %684 = vmatpush1.msra.mxu0 %v466
    %685 = vmatprep.subr.mxu0 %v471
    %686 = vmatpush1.msra.mxu0 %v470
    %687 = vmatprep.subr.mxu0 0.0
    %688 = vmatpush1.msra.mxu0 0.0
    %689 = vmatprep.subr.mxu0 0.0
    %690 = vmatpush1.msra.mxu0 0.0
    %691 = vmatprep.subr.mxu0 0.0
    %692 = vmatpush1.msra.mxu0 0.0
    %693 = vmatprep.subr.mxu0 0.0
    %694 = vmatpush1.msra.mxu0 0.0
    %695 = vmatprep.subr.mxu0 0.0
    %696 = vmatpush1.msra.mxu0 0.0
    %697 = vmatprep.subr.mxu0 0.0
    %698 = vmatpush1.msra.mxu0 0.0
    %699 = vmatprep.subr.mxu0 0.0
    %700 = vmatpush1.msra.mxu0 0.0
    %701 = vmatprep.subr.mxu0 0.0
    %702 = vmatpush1.msra.mxu0 0.0
    %703 = vmatprep.subr.mxu0 0.0
    %704 = vmatpush1.msra.mxu0 0.0
    %705 = vmatprep.subr.mxu0 0.0
    %706 = vmatpush1.msra.mxu0 0.0
    %707 = vmatprep.subr.mxu0 0.0
    %708 = vmatpush1.msra.mxu0 0.0
    %709 = vmatprep.subr.mxu0 0.0
    %710 = vmatpush1.msra.mxu0 0.0
    %711 = vmatprep.subr.mxu0 0.0
    %712 = vmatpush1.msra.mxu0 0.0
    %713 = vmatprep.subr.mxu0 0.0
    %714 = vmatpush1.msra.mxu0 0.0
    %715 = vmatprep.subr.mxu0 0.0
    %716 = vmatpush1.msra.mxu0 0.0
    %717 = vmatprep.subr.mxu0 0.0
    %718 = vmatpush1.msra.mxu0 0.0
    %719 = vmatprep.mubr.f32.mxu0 0.0
    %720 = vmatmul.mubr.f32.gmra.mrb[0].mxu0 %v646
    %v721 = vpop.f32.mrb[0].mxu0
    %v722 = vadd.f32 0.0, %v721
    %v723 = vpop.f32.mrb[0].mxu0
    %v724 = vadd.f32 0.0, %v723
    %725 = vdwg.mxu0
    %726 = vmatprep.subr.mxu0 %v413
    %727 = vmatpush1.msra.mxu0 %v412
    %728 = vmatprep.subr.mxu0 %v417
    %729 = vmatpush1.msra.mxu0 %v416
    %730 = vmatprep.subr.mxu0 %v421
    %731 = vmatpush1.msra.mxu0 %v420
    %732 = vmatprep.subr.mxu0 %v425
    %733 = vmatpush1.msra.mxu0 %v424
    %734 = vmatprep.subr.mxu0 %v429
    %735 = vmatpush1.msra.mxu0 %v428
    %736 = vmatprep.subr.mxu0 %v433
    %737 = vmatpush1.msra.mxu0 %v432
    %738 = vmatprep.subr.mxu0 %v437
    %739 = vmatpush1.msra.mxu0 %v436
    %740 = vmatprep.subr.mxu0 %v441
    %741 = vmatpush1.msra.mxu0 %v440
    %742 = vmatprep.subr.mxu0 %v445
    %743 = vmatpush1.msra.mxu0 %v444
    %744 = vmatprep.subr.mxu0 %v449
    %745 = vmatpush1.msra.mxu0 %v448
    %746 = vmatprep.subr.mxu0 %v453
    %747 = vmatpush1.msra.mxu0 %v452
    %748 = vmatprep.subr.mxu0 %v457
    %749 = vmatpush1.msra.mxu0 %v456
    %750 = vmatprep.subr.mxu0 %v461
    %751 = vmatpush1.msra.mxu0 %v460
    %752 = vmatprep.subr.mxu0 %v465
    %753 = vmatpush1.msra.mxu0 %v464
    %754 = vmatprep.subr.mxu0 %v469
    %755 = vmatpush1.msra.mxu0 %v468
    %756 = vmatprep.subr.mxu0 %v473
    %757 = vmatpush1.msra.mxu0 %v472
    %758 = vmatprep.subr.mxu0 0.0
    %759 = vmatpush1.msra.mxu0 0.0
    %760 = vmatprep.subr.mxu0 0.0
    %761 = vmatpush1.msra.mxu0 0.0
    %762 = vmatprep.subr.mxu0 0.0
    %763 = vmatpush1.msra.mxu0 0.0
    %764 = vmatprep.subr.mxu0 0.0
    %765 = vmatpush1.msra.mxu0 0.0
    %766 = vmatprep.subr.mxu0 0.0
    %767 = vmatpush1.msra.mxu0 0.0
    %768 = vmatprep.subr.mxu0 0.0
    %769 = vmatpush1.msra.mxu0 0.0
    %770 = vmatprep.subr.mxu0 0.0
    %771 = vmatpush1.msra.mxu0 0.0
    %772 = vmatprep.subr.mxu0 0.0
    %773 = vmatpush1.msra.mxu0 0.0
    %774 = vmatprep.subr.mxu0 0.0
    %775 = vmatpush1.msra.mxu0 0.0
    %776 = vmatprep.subr.mxu0 0.0
    %777 = vmatpush1.msra.mxu0 0.0
    %778 = vmatprep.subr.mxu0 0.0
    %779 = vmatpush1.msra.mxu0 0.0
    %780 = vmatprep.subr.mxu0 0.0
    %781 = vmatpush1.msra.mxu0 0.0
    %782 = vmatprep.subr.mxu0 0.0
    %783 = vmatpush1.msra.mxu0 0.0
    %784 = vmatprep.subr.mxu0 0.0
    %785 = vmatpush1.msra.mxu0 0.0
    %786 = vmatprep.subr.mxu0 0.0
    %787 = vmatpush1.msra.mxu0 0.0
    %788 = vmatprep.subr.mxu0 0.0
    %789 = vmatpush1.msra.mxu0 0.0
    %790 = vmatprep.mubr.f32.mxu0 0.0
    %791 = vmatmul.mubr.f32.gmra.mrb[0].mxu0 %v646
    %v792 = vpop.f32.mrb[0].mxu0
    %v793 = vadd.f32 0.0, %v792
    %v794 = vpop.f32.mrb[0].mxu0
    %v795 = vadd.f32 0.0, %v794
    %796 = vdwg.mxu0
    %v797 = vadd.f32 %v651, %v722
    %v798 = vadd.f32 %v652, %v724
    %v799 = vadd.f32 %v653, %v793
    %v800 = vadd.f32 %v654, %v795
    %v801 = vmul.f32 %v797, 0.5
    %v802 = vtanh.pop %v801
    %v803 = vmul.f32 %v802, 0.5
    %v804 = vadd.f32 %v803, 0.5
    %v805 = vmul.f32 %v798, 0.5
    %v806 = vtanh.pop %v805
    %v807 = vmul.f32 %v806, 0.5
    %v808 = vadd.f32 %v807, 0.5
    %v809 = vtanh.pop %v799
    %v810 = vmul.f32 %v808, %v640
    %v811 = vmul.f32 %v804, %v809
    %v812 = vadd.f32 %v810, %v811
    %v813 = vmul.f32 %v800, 0.5
    %v814 = vtanh.pop %v813
    %v815 = vmul.f32 %v814, 0.5
    %v816 = vadd.f32 %v815, 0.5
    %v817 = vtanh.pop %v812
    %v818 = vmul.f32 %v816, %v817
    %s819 = scalar_lea.vmem [#allocation4], 8
    %820 = vst [vmem:[%s819] sm:$0xff] %v818
    %s821 = smul.u32 2, 4
    %s822 = smul.addr %s821, 8
    %s823 = scalar_lea.vmem [#allocation5], %s822
    %v824 = vld [vmem:[%s823] sm:$0xff]
    %v825 = vld [vmem:[%s823 + $0x8] sm:$0xff]
    %v826 = vld [vmem:[%s823 + $0x10] sm:$0xff]
    %v827 = vld [vmem:[%s823 + $0x18] sm:$0xff]
    %828 = vmatprep.subr.mxu0 %v411
    %829 = vmatpush1.msra.mxu0 %v410
    %830 = vmatprep.subr.mxu0 %v415
    %831 = vmatpush1.msra.mxu0 %v414
    %832 = vmatprep.subr.mxu0 %v419
    %833 = vmatpush1.msra.mxu0 %v418
    %834 = vmatprep.subr.mxu0 %v423
    %835 = vmatpush1.msra.mxu0 %v422
    %836 = vmatprep.subr.mxu0 %v427
    %837 = vmatpush1.msra.mxu0 %v426
    %838 = vmatprep.subr.mxu0 %v431
    %839 = vmatpush1.msra.mxu0 %v430
    %840 = vmatprep.subr.mxu0 %v435
    %841 = vmatpush1.msra.mxu0 %v434
    %842 = vmatprep.subr.mxu0 %v439
    %843 = vmatpush1.msra.mxu0 %v438
    %844 = vmatprep.subr.mxu0 %v443
    %845 = vmatpush1.msra.mxu0 %v442
    %846 = vmatprep.subr.mxu0 %v447
    %847 = vmatpush1.msra.mxu0 %v446
    %848 = vmatprep.subr.mxu0 %v451
    %849 = vmatpush1.msra.mxu0 %v450
    %850 = vmatprep.subr.mxu0 %v455
    %851 = vmatpush1.msra.mxu0 %v454
    %852 = vmatprep.subr.mxu0 %v459
    %853 = vmatpush1.msra.mxu0 %v458
    %854 = vmatprep.subr.mxu0 %v463
    %855 = vmatpush1.msra.mxu0 %v462
    %856 = vmatprep.subr.mxu0 %v467
    %857 = vmatpush1.msra.mxu0 %v466
    %858 = vmatprep.subr.mxu0 %v471
    %859 = vmatpush1.msra.mxu0 %v470
    %860 = vmatprep.subr.mxu0 0.0
    %861 = vmatpush1.msra.mxu0 0.0
    %862 = vmatprep.subr.mxu0 0.0
    %863 = vmatpush1.msra.mxu0 0.0
    %864 = vmatprep.subr.mxu0 0.0
    %865 = vmatpush1.msra.mxu0 0.0
    %866 = vmatprep.subr.mxu0 0.0
    %867 = vmatpush1.msra.mxu0 0.0
    %868 = vmatprep.subr.mxu0 0.0
    %869 = vmatpush1.msra.mxu0 0.0
    %870 = vmatprep.subr.mxu0 0.0
    %871 = vmatpush1.msra.mxu0 0.0
    %872 = vmatprep.subr.mxu0 0.0
    %873 = vmatpush1.msra.mxu0 0.0
    %874 = vmatprep.subr.mxu0 0.0
    %875 = vmatpush1.msra.mxu0 0.0
    %876 = vmatprep.subr.mxu0 0.0
    %877 = vmatpush1.msra.mxu0 0.0
    %878 = vmatprep.subr.mxu0 0.0
    %879 = vmatpush1.msra.mxu0 0.0
    %880 = vmatprep.subr.mxu0 0.0
    %881 = vmatpush1.msra.mxu0 0.0
    %882 = vmatprep.subr.mxu0 0.0
    %883 = vmatpush1.msra.mxu0 0.0
    %884 = vmatprep.subr.mxu0 0.0
    %885 = vmatpush1.msra.mxu0 0.0
    %886 = vmatprep.subr.mxu0 0.0
    %887 = vmatpush1.msra.mxu0 0.0
    %888 = vmatprep.subr.mxu0 0.0
    %889 = vmatpush1.msra.mxu0 0.0
    %890 = vmatprep.subr.mxu0 0.0
    %891 = vmatpush1.msra.mxu0 0.0
    %892 = vmatprep.mubr.f32.mxu0 0.0
    %893 = vmatmul.mubr.f32.gmra.mrb[0].mxu0 %v818
    %v894 = vpop.f32.mrb[0].mxu0
    %v895 = vadd.f32 0.0, %v894
    %v896 = vpop.f32.mrb[0].mxu0
    %v897 = vadd.f32 0.0, %v896
    %898 = vdwg.mxu0
    %899 = vmatprep.subr.mxu0 %v413
    %900 = vmatpush1.msra.mxu0 %v412
    %901 = vmatprep.subr.mxu0 %v417
    %902 = vmatpush1.msra.mxu0 %v416
    %903 = vmatprep.subr.mxu0 %v421
    %904 = vmatpush1.msra.mxu0 %v420
    %905 = vmatprep.subr.mxu0 %v425
    %906 = vmatpush1.msra.mxu0 %v424
    %907 = vmatprep.subr.mxu0 %v429
    %908 = vmatpush1.msra.mxu0 %v428
    %909 = vmatprep.subr.mxu0 %v433
    %910 = vmatpush1.msra.mxu0 %v432
    %911 = vmatprep.subr.mxu0 %v437
    %912 = vmatpush1.msra.mxu0 %v436
    %913 = vmatprep.subr.mxu0 %v441
    %914 = vmatpush1.msra.mxu0 %v440
    %915 = vmatprep.subr.mxu0 %v445
    %916 = vmatpush1.msra.mxu0 %v444
    %917 = vmatprep.subr.mxu0 %v449
    %918 = vmatpush1.msra.mxu0 %v448
    %919 = vmatprep.subr.mxu0 %v453
    %920 = vmatpush1.msra.mxu0 %v452
    %921 = vmatprep.subr.mxu0 %v457
    %922 = vmatpush1.msra.mxu0 %v456
    %923 = vmatprep.subr.mxu0 %v461
    %924 = vmatpush1.msra.mxu0 %v460
    %925 = vmatprep.subr.mxu0 %v465
    %926 = vmatpush1.msra.mxu0 %v464
    %927 = vmatprep.subr.mxu0 %v469
    %928 = vmatpush1.msra.mxu0 %v468
    %929 = vmatprep.subr.mxu0 %v473
    %930 = vmatpush1.msra.mxu0 %v472
    %931 = vmatprep.subr.mxu0 0.0
    %932 = vmatpush1.msra.mxu0 0.0
    %933 = vmatprep.subr.mxu0 0.0
    %934 = vmatpush1.msra.mxu0 0.0
    %935 = vmatprep.subr.mxu0 0.0
    %936 = vmatpush1.msra.mxu0 0.0
    %937 = vmatprep.subr.mxu0 0.0
    %938 = vmatpush1.msra.mxu0 0.0
    %939 = vmatprep.subr.mxu0 0.0
    %940 = vmatpush1.msra.mxu0 0.0
    %941 = vmatprep.subr.mxu0 0.0
    %942 = vmatpush1.msra.mxu0 0.0
    %943 = vmatprep.subr.mxu0 0.0
    %944 = vmatpush1.msra.mxu0 0.0
    %945 = vmatprep.subr.mxu0 0.0
    %946 = vmatpush1.msra.mxu0 0.0
    %947 = vmatprep.subr.mxu0 0.0
    %948 = vmatpush1.msra.mxu0 0.0
    %949 = vmatprep.subr.mxu0 0.0
    %950 = vmatpush1.msra.mxu0 0.0
    %951 = vmatprep.subr.mxu0 0.0
    %952 = vmatpush1.msra.mxu0 0.0
    %953 = vmatprep.subr.mxu0 0.0
    %954 = vmatpush1.msra.mxu0 0.0
    %955 = vmatprep.subr.mxu0 0.0
    %956 = vmatpush1.msra.mxu0 0.0
    %957 = vmatprep.subr.mxu0 0.0
    %958 = vmatpush1.msra.mxu0 0.0
    %959 = vmatprep.subr.mxu0 0.0
    %960 = vmatpush1.msra.mxu0 0.0
    %961 = vmatprep.subr.mxu0 0.0
    %962 = vmatpush1.msra.mxu0 0.0
    %963 = vmatprep.mubr.f32.mxu0 0.0
    %964 = vmatmul.mubr.f32.gmra.mrb[0].mxu0 %v818
    %v965 = vpop.f32.mrb[0].mxu0
    %v966 = vadd.f32 0.0, %v965
    %v967 = vpop.f32.mrb[0].mxu0
    %v968 = vadd.f32 0.0, %v967
    %969 = vdwg.mxu0
    %v970 = vadd.f32 %v824, %v895
    %v971 = vadd.f32 %v825, %v897
    %v972 = vadd.f32 %v826, %v966
    %v973 = vadd.f32 %v827, %v968
    %v974 = vmul.f32 %v970, 0.5
    %v975 = vtanh.pop %v974
    %v976 = vmul.f32 %v975, 0.5
    %v977 = vadd.f32 %v976, 0.5
    %v978 = vmul.f32 %v971, 0.5
    %v979 = vtanh.pop %v978
    %v980 = vmul.f32 %v979, 0.5
    %v981 = vadd.f32 %v980, 0.5
    %v982 = vtanh.pop %v972
    %v983 = vmul.f32 %v981, %v812
    %v984 = vmul.f32 %v977, %v982
    %v985 = vadd.f32 %v983, %v984
    %v986 = vmul.f32 %v973, 0.5
    %v987 = vtanh.pop %v986
    %v988 = vmul.f32 %v987, 0.5
    %v989 = vadd.f32 %v988, 0.5
    %v990 = vtanh.pop %v985
    %v991 = vmul.f32 %v989, %v990
    %s992 = scalar_lea.vmem [#allocation4], 16
    %993 = vst [vmem:[%s992] sm:$0xff] %v991
    %s994 = smul.u32 3, 4
    %s995 = smul.addr %s994, 8
    %s996 = scalar_lea.vmem [#allocation5], %s995
    %v997 = vld [vmem:[%s996] sm:$0xff]
    %v998 = vld [vmem:[%s996 + $0x8] sm:$0xff]
    %v999 = vld [vmem:[%s996 + $0x10] sm:$0xff]
    %v1000 = vld [vmem:[%s996 + $0x18] sm:$0xff]
    %1001 = vmatprep.subr.mxu0 %v411
    %1002 = vmatpush1.msra.mxu0 %v410
    %1003 = vmatprep.subr.mxu0 %v415
    %1004 = vmatpush1.msra.mxu0 %v414
    %1005 = vmatprep.subr.mxu0 %v419
    %1006 = vmatpush1.msra.mxu0 %v418
    %1007 = vmatprep.subr.mxu0 %v423
    %1008 = vmatpush1.msra.mxu0 %v422
    %1009 = vmatprep.subr.mxu0 %v427
    %1010 = vmatpush1.msra.mxu0 %v426
    %1011 = vmatprep.subr.mxu0 %v431
    %1012 = vmatpush1.msra.mxu0 %v430
    %1013 = vmatprep.subr.mxu0 %v435
    %1014 = vmatpush1.msra.mxu0 %v434
    %1015 = vmatprep.subr.mxu0 %v439
    %1016 = vmatpush1.msra.mxu0 %v438
    %1017 = vmatprep.subr.mxu0 %v443
    %1018 = vmatpush1.msra.mxu0 %v442
    %1019 = vmatprep.subr.mxu0 %v447
    %1020 = vmatpush1.msra.mxu0 %v446
    %1021 = vmatprep.subr.mxu0 %v451
    %1022 = vmatpush1.msra.mxu0 %v450
    %1023 = vmatprep.subr.mxu0 %v455
    %1024 = vmatpush1.msra.mxu0 %v454
    %1025 = vmatprep.subr.mxu0 %v459
    %1026 = vmatpush1.msra.mxu0 %v458
    %1027 = vmatprep.subr.mxu0 %v463
    %1028 = vmatpush1.msra.mxu0 %v462
    %1029 = vmatprep.subr.mxu0 %v467
    %1030 = vmatpush1.msra.mxu0 %v466
    %1031 = vmatprep.subr.mxu0 %v471
    %1032 = vmatpush1.msra.mxu0 %v470
    %1033 = vmatprep.subr.mxu0 0.0
    %1034 = vmatpush1.msra.mxu0 0.0
    %1035 = vmatprep.subr.mxu0 0.0
    %1036 = vmatpush1.msra.mxu0 0.0
    %1037 = vmatprep.subr.mxu0 0.0
    %1038 = vmatpush1.msra.mxu0 0.0
    %1039 = vmatprep.subr.mxu0 0.0
    %1040 = vmatpush1.msra.mxu0 0.0
    %1041 = vmatprep.subr.mxu0 0.0
    %1042 = vmatpush1.msra.mxu0 0.0
    %1043 = vmatprep.subr.mxu0 0.0
    %1044 = vmatpush1.msra.mxu0 0.0
    %1045 = vmatprep.subr.mxu0 0.0
    %1046 = vmatpush1.msra.mxu0 0.0
    %1047 = vmatprep.subr.mxu0 0.0
    %1048 = vmatpush1.msra.mxu0 0.0
    %1049 = vmatprep.subr.mxu0 0.0
    %1050 = vmatpush1.msra.mxu0 0.0
    %1051 = vmatprep.subr.mxu0 0.0
    %1052 = vmatpush1.msra.mxu0 0.0
    %1053 = vmatprep.subr.mxu0 0.0
    %1054 = vmatpush1.msra.mxu0 0.0
    %1055 = vmatprep.subr.mxu0 0.0
    %1056 = vmatpush1.msra.mxu0 0.0
    %1057 = vmatprep.subr.mxu0 0.0
    %1058 = vmatpush1.msra.mxu0 0.0
    %1059 = vmatprep.subr.mxu0 0.0
    %1060 = vmatpush1.msra.mxu0 0.0
    %1061 = vmatprep.subr.mxu0 0.0
    %1062 = vmatpush1.msra.mxu0 0.0
    %1063 = vmatprep.subr.mxu0 0.0
    %1064 = vmatpush1.msra.mxu0 0.0
    %1065 = vmatprep.mubr.f32.mxu0 0.0
    %1066 = vmatmul.mubr.f32.gmra.mrb[0].mxu0 %v991
    %v1067 = vpop.f32.mrb[0].mxu0
    %v1068 = vadd.f32 0.0, %v1067
    %v1069 = vpop.f32.mrb[0].mxu0
    %v1070 = vadd.f32 0.0, %v1069
    %1071 = vdwg.mxu0
    %1072 = vmatprep.subr.mxu0 %v413
    %1073 = vmatpush1.msra.mxu0 %v412
    %1074 = vmatprep.subr.mxu0 %v417
    %1075 = vmatpush1.msra.mxu0 %v416
    %1076 = vmatprep.subr.mxu0 %v421
    %1077 = vmatpush1.msra.mxu0 %v420
    %1078 = vmatprep.subr.mxu0 %v425
    %1079 = vmatpush1.msra.mxu0 %v424
    %1080 = vmatprep.subr.mxu0 %v429
    %1081 = vmatpush1.msra.mxu0 %v428
    %1082 = vmatprep.subr.mxu0 %v433
    %1083 = vmatpush1.msra.mxu0 %v432
    %1084 = vmatprep.subr.mxu0 %v437
    %1085 = vmatpush1.msra.mxu0 %v436
    %1086 = vmatprep.subr.mxu0 %v441
    %1087 = vmatpush1.msra.mxu0 %v440
    %1088 = vmatprep.subr.mxu0 %v445
    %1089 = vmatpush1.msra.mxu0 %v444
    %1090 = vmatprep.subr.mxu0 %v449
    %1091 = vmatpush1.msra.mxu0 %v448
    %1092 = vmatprep.subr.mxu0 %v453
    %1093 = vmatpush1.msra.mxu0 %v452
    %1094 = vmatprep.subr.mxu0 %v457
    %1095 = vmatpush1.msra.mxu0 %v456
    %1096 = vmatprep.subr.mxu0 %v461
    %1097 = vmatpush1.msra.mxu0 %v460
    %1098 = vmatprep.subr.mxu0 %v465
    %1099 = vmatpush1.msra.mxu0 %v464
    %1100 = vmatprep.subr.mxu0 %v469
    %1101 = vmatpush1.msra.mxu0 %v468
    %1102 = vmatprep.subr.mxu0 %v473
    %1103 = vmatpush1.msra.mxu0 %v472
    %1104 = vmatprep.subr.mxu0 0.0
    %1105 = vmatpush1.msra.mxu0 0.0
    %1106 = vmatprep.subr.mxu0 0.0
    %1107 = vmatpush1.msra.mxu0 0.0
    %1108 = vmatprep.subr.mxu0 0.0
    %1109 = vmatpush1.msra.mxu0 0.0
    %1110 = vmatprep.subr.mxu0 0.0
    %1111 = vmatpush1.msra.mxu0 0.0
    %1112 = vmatprep.subr.mxu0 0.0
    %1113 = vmatpush1.msra.mxu0 0.0
    %1114 = vmatprep.subr.mxu0 0.0
    %1115 = vmatpush1.msra.mxu0 0.0
    %1116 = vmatprep.subr.mxu0 0.0
    %1117 = vmatpush1.msra.mxu0 0.0
    %1118 = vmatprep.subr.mxu0 0.0
    %1119 = vmatpush1.msra.mxu0 0.0
    %1120 = vmatprep.subr.mxu0 0.0
    %1121 = vmatpush1.msra.mxu0 0.0
    %1122 = vmatprep.subr.mxu0 0.0
    %1123 = vmatpush1.msra.mxu0 0.0
    %1124 = vmatprep.subr.mxu0 0.0
    %1125 = vmatpush1.msra.mxu0 0.0
    %1126 = vmatprep.subr.mxu0 0.0
    %1127 = vmatpush1.msra.mxu0 0.0
    %1128 = vmatprep.subr.mxu0 0.0
    %1129 = vmatpush1.msra.mxu0 0.0
    %1130 = vmatprep.subr.mxu0 0.0
    %1131 = vmatpush1.msra.mxu0 0.0
    %1132 = vmatprep.subr.mxu0 0.0
    %1133 = vmatpush1.msra.mxu0 0.0
    %1134 = vmatprep.subr.mxu0 0.0
    %1135 = vmatpush1.msra.mxu0 0.0
    %1136 = vmatprep.mubr.f32.mxu0 0.0
    %1137 = vmatmul.mubr.f32.gmra.mrb[0].mxu0 %v991
    %v1138 = vpop.f32.mrb[0].mxu0
    %v1139 = vadd.f32 0.0, %v1138
    %v1140 = vpop.f32.mrb[0].mxu0
    %v1141 = vadd.f32 0.0, %v1140
    %1142 = vdwg.mxu0
    %v1143 = vadd.f32 %v997, %v1068
    %v1144 = vadd.f32 %v998, %v1070
    %v1145 = vadd.f32 %v999, %v1139
    %v1146 = vadd.f32 %v1000, %v1141
    %v1147 = vmul.f32 %v1143, 0.5
    %v1148 = vtanh.pop %v1147
    %v1149 = vmul.f32 %v1148, 0.5
    %v1150 = vadd.f32 %v1149, 0.5
    %v1151 = vmul.f32 %v1144, 0.5
    %v1152 = vtanh.pop %v1151
    %v1153 = vmul.f32 %v1152, 0.5
    %v1154 = vadd.f32 %v1153, 0.5
    %v1155 = vtanh.pop %v1145
    %v1156 = vmul.f32 %v1154, %v985
    %v1157 = vmul.f32 %v1150, %v1155
    %v1158 = vadd.f32 %v1156, %v1157
    %v1159 = vmul.f32 %v1146, 0.5
    %v1160 = vtanh.pop %v1159
    %v1161 = vmul.f32 %v1160, 0.5
    %v1162 = vadd.f32 %v1161, 0.5
    %v1163 = vtanh.pop %v1158
    %v1164 = vmul.f32 %v1162, %v1163
    %s1165 = scalar_lea.vmem [#allocation4], 24
    %1166 = vst [vmem:[%s1165] sm:$0xff] %v1164
    %s1167 = smul.u32 4, 4
    %s1168 = smul.addr %s1167, 8
    %s1169 = scalar_lea.vmem [#allocation5], %s1168
    %v1170 = vld [vmem:[%s1169] sm:$0xff]
    %v1171 = vld [vmem:[%s1169 + $0x8] sm:$0xff]
    %v1172 = vld [vmem:[%s1169 + $0x10] sm:$0xff]
    %v1173 = vld [vmem:[%s1169 + $0x18] sm:$0xff]
    %1174 = vmatprep.subr.mxu0 %v411
    %1175 = vmatpush1.msra.mxu0 %v410
    %1176 = vmatprep.subr.mxu0 %v415
    %1177 = vmatpush1.msra.mxu0 %v414
    %1178 = vmatprep.subr.mxu0 %v419
    %1179 = vmatpush1.msra.mxu0 %v418
    %1180 = vmatprep.subr.mxu0 %v423
    %1181 = vmatpush1.msra.mxu0 %v422
    %1182 = vmatprep.subr.mxu0 %v427
    %1183 = vmatpush1.msra.mxu0 %v426
    %1184 = vmatprep.subr.mxu0 %v431
    %1185 = vmatpush1.msra.mxu0 %v430
    %1186 = vmatprep.subr.mxu0 %v435
    %1187 = vmatpush1.msra.mxu0 %v434
    %1188 = vmatprep.subr.mxu0 %v439
    %1189 = vmatpush1.msra.mxu0 %v438
    %1190 = vmatprep.subr.mxu0 %v443
    %1191 = vmatpush1.msra.mxu0 %v442
    %1192 = vmatprep.subr.mxu0 %v447
    %1193 = vmatpush1.msra.mxu0 %v446
    %1194 = vmatprep.subr.mxu0 %v451
    %1195 = vmatpush1.msra.mxu0 %v450
    %1196 = vmatprep.subr.mxu0 %v455
    %1197 = vmatpush1.msra.mxu0 %v454
    %1198 = vmatprep.subr.mxu0 %v459
    %1199 = vmatpush1.msra.mxu0 %v458
    %1200 = vmatprep.subr.mxu0 %v463
    %1201 = vmatpush1.msra.mxu0 %v462
    %1202 = vmatprep.subr.mxu0 %v467
    %1203 = vmatpush1.msra.mxu0 %v466
    %1204 = vmatprep.subr.mxu0 %v471
    %1205 = vmatpush1.msra.mxu0 %v470
    %1206 = vmatprep.subr.mxu0 0.0
    %1207 = vmatpush1.msra.mxu0 0.0
    %1208 = vmatprep.subr.mxu0 0.0
    %1209 = vmatpush1.msra.mxu0 0.0
    %1210 = vmatprep.subr.mxu0 0.0
    %1211 = vmatpush1.msra.mxu0 0.0
    %1212 = vmatprep.subr.mxu0 0.0
    %1213 = vmatpush1.msra.mxu0 0.0
    %1214 = vmatprep.subr.mxu0 0.0
    %1215 = vmatpush1.msra.mxu0 0.0
    %1216 = vmatprep.subr.mxu0 0.0
    %1217 = vmatpush1.msra.mxu0 0.0
    %1218 = vmatprep.subr.mxu0 0.0
    %1219 = vmatpush1.msra.mxu0 0.0
    %1220 = vmatprep.subr.mxu0 0.0
    %1221 = vmatpush1.msra.mxu0 0.0
    %1222 = vmatprep.subr.mxu0 0.0
    %1223 = vmatpush1.msra.mxu0 0.0
    %1224 = vmatprep.subr.mxu0 0.0
    %1225 = vmatpush1.msra.mxu0 0.0
    %1226 = vmatprep.subr.mxu0 0.0
    %1227 = vmatpush1.msra.mxu0 0.0
    %1228 = vmatprep.subr.mxu0 0.0
    %1229 = vmatpush1.msra.mxu0 0.0
    %1230 = vmatprep.subr.mxu0 0.0
    %1231 = vmatpush1.msra.mxu0 0.0
    %1232 = vmatprep.subr.mxu0 0.0
    %1233 = vmatpush1.msra.mxu0 0.0
    %1234 = vmatprep.subr.mxu0 0.0
    %1235 = vmatpush1.msra.mxu0 0.0
    %1236 = vmatprep.subr.mxu0 0.0
    %1237 = vmatpush1.msra.mxu0 0.0
    %1238 = vmatprep.mubr.f32.mxu0 0.0
    %1239 = vmatmul.mubr.f32.gmra.mrb[0].mxu0 %v1164
    %v1240 = vpop.f32.mrb[0].mxu0
    %v1241 = vadd.f32 0.0, %v1240
    %v1242 = vpop.f32.mrb[0].mxu0
    %v1243 = vadd.f32 0.0, %v1242
    %1244 = vdwg.mxu0
    %1245 = vmatprep.subr.mxu0 %v413
    %1246 = vmatpush1.msra.mxu0 %v412
    %1247 = vmatprep.subr.mxu0 %v417
    %1248 = vmatpush1.msra.mxu0 %v416
    %1249 = vmatprep.subr.mxu0 %v421
    %1250 = vmatpush1.msra.mxu0 %v420
    %1251 = vmatprep.subr.mxu0 %v425
    %1252 = vmatpush1.msra.mxu0 %v424
    %1253 = vmatprep.subr.mxu0 %v429
    %1254 = vmatpush1.msra.mxu0 %v428
    %1255 = vmatprep.subr.mxu0 %v433
    %1256 = vmatpush1.msra.mxu0 %v432
    %1257 = vmatprep.subr.mxu0 %v437
    %1258 = vmatpush1.msra.mxu0 %v436
    %1259 = vmatprep.subr.mxu0 %v441
    %1260 = vmatpush1.msra.mxu0 %v440
    %1261 = vmatprep.subr.mxu0 %v445
    %1262 = vmatpush1.msra.mxu0 %v444
    %1263 = vmatprep.subr.mxu0 %v449
    %1264 = vmatpush1.msra.mxu0 %v448
    %1265 = vmatprep.subr.mxu0 %v453
    %1266 = vmatpush1.msra.mxu0 %v452
    %1267 = vmatprep.subr.mxu0 %v457
    %1268 = vmatpush1.msra.mxu0 %v456
    %1269 = vmatprep.subr.mxu0 %v461
    %1270 = vmatpush1.msra.mxu0 %v460
    %1271 = vmatprep.subr.mxu0 %v465
    %1272 = vmatpush1.msra.mxu0 %v464
    %1273 = vmatprep.subr.mxu0 %v469
    %1274 = vmatpush1.msra.mxu0 %v468
    %1275 = vmatprep.subr.mxu0 %v473
    %1276 = vmatpush1.msra.mxu0 %v472
    %1277 = vmatprep.subr.mxu0 0.0
    %1278 = vmatpush1.msra.mxu0 0.0
    %1279 = vmatprep.subr.mxu0 0.0
    %1280 = vmatpush1.msra.mxu0 0.0
    %1281 = vmatprep.subr.mxu0 0.0
    %1282 = vmatpush1.msra.mxu0 0.0
    %1283 = vmatprep.subr.mxu0 0.0
    %1284 = vmatpush1.msra.mxu0 0.0
    %1285 = vmatprep.subr.mxu0 0.0
    %1286 = vmatpush1.msra.mxu0 0.0
    %1287 = vmatprep.subr.mxu0 0.0
    %1288 = vmatpush1.msra.mxu0 0.0
    %1289 = vmatprep.subr.mxu0 0.0
    %1290 = vmatpush1.msra.mxu0 0.0
    %1291 = vmatprep.subr.mxu0 0.0
    %1292 = vmatpush1.msra.mxu0 0.0
    %1293 = vmatprep.subr.mxu0 0.0
    %1294 = vmatpush1.msra.mxu0 0.0
    %1295 = vmatprep.subr.mxu0 0.0
    %1296 = vmatpush1.msra.mxu0 0.0
    %1297 = vmatprep.subr.mxu0 0.0
    %1298 = vmatpush1.msra.mxu0 0.0
    %1299 = vmatprep.subr.mxu0 0.0
    %1300 = vmatpush1.msra.mxu0 0.0
    %1301 = vmatprep.subr.mxu0 0.0
    %1302 = vmatpush1.msra.mxu0 0.0
    %1303 = vmatprep.subr.mxu0 0.0
    %1304 = vmatpush1.msra.mxu0 0.0
    %1305 = vmatprep.subr.mxu0 0.0
    %1306 = vmatpush1.msra.mxu0 0.0
    %1307 = vmatprep.subr.mxu0 0.0
    %1308 = vmatpush1.msra.mxu0 0.0
    %1309 = vmatprep.mubr.f32.mxu0 0.0
    %1310 = vmatmul.mubr.f32.gmra.mrb[0].mxu0 %v1164
    %v1311 = vpop.f32.mrb[0].mxu0
    %v1312 = vadd.f32 0.0, %v1311
    %v1313 = vpop.f32.mrb[0].mxu0
    %v1314 = vadd.f32 0.0, %v1313
    %1315 = vdwg.mxu0
    %v1316 = vadd.f32 %v1170, %v1241
    %v1317 = vadd.f32 %v1171, %v1243
    %v1318 = vadd.f32 %v1172, %v1312
    %v1319 = vadd.f32 %v1173, %v1314
    %v1320 = vmul.f32 %v1316, 0.5
    %v1321 = vtanh.pop %v1320
    %v1322 = vmul.f32 %v1321, 0.5
    %v1323 = vadd.f32 %v1322, 0.5
    %v1324 = vmul.f32 %v1317, 0.5
    %v1325 = vtanh.pop %v1324
    %v1326 = vmul.f32 %v1325, 0.5
    %v1327 = vadd.f32 %v1326, 0.5
    %v1328 = vtanh.pop %v1318
    %v1329 = vmul.f32 %v1327, %v1158
    %v1330 = vmul.f32 %v1323, %v1328
    %v1331 = vadd.f32 %v1329, %v1330
    %v1332 = vmul.f32 %v1319, 0.5
    %v1333 = vtanh.pop %v1332
    %v1334 = vmul.f32 %v1333, 0.5
    %v1335 = vadd.f32 %v1334, 0.5
    %v1336 = vtanh.pop %v1331
    %v1337 = vmul.f32 %v1335, %v1336
    %s1338 = scalar_lea.vmem [#allocation4], 32
    %1339 = vst [vmem:[%s1338] sm:$0xff] %v1337
    %s1340 = smul.u32 5, 4
    %s1341 = smul.addr %s1340, 8
    %s1342 = scalar_lea.vmem [#allocation5], %s1341
    %v1343 = vld [vmem:[%s1342] sm:$0xff]
    %v1344 = vld [vmem:[%s1342 + $0x8] sm:$0xff]
    %v1345 = vld [vmem:[%s1342 + $0x10] sm:$0xff]
    %v1346 = vld [vmem:[%s1342 + $0x18] sm:$0xff]
    %1347 = vmatprep.subr.mxu0 %v411
    %1348 = vmatpush1.msra.mxu0 %v410
    %1349 = vmatprep.subr.mxu0 %v415
    %1350 = vmatpush1.msra.mxu0 %v414
    %1351 = vmatprep.subr.mxu0 %v419
    %1352 = vmatpush1.msra.mxu0 %v418
    %1353 = vmatprep.subr.mxu0 %v423
    %1354 = vmatpush1.msra.mxu0 %v422
    %1355 = vmatprep.subr.mxu0 %v427
    %1356 = vmatpush1.msra.mxu0 %v426
    %1357 = vmatprep.subr.mxu0 %v431
    %1358 = vmatpush1.msra.mxu0 %v430
    %1359 = vmatprep.subr.mxu0 %v435
    %1360 = vmatpush1.msra.mxu0 %v434
    %1361 = vmatprep.subr.mxu0 %v439
    %1362 = vmatpush1.msra.mxu0 %v438
    %1363 = vmatprep.subr.mxu0 %v443
    %1364 = vmatpush1.msra.mxu0 %v442
    %1365 = vmatprep.subr.mxu0 %v447
    %1366 = vmatpush1.msra.mxu0 %v446
    %1367 = vmatprep.subr.mxu0 %v451
    %1368 = vmatpush1.msra.mxu0 %v450
    %1369 = vmatprep.subr.mxu0 %v455
    %1370 = vmatpush1.msra.mxu0 %v454
    %1371 = vmatprep.subr.mxu0 %v459
    %1372 = vmatpush1.msra.mxu0 %v458
    %1373 = vmatprep.subr.mxu0 %v463
    %1374 = vmatpush1.msra.mxu0 %v462
    %1375 = vmatprep.subr.mxu0 %v467
    %1376 = vmatpush1.msra.mxu0 %v466
    %1377 = vmatprep.subr.mxu0 %v471
    %1378 = vmatpush1.msra.mxu0 %v470
    %1379 = vmatprep.subr.mxu0 0.0
    %1380 = vmatpush1.msra.mxu0 0.0
    %1381 = vmatprep.subr.mxu0 0.0
    %1382 = vmatpush1.msra.mxu0 0.0
    %1383 = vmatprep.subr.mxu0 0.0
    %1384 = vmatpush1.msra.mxu0 0.0
    %1385 = vmatprep.subr.mxu0 0.0
    %1386 = vmatpush1.msra.mxu0 0.0
    %1387 = vmatprep.subr.mxu0 0.0
    %1388 = vmatpush1.msra.mxu0 0.0
    %1389 = vmatprep.subr.mxu0 0.0
    %1390 = vmatpush1.msra.mxu0 0.0
    %1391 = vmatprep.subr.mxu0 0.0
    %1392 = vmatpush1.msra.mxu0 0.0
    %1393 = vmatprep.subr.mxu0 0.0
    %1394 = vmatpush1.msra.mxu0 0.0
    %1395 = vmatprep.subr.mxu0 0.0
    %1396 = vmatpush1.msra.mxu0 0.0
    %1397 = vmatprep.subr.mxu0 0.0
    %1398 = vmatpush1.msra.mxu0 0.0
    %1399 = vmatprep.subr.mxu0 0.0
    %1400 = vmatpush1.msra.mxu0 0.0
    %1401 = vmatprep.subr.mxu0 0.0
    %1402 = vmatpush1.msra.mxu0 0.0
    %1403 = vmatprep.subr.mxu0 0.0
    %1404 = vmatpush1.msra.mxu0 0.0
    %1405 = vmatprep.subr.mxu0 0.0
    %1406 = vmatpush1.msra.mxu0 0.0
    %1407 = vmatprep.subr.mxu0 0.0
    %1408 = vmatpush1.msra.mxu0 0.0
    %1409 = vmatprep.subr.mxu0 0.0
    %1410 = vmatpush1.msra.mxu0 0.0
    %1411 = vmatprep.mubr.f32.mxu0 0.0
    %1412 = vmatmul.mubr.f32.gmra.mrb[0].mxu0 %v1337
    %v1413 = vpop.f32.mrb[0].mxu0
    %v1414 = vadd.f32 0.0, %v1413
    %v1415 = vpop.f32.mrb[0].mxu0
    %v1416 = vadd.f32 0.0, %v1415
    %1417 = vdwg.mxu0
    %1418 = vmatprep.subr.mxu0 %v413
    %1419 = vmatpush1.msra.mxu0 %v412
    %1420 = vmatprep.subr.mxu0 %v417
    %1421 = vmatpush1.msra.mxu0 %v416
    %1422 = vmatprep.subr.mxu0 %v421
    %1423 = vmatpush1.msra.mxu0 %v420
    %1424 = vmatprep.subr.mxu0 %v425
    %1425 = vmatpush1.msra.mxu0 %v424
    %1426 = vmatprep.subr.mxu0 %v429
    %1427 = vmatpush1.msra.mxu0 %v428
    %1428 = vmatprep.subr.mxu0 %v433
    %1429 = vmatpush1.msra.mxu0 %v432
    %1430 = vmatprep.subr.mxu0 %v437
    %1431 = vmatpush1.msra.mxu0 %v436
    %1432 = vmatprep.subr.mxu0 %v441
    %1433 = vmatpush1.msra.mxu0 %v440
    %1434 = vmatprep.subr.mxu0 %v445
    %1435 = vmatpush1.msra.mxu0 %v444
    %1436 = vmatprep.subr.mxu0 %v449
    %1437 = vmatpush1.msra.mxu0 %v448
    %1438 = vmatprep.subr.mxu0 %v453
    %1439 = vmatpush1.msra.mxu0 %v452
    %1440 = vmatprep.subr.mxu0 %v457
    %1441 = vmatpush1.msra.mxu0 %v456
    %1442 = vmatprep.subr.mxu0 %v461
    %1443 = vmatpush1.msra.mxu0 %v460
    %1444 = vmatprep.subr.mxu0 %v465
    %1445 = vmatpush1.msra.mxu0 %v464
    %1446 = vmatprep.subr.mxu0 %v469
    %1447 = vmatpush1.msra.mxu0 %v468
    %1448 = vmatprep.subr.mxu0 %v473
    %1449 = vmatpush1.msra.mxu0 %v472
    %1450 = vmatprep.subr.mxu0 0.0
    %1451 = vmatpush1.msra.mxu0 0.0
    %1452 = vmatprep.subr.mxu0 0.0
    %1453 = vmatpush1.msra.mxu0 0.0
    %1454 = vmatprep.subr.mxu0 0.0
    %1455 = vmatpush1.msra.mxu0 0.0
    %1456 = vmatprep.subr.mxu0 0.0
    %1457 = vmatpush1.msra.mxu0 0.0
    %1458 = vmatprep.subr.mxu0 0.0
    %1459 = vmatpush1.msra.mxu0 0.0
    %1460 = vmatprep.subr.mxu0 0.0
    %1461 = vmatpush1.msra.mxu0 0.0
    %1462 = vmatprep.subr.mxu0 0.0
    %1463 = vmatpush1.msra.mxu0 0.0
    %1464 = vmatprep.subr.mxu0 0.0
    %1465 = vmatpush1.msra.mxu0 0.0
    %1466 = vmatprep.subr.mxu0 0.0
    %1467 = vmatpush1.msra.mxu0 0.0
    %1468 = vmatprep.subr.mxu0 0.0
    %1469 = vmatpush1.msra.mxu0 0.0
    %1470 = vmatprep.subr.mxu0 0.0
    %1471 = vmatpush1.msra.mxu0 0.0
    %1472 = vmatprep.subr.mxu0 0.0
    %1473 = vmatpush1.msra.mxu0 0.0
    %1474 = vmatprep.subr.mxu0 0.0
    %1475 = vmatpush1.msra.mxu0 0.0
    %1476 = vmatprep.subr.mxu0 0.0
    %1477 = vmatpush1.msra.mxu0 0.0
    %1478 = vmatprep.subr.mxu0 0.0
    %1479 = vmatpush1.msra.mxu0 0.0
    %1480 = vmatprep.subr.mxu0 0.0
    %1481 = vmatpush1.msra.mxu0 0.0
    %1482 = vmatprep.mubr.f32.mxu0 0.0
    %1483 = vmatmul.mubr.f32.gmra.mrb[0].mxu0 %v1337
    %v1484 = vpop.f32.mrb[0].mxu0
    %v1485 = vadd.f32 0.0, %v1484
    %v1486 = vpop.f32.mrb[0].mxu0
    %v1487 = vadd.f32 0.0, %v1486
    %1488 = vdwg.mxu0
    %v1489 = vadd.f32 %v1343, %v1414
    %v1490 = vadd.f32 %v1344, %v1416
    %v1491 = vadd.f32 %v1345, %v1485
    %v1492 = vadd.f32 %v1346, %v1487
    %v1493 = vmul.f32 %v1489, 0.5
    %v1494 = vtanh.pop %v1493
    %v1495 = vmul.f32 %v1494, 0.5
    %v1496 = vadd.f32 %v1495, 0.5
    %v1497 = vmul.f32 %v1490, 0.5
    %v1498 = vtanh.pop %v1497
    %v1499 = vmul.f32 %v1498, 0.5
    %v1500 = vadd.f32 %v1499, 0.5
    %v1501 = vtanh.pop %v1491
    %v1502 = vmul.f32 %v1500, %v1331
    %v1503 = vmul.f32 %v1496, %v1501
    %v1504 = vadd.f32 %v1502, %v1503
    %v1505 = vmul.f32 %v1492, 0.5
    %v1506 = vtanh.pop %v1505
    %v1507 = vmul.f32 %v1506, 0.5
    %v1508 = vadd.f32 %v1507, 0.5
    %v1509 = vtanh.pop %v1504
    %v1510 = vmul.f32 %v1508, %v1509
    %s1511 = scalar_lea.vmem [#allocation4], 40
    %1512 = vst [vmem:[%s1511] sm:$0xff] %v1510
    %s1513 = smul.u32 6, 4
    %s1514 = smul.addr %s1513, 8
    %s1515 = scalar_lea.vmem [#allocation5], %s1514
    %v1516 = vld [vmem:[%s1515] sm:$0xff]
    %v1517 = vld [vmem:[%s1515 + $0x8] sm:$0xff]
    %v1518 = vld [vmem:[%s1515 + $0x10] sm:$0xff]
    %v1519 = vld [vmem:[%s1515 + $0x18] sm:$0xff]
    %1520 = vmatprep.subr.mxu0 %v411
    %1521 = vmatpush1.msra.mxu0 %v410
    %1522 = vmatprep.subr.mxu0 %v415
    %1523 = vmatpush1.msra.mxu0 %v414
    %1524 = vmatprep.subr.mxu0 %v419
    %1525 = vmatpush1.msra.mxu0 %v418
    %1526 = vmatprep.subr.mxu0 %v423
    %1527 = vmatpush1.msra.mxu0 %v422
    %1528 = vmatprep.subr.mxu0 %v427
    %1529 = vmatpush1.msra.mxu0 %v426
    %1530 = vmatprep.subr.mxu0 %v431
    %1531 = vmatpush1.msra.mxu0 %v430
    %1532 = vmatprep.subr.mxu0 %v435
    %1533 = vmatpush1.msra.mxu0 %v434
    %1534 = vmatprep.subr.mxu0 %v439
    %1535 = vmatpush1.msra.mxu0 %v438
    %1536 = vmatprep.subr.mxu0 %v443
    %1537 = vmatpush1.msra.mxu0 %v442
    %1538 = vmatprep.subr.mxu0 %v447
    %1539 = vmatpush1.msra.mxu0 %v446
    %1540 = vmatprep.subr.mxu0 %v451
    %1541 = vmatpush1.msra.mxu0 %v450
    %1542 = vmatprep.subr.mxu0 %v455
    %1543 = vmatpush1.msra.mxu0 %v454
    %1544 = vmatprep.subr.mxu0 %v459
    %1545 = vmatpush1.msra.mxu0 %v458
    %1546 = vmatprep.subr.mxu0 %v463
    %1547 = vmatpush1.msra.mxu0 %v462
    %1548 = vmatprep.subr.mxu0 %v467
    %1549 = vmatpush1.msra.mxu0 %v466
    %1550 = vmatprep.subr.mxu0 %v471
    %1551 = vmatpush1.msra.mxu0 %v470
    %1552 = vmatprep.subr.mxu0 0.0
    %1553 = vmatpush1.msra.mxu0 0.0
    %1554 = vmatprep.subr.mxu0 0.0
    %1555 = vmatpush1.msra.mxu0 0.0
    %1556 = vmatprep.subr.mxu0 0.0
    %1557 = vmatpush1.msra.mxu0 0.0
    %1558 = vmatprep.subr.mxu0 0.0
    %1559 = vmatpush1.msra.mxu0 0.0
    %1560 = vmatprep.subr.mxu0 0.0
    %1561 = vmatpush1.msra.mxu0 0.0
    %1562 = vmatprep.subr.mxu0 0.0
    %1563 = vmatpush1.msra.mxu0 0.0
    %1564 = vmatprep.subr.mxu0 0.0
    %1565 = vmatpush1.msra.mxu0 0.0
    %1566 = vmatprep.subr.mxu0 0.0
    %1567 = vmatpush1.msra.mxu0 0.0
    %1568 = vmatprep.subr.mxu0 0.0
    %1569 = vmatpush1.msra.mxu0 0.0
    %1570 = vmatprep.subr.mxu0 0.0
    %1571 = vmatpush1.msra.mxu0 0.0
    %1572 = vmatprep.subr.mxu0 0.0
    %1573 = vmatpush1.msra.mxu0 0.0
    %1574 = vmatprep.subr.mxu0 0.0
    %1575 = vmatpush1.msra.mxu0 0.0
    %1576 = vmatprep.subr.mxu0 0.0
    %1577 = vmatpush1.msra.mxu0 0.0
    %1578 = vmatprep.subr.mxu0 0.0
    %1579 = vmatpush1.msra.mxu0 0.0
    %1580 = vmatprep.subr.mxu0 0.0
    %1581 = vmatpush1.msra.mxu0 0.0
    %1582 = vmatprep.subr.mxu0 0.0
    %1583 = vmatpush1.msra.mxu0 0.0
    %1584 = vmatprep.mubr.f32.mxu0 0.0
    %1585 = vmatmul.mubr.f32.gmra.mrb[0].mxu0 %v1510
    %v1586 = vpop.f32.mrb[0].mxu0
    %v1587 = vadd.f32 0.0, %v1586
    %v1588 = vpop.f32.mrb[0].mxu0
    %v1589 = vadd.f32 0.0, %v1588
    %1590 = vdwg.mxu0
    %1591 = vmatprep.subr.mxu0 %v413
    %1592 = vmatpush1.msra.mxu0 %v412
    %1593 = vmatprep.subr.mxu0 %v417
    %1594 = vmatpush1.msra.mxu0 %v416
    %1595 = vmatprep.subr.mxu0 %v421
    %1596 = vmatpush1.msra.mxu0 %v420
    %1597 = vmatprep.subr.mxu0 %v425
    %1598 = vmatpush1.msra.mxu0 %v424
    %1599 = vmatprep.subr.mxu0 %v429
    %1600 = vmatpush1.msra.mxu0 %v428
    %1601 = vmatprep.subr.mxu0 %v433
    %1602 = vmatpush1.msra.mxu0 %v432
    %1603 = vmatprep.subr.mxu0 %v437
    %1604 = vmatpush1.msra.mxu0 %v436
    %1605 = vmatprep.subr.mxu0 %v441
    %1606 = vmatpush1.msra.mxu0 %v440
    %1607 = vmatprep.subr.mxu0 %v445
    %1608 = vmatpush1.msra.mxu0 %v444
    %1609 = vmatprep.subr.mxu0 %v449
    %1610 = vmatpush1.msra.mxu0 %v448
    %1611 = vmatprep.subr.mxu0 %v453
    %1612 = vmatpush1.msra.mxu0 %v452
    %1613 = vmatprep.subr.mxu0 %v457
    %1614 = vmatpush1.msra.mxu0 %v456
    %1615 = vmatprep.subr.mxu0 %v461
    %1616 = vmatpush1.msra.mxu0 %v460
    %1617 = vmatprep.subr.mxu0 %v465
    %1618 = vmatpush1.msra.mxu0 %v464
    %1619 = vmatprep.subr.mxu0 %v469
    %1620 = vmatpush1.msra.mxu0 %v468
    %1621 = vmatprep.subr.mxu0 %v473
    %1622 = vmatpush1.msra.mxu0 %v472
    %1623 = vmatprep.subr.mxu0 0.0
    %1624 = vmatpush1.msra.mxu0 0.0
    %1625 = vmatprep.subr.mxu0 0.0
    %1626 = vmatpush1.msra.mxu0 0.0
    %1627 = vmatprep.subr.mxu0 0.0
    %1628 = vmatpush1.msra.mxu0 0.0
    %1629 = vmatprep.subr.mxu0 0.0
    %1630 = vmatpush1.msra.mxu0 0.0
    %1631 = vmatprep.subr.mxu0 0.0
    %1632 = vmatpush1.msra.mxu0 0.0
    %1633 = vmatprep.subr.mxu0 0.0
    %1634 = vmatpush1.msra.mxu0 0.0
    %1635 = vmatprep.subr.mxu0 0.0
    %1636 = vmatpush1.msra.mxu0 0.0
    %1637 = vmatprep.subr.mxu0 0.0
    %1638 = vmatpush1.msra.mxu0 0.0
    %1639 = vmatprep.subr.mxu0 0.0
    %1640 = vmatpush1.msra.mxu0 0.0
    %1641 = vmatprep.subr.mxu0 0.0
    %1642 = vmatpush1.msra.mxu0 0.0
    %1643 = vmatprep.subr.mxu0 0.0
    %1644 = vmatpush1.msra.mxu0 0.0
    %1645 = vmatprep.subr.mxu0 0.0
    %1646 = vmatpush1.msra.mxu0 0.0
    %1647 = vmatprep.subr.mxu0 0.0
    %1648 = vmatpush1.msra.mxu0 0.0
    %1649 = vmatprep.subr.mxu0 0.0
    %1650 = vmatpush1.msra.mxu0 0.0
    %1651 = vmatprep.subr.mxu0 0.0
    %1652 = vmatpush1.msra.mxu0 0.0
    %1653 = vmatprep.subr.mxu0 0.0
    %1654 = vmatpush1.msra.mxu0 0.0
    %1655 = vmatprep.mubr.f32.mxu0 0.0
    %1656 = vmatmul.mubr.f32.gmra.mrb[0].mxu0 %v1510
    %v1657 = vpop.f32.mrb[0].mxu0
    %v1658 = vadd.f32 0.0, %v1657
    %v1659 = vpop.f32.mrb[0].mxu0
    %v1660 = vadd.f32 0.0, %v1659
    %1661 = vdwg.mxu0
    %v1662 = vadd.f32 %v1516, %v1587
    %v1663 = vadd.f32 %v1517, %v1589
    %v1664 = vadd.f32 %v1518, %v1658
    %v1665 = vadd.f32 %v1519, %v1660
    %v1666 = vmul.f32 %v1662, 0.5
    %v1667 = vtanh.pop %v1666
    %v1668 = vmul.f32 %v1667, 0.5
    %v1669 = vadd.f32 %v1668, 0.5
    %v1670 = vmul.f32 %v1663, 0.5
    %v1671 = vtanh.pop %v1670
    %v1672 = vmul.f32 %v1671, 0.5
    %v1673 = vadd.f32 %v1672, 0.5
    %v1674 = vtanh.pop %v1664
    %v1675 = vmul.f32 %v1673, %v1504
    %v1676 = vmul.f32 %v1669, %v1674
    %v1677 = vadd.f32 %v1675, %v1676
    %v1678 = vmul.f32 %v1665, 0.5
    %v1679 = vtanh.pop %v1678
    %v1680 = vmul.f32 %v1679, 0.5
    %v1681 = vadd.f32 %v1680, 0.5
    %v1682 = vtanh.pop %v1677
    %v1683 = vmul.f32 %v1681, %v1682
    %s1684 = scalar_lea.vmem [#allocation4], 48
    %1685 = vst [vmem:[%s1684] sm:$0xff] %v1683
    %s1686 = smul.u32 7, 4
    %s1687 = smul.addr %s1686, 8
    %s1688 = scalar_lea.vmem [#allocation5], %s1687
    %v1689 = vld [vmem:[%s1688] sm:$0xff]
    %v1690 = vld [vmem:[%s1688 + $0x8] sm:$0xff]
    %v1691 = vld [vmem:[%s1688 + $0x10] sm:$0xff]
    %v1692 = vld [vmem:[%s1688 + $0x18] sm:$0xff]
    %1693 = vmatprep.subr.mxu0 %v411
    %1694 = vmatpush1.msra.mxu0 %v410
    %1695 = vmatprep.subr.mxu0 %v415
    %1696 = vmatpush1.msra.mxu0 %v414
    %1697 = vmatprep.subr.mxu0 %v419
    %1698 = vmatpush1.msra.mxu0 %v418
    %1699 = vmatprep.subr.mxu0 %v423
    %1700 = vmatpush1.msra.mxu0 %v422
    %1701 = vmatprep.subr.mxu0 %v427
    %1702 = vmatpush1.msra.mxu0 %v426
    %1703 = vmatprep.subr.mxu0 %v431
    %1704 = vmatpush1.msra.mxu0 %v430
    %1705 = vmatprep.subr.mxu0 %v435
    %1706 = vmatpush1.msra.mxu0 %v434
    %1707 = vmatprep.subr.mxu0 %v439
    %1708 = vmatpush1.msra.mxu0 %v438
    %1709 = vmatprep.subr.mxu0 %v443
    %1710 = vmatpush1.msra.mxu0 %v442
    %1711 = vmatprep.subr.mxu0 %v447
    %1712 = vmatpush1.msra.mxu0 %v446
    %1713 = vmatprep.subr.mxu0 %v451
    %1714 = vmatpush1.msra.mxu0 %v450
    %1715 = vmatprep.subr.mxu0 %v455
    %1716 = vmatpush1.msra.mxu0 %v454
    %1717 = vmatprep.subr.mxu0 %v459
    %1718 = vmatpush1.msra.mxu0 %v458
    %1719 = vmatprep.subr.mxu0 %v463
    %1720 = vmatpush1.msra.mxu0 %v462
    %1721 = vmatprep.subr.mxu0 %v467
    %1722 = vmatpush1.msra.mxu0 %v466
    %1723 = vmatprep.subr.mxu0 %v471
    %1724 = vmatpush1.msra.mxu0 %v470
    %1725 = vmatprep.subr.mxu0 0.0
    %1726 = vmatpush1.msra.mxu0 0.0
    %1727 = vmatprep.subr.mxu0 0.0
    %1728 = vmatpush1.msra.mxu0 0.0
    %1729 = vmatprep.subr.mxu0 0.0
    %1730 = vmatpush1.msra.mxu0 0.0
    %1731 = vmatprep.subr.mxu0 0.0
    %1732 = vmatpush1.msra.mxu0 0.0
    %1733 = vmatprep.subr.mxu0 0.0
    %1734 = vmatpush1.msra.mxu0 0.0
    %1735 = vmatprep.subr.mxu0 0.0
    %1736 = vmatpush1.msra.mxu0 0.0
    %1737 = vmatprep.subr.mxu0 0.0
    %1738 = vmatpush1.msra.mxu0 0.0
    %1739 = vmatprep.subr.mxu0 0.0
    %1740 = vmatpush1.msra.mxu0 0.0
    %1741 = vmatprep.subr.mxu0 0.0
    %1742 = vmatpush1.msra.mxu0 0.0
    %1743 = vmatprep.subr.mxu0 0.0
    %1744 = vmatpush1.msra.mxu0 0.0
    %1745 = vmatprep.subr.mxu0 0.0
    %1746 = vmatpush1.msra.mxu0 0.0
    %1747 = vmatprep.subr.mxu0 0.0
    %1748 = vmatpush1.msra.mxu0 0.0
    %1749 = vmatprep.subr.mxu0 0.0
    %1750 = vmatpush1.msra.mxu0 0.0
    %1751 = vmatprep.subr.mxu0 0.0
    %1752 = vmatpush1.msra.mxu0 0.0
    %1753 = vmatprep.subr.mxu0 0.0
    %1754 = vmatpush1.msra.mxu0 0.0
    %1755 = vmatprep.subr.mxu0 0.0
    %1756 = vmatpush1.msra.mxu0 0.0
    %1757 = vmatprep.mubr.f32.mxu0 0.0
    %1758 = vmatmul.mubr.f32.gmra.mrb[0].mxu0 %v1683
    %v1759 = vpop.f32.mrb[0].mxu0
    %v1760 = vadd.f32 0.0, %v1759
    %v1761 = vpop.f32.mrb[0].mxu0
    %v1762 = vadd.f32 0.0, %v1761
    %1763 = vdwg.mxu0
    %1764 = vmatprep.subr.mxu0 %v413
    %1765 = vmatpush1.msra.mxu0 %v412
    %1766 = vmatprep.subr.mxu0 %v417
    %1767 = vmatpush1.msra.mxu0 %v416
    %1768 = vmatprep.subr.mxu0 %v421
    %1769 = vmatpush1.msra.mxu0 %v420
    %1770 = vmatprep.subr.mxu0 %v425
    %1771 = vmatpush1.msra.mxu0 %v424
    %1772 = vmatprep.subr.mxu0 %v429
    %1773 = vmatpush1.msra.mxu0 %v428
    %1774 = vmatprep.subr.mxu0 %v433
    %1775 = vmatpush1.msra.mxu0 %v432
    %1776 = vmatprep.subr.mxu0 %v437
    %1777 = vmatpush1.msra.mxu0 %v436
    %1778 = vmatprep.subr.mxu0 %v441
    %1779 = vmatpush1.msra.mxu0 %v440
    %1780 = vmatprep.subr.mxu0 %v445
    %1781 = vmatpush1.msra.mxu0 %v444
    %1782 = vmatprep.subr.mxu0 %v449
    %1783 = vmatpush1.msra.mxu0 %v448
    %1784 = vmatprep.subr.mxu0 %v453
    %1785 = vmatpush1.msra.mxu0 %v452
    %1786 = vmatprep.subr.mxu0 %v457
    %1787 = vmatpush1.msra.mxu0 %v456
    %1788 = vmatprep.subr.mxu0 %v461
    %1789 = vmatpush1.msra.mxu0 %v460
    %1790 = vmatprep.subr.mxu0 %v465
    %1791 = vmatpush1.msra.mxu0 %v464
    %1792 = vmatprep.subr.mxu0 %v469
    %1793 = vmatpush1.msra.mxu0 %v468
    %1794 = vmatprep.subr.mxu0 %v473
    %1795 = vmatpush1.msra.mxu0 %v472
    %1796 = vmatprep.subr.mxu0 0.0
    %1797 = vmatpush1.msra.mxu0 0.0
    %1798 = vmatprep.subr.mxu0 0.0
    %1799 = vmatpush1.msra.mxu0 0.0
    %1800 = vmatprep.subr.mxu0 0.0
    %1801 = vmatpush1.msra.mxu0 0.0
    %1802 = vmatprep.subr.mxu0 0.0
    %1803 = vmatpush1.msra.mxu0 0.0
    %1804 = vmatprep.subr.mxu0 0.0
    %1805 = vmatpush1.msra.mxu0 0.0
    %1806 = vmatprep.subr.mxu0 0.0
    %1807 = vmatpush1.msra.mxu0 0.0
    %1808 = vmatprep.subr.mxu0 0.0
    %1809 = vmatpush1.msra.mxu0 0.0
    %1810 = vmatprep.subr.mxu0 0.0
    %1811 = vmatpush1.msra.mxu0 0.0
    %1812 = vmatprep.subr.mxu0 0.0
    %1813 = vmatpush1.msra.mxu0 0.0
    %1814 = vmatprep.subr.mxu0 0.0
    %1815 = vmatpush1.msra.mxu0 0.0
    %1816 = vmatprep.subr.mxu0 0.0
    %1817 = vmatpush1.msra.mxu0 0.0
    %1818 = vmatprep.subr.mxu0 0.0
    %1819 = vmatpush1.msra.mxu0 0.0
    %1820 = vmatprep.subr.mxu0 0.0
    %1821 = vmatpush1.msra.mxu0 0.0
    %1822 = vmatprep.subr.mxu0 0.0
    %1823 = vmatpush1.msra.mxu0 0.0
    %1824 = vmatprep.subr.mxu0 0.0
    %1825 = vmatpush1.msra.mxu0 0.0
    %1826 = vmatprep.subr.mxu0 0.0
    %1827 = vmatpush1.msra.mxu0 0.0
    %1828 = vmatprep.mubr.f32.mxu0 0.0
    %1829 = vmatmul.mubr.f32.gmra.mrb[0].mxu0 %v1683
    %v1830 = vpop.f32.mrb[0].mxu0
    %v1831 = vadd.f32 0.0, %v1830
    %v1832 = vpop.f32.mrb[0].mxu0
    %v1833 = vadd.f32 0.0, %v1832
    %1834 = vdwg.mxu0
    %v1835 = vadd.f32 %v1689, %v1760
    %v1836 = vadd.f32 %v1690, %v1762
    %v1837 = vadd.f32 %v1691, %v1831
    %v1838 = vadd.f32 %v1692, %v1833
    %v1839 = vmul.f32 %v1835, 0.5
    %v1840 = vtanh.pop %v1839
    %v1841 = vmul.f32 %v1840, 0.5
    %v1842 = vadd.f32 %v1841, 0.5
    %v1843 = vmul.f32 %v1836, 0.5
    %v1844 = vtanh.pop %v1843
    %v1845 = vmul.f32 %v1844, 0.5
    %v1846 = vadd.f32 %v1845, 0.5
    %v1847 = vtanh.pop %v1837
    %v1848 = vmul.f32 %v1846, %v1677
    %v1849 = vmul.f32 %v1842, %v1847
    %v1850 = vadd.f32 %v1848, %v1849
    %v1851 = vmul.f32 %v1838, 0.5
    %v1852 = vtanh.pop %v1851
    %v1853 = vmul.f32 %v1852, 0.5
    %v1854 = vadd.f32 %v1853, 0.5
    %v1855 = vtanh.pop %v1850
    %v1856 = vmul.f32 %v1854, %v1855
    %s1857 = scalar_lea.vmem [#allocation4], 56
    %1858 = vst [vmem:[%s1857] sm:$0xff] %v1856
    %1859 = vst [vmem:[#allocation2] sm:$0xff] %v1856
    %1860 = vst [vmem:[#allocation3] sm:$0xff] %v1850
    %v1861 = vld [vmem:[#allocation4] sm:$0xff]
    %v1862 = vld [vmem:[#allocation4 + $0x8] sm:$0xff]
    %v1863 = vld [vmem:[#allocation4 + $0x10] sm:$0xff]
    %v1864 = vld [vmem:[#allocation4 + $0x18] sm:$0xff]
    %v1865 = vld [vmem:[#allocation4 + $0x20] sm:$0xff]
    %v1866 = vld [vmem:[#allocation4 + $0x28] sm:$0xff]
    %v1867 = vld [vmem:[#allocation4 + $0x30] sm:$0xff]
    %v1868 = vld [vmem:[#allocation4 + $0x38] sm:$0xff]
    %v1869 = vld [vmem:[#allocation9] sm:$0xff]
    %v1870 = vld [vmem:[#allocation9 + $0x8] sm:$0xff]
    %v1871 = vld [vmem:[#allocation9 + $0x10] sm:$0xff]
    %v1872 = vld [vmem:[#allocation9 + $0x18] sm:$0xff]
    %v1873 = vld [vmem:[#allocation9 + $0x20] sm:$0xff]
    %v1874 = vld [vmem:[#allocation9 + $0x28] sm:$0xff]
    %v1875 = vld [vmem:[#allocation9 + $0x30] sm:$0xff]
    %v1876 = vld [vmem:[#allocation9 + $0x38] sm:$0xff]
    %v1877 = vld [vmem:[#allocation9 + $0x40] sm:$0xff]
    %v1878 = vld [vmem:[#allocation9 + $0x48] sm:$0xff]
    %v1879 = vld [vmem:[#allocation9 + $0x50] sm:$0xff]
    %v1880 = vld [vmem:[#allocation9 + $0x58] sm:$0xff]
    %v1881 = vld [vmem:[#allocation9 + $0x60] sm:$0xff]
    %v1882 = vld [vmem:[#allocation9 + $0x68] sm:$0xff]
    %v1883 = vld [vmem:[#allocation9 + $0x70] sm:$0xff]
    %v1884 = vld [vmem:[#allocation9 + $0x78] sm:$0xff]
    %v1885 = vld [vmem:[%s5] sm:$0x1]
    %v1887 = vlaneseq
    %v1888 = vshrl.u32 %v1887, 7
    %v1889 = vsub.s32 0, %v1888
    %v1890 = vrot.slane %v1885, %v1889
    %1892 = vmatprep.subr.mxu0 0.0
    %1893 = vmatpush1.msra.mxu0 %v1869
    %1894 = vmatprep.subr.mxu0 0.0
    %1895 = vmatpush1.msra.mxu0 %v1870
    %1896 = vmatprep.subr.mxu0 0.0
    %1897 = vmatpush1.msra.mxu0 %v1871
    %1898 = vmatprep.subr.mxu0 0.0
    %1899 = vmatpush1.msra.mxu0 %v1872
    %1900 = vmatprep.subr.mxu0 0.0
    %1901 = vmatpush1.msra.mxu0 %v1873
    %1902 = vmatprep.subr.mxu0 0.0
    %1903 = vmatpush1.msra.mxu0 %v1874
    %1904 = vmatprep.subr.mxu0 0.0
    %1905 = vmatpush1.msra.mxu0 %v1875
    %1906 = vmatprep.subr.mxu0 0.0
    %1907 = vmatpush1.msra.mxu0 %v1876
    %1908 = vmatprep.subr.mxu0 0.0
    %1909 = vmatpush1.msra.mxu0 %v1877
    %1910 = vmatprep.subr.mxu0 0.0
    %1911 = vmatpush1.msra.mxu0 %v1878
    %1912 = vmatprep.subr.mxu0 0.0
    %1913 = vmatpush1.msra.mxu0 %v1879
    %1914 = vmatprep.subr.mxu0 0.0
    %1915 = vmatpush1.msra.mxu0 %v1880
    %1916 = vmatprep.subr.mxu0 0.0
    %1917 = vmatpush1.msra.mxu0 %v1881
    %1918 = vmatprep.subr.mxu0 0.0
    %1919 = vmatpush1.msra.mxu0 %v1882
    %1920 = vmatprep.subr.mxu0 0.0
    %1921 = vmatpush1.msra.mxu0 %v1883
    %1922 = vmatprep.subr.mxu0 0.0
    %1923 = vmatpush1.msra.mxu0 %v1884
    %1924 = vmatprep.subr.mxu0 0.0
    %1925 = vmatpush1.msra.mxu0 0.0
    %1926 = vmatprep.subr.mxu0 0.0
    %1927 = vmatpush1.msra.mxu0 0.0
    %1928 = vmatprep.subr.mxu0 0.0
    %1929 = vmatpush1.msra.mxu0 0.0
    %1930 = vmatprep.subr.mxu0 0.0
    %1931 = vmatpush1.msra.mxu0 0.0
    %1932 = vmatprep.subr.mxu0 0.0
    %1933 = vmatpush1.msra.mxu0 0.0
    %1934 = vmatprep.subr.mxu0 0.0
    %1935 = vmatpush1.msra.mxu0 0.0
    %1936 = vmatprep.subr.mxu0 0.0
    %1937 = vmatpush1.msra.mxu0 0.0
    %1938 = vmatprep.subr.mxu0 0.0
    %1939 = vmatpush1.msra.mxu0 0.0
    %1940 = vmatprep.subr.mxu0 0.0
    %1941 = vmatpush1.msra.mxu0 0.0
    %1942 = vmatprep.subr.mxu0 0.0
    %1943 = vmatpush1.msra.mxu0 0.0
    %1944 = vmatprep.subr.mxu0 0.0
    %1945 = vmatpush1.msra.mxu0 0.0
    %1946 = vmatprep.subr.mxu0 0.0
    %1947 = vmatpush1.msra.mxu0 0.0
    %1948 = vmatprep.subr.mxu0 0.0
    %1949 = vmatpush1.msra.mxu0 0.0
    %1950 = vmatprep.subr.mxu0 0.0
    %1951 = vmatpush1.msra.mxu0 0.0
    %1952 = vmatprep.subr.mxu0 0.0
    %1953 = vmatpush1.msra.mxu0 0.0
    %1954 = vmatprep.subr.mxu0 0.0
    %1955 = vmatpush1.msra.mxu0 0.0
    %1956 = vmatprep.mubr.f32.mxu0 0.0
    %1957 = vmatmul.mubr.f32.gmra.mrb[0].mxu0 %v1861
    %v1958 = vpop.f32.mrb[0].mxu0
    %v1959 = vadd.f32 %v1890, %v1958
    %v1960 = vpop.f32.mrb[0].mxu0
    %1961 = vmatprep.mubr.f32.mxu0 0.0
    %1962 = vmatmul.mubr.f32.gmra.mrb[0].mxu0 %v1862
    %v1963 = vpop.f32.mrb[0].mxu0
    %v1964 = vadd.f32 %v1890, %v1963
    %v1965 = vpop.f32.mrb[0].mxu0
    %1966 = vmatprep.mubr.f32.mxu0 0.0
    %1967 = vmatmul.mubr.f32.gmra.mrb[0].mxu0 %v1863
    %v1968 = vpop.f32.mrb[0].mxu0
    %v1969 = vadd.f32 %v1890, %v1968
    %v1970 = vpop.f32.mrb[0].mxu0
    %1971 = vmatprep.mubr.f32.mxu0 0.0
    %1972 = vmatmul.mubr.f32.gmra.mrb[0].mxu0 %v1864
    %v1973 = vpop.f32.mrb[0].mxu0
    %v1974 = vadd.f32 %v1890, %v1973
    %v1975 = vpop.f32.mrb[0].mxu0
    %1976 = vmatprep.mubr.f32.mxu0 0.0
    %1977 = vmatmul.mubr.f32.gmra.mrb[0].mxu0 %v1865
    %v1978 = vpop.f32.mrb[0].mxu0
    %v1979 = vadd.f32 %v1890, %v1978
    %v1980 = vpop.f32.mrb[0].mxu0
    %1981 = vmatprep.mubr.f32.mxu0 0.0
    %1982 = vmatmul.mubr.f32.gmra.mrb[0].mxu0 %v1866
    %v1983 = vpop.f32.mrb[0].mxu0
    %v1984 = vadd.f32 %v1890, %v1983
    %v1985 = vpop.f32.mrb[0].mxu0
    %1986 = vmatprep.mubr.f32.mxu0 0.0
    %1987 = vmatmul.mubr.f32.gmra.mrb[0].mxu0 %v1867
    %v1988 = vpop.f32.mrb[0].mxu0
    %v1989 = vadd.f32 %v1890, %v1988
    %v1990 = vpop.f32.mrb[0].mxu0
    %1991 = vmatprep.mubr.f32.mxu0 0.0
    %1992 = vmatmul.mubr.f32.gmra.mrb[0].mxu0 %v1868
    %v1993 = vpop.f32.mrb[0].mxu0
    %v1994 = vadd.f32 %v1890, %v1993
    %v1995 = vpop.f32.mrb[0].mxu0
    %1996 = vdwg.mxu0
    %1997 = vst [vmem:[#allocation11] sm:$0xff] %v1959
    %1998 = vst [vmem:[#allocation11 + $0x8] sm:$0xff] %v1964
    %1999 = vst [vmem:[#allocation11 + $0x10] sm:$0xff] %v1969
    %2000 = vst [vmem:[#allocation11 + $0x18] sm:$0xff] %v1974
    %2001 = vst [vmem:[#allocation11 + $0x20] sm:$0xff] %v1979
    %2002 = vst [vmem:[#allocation11 + $0x28] sm:$0xff] %v1984
    %2003 = vst [vmem:[#allocation11 + $0x30] sm:$0xff] %v1989
    %2004 = vst [vmem:[#allocation11 + $0x38] sm:$0xff] %v1994
    // Predicated region
    $region38: #{tpu_custom_call.1} parent=1 // pred_check
      _
    $region39: #{tpu_custom_call.1} parent=1 // pred_check_branch
      %2006 = sbr.rel (0) target = $region41
    $region40: #{tpu_custom_call.1} parent=1 // pred_region
      %s2007 = sadd.s32 0, 0
      %s2008 = smul.u32 8, %s2007
      %s2010 = ssub.s32 1024, 1024
      %2011 = vsyncadd [#allocation8], %s2010
      %s2012 = smul.addr %s2008, 128
      %s2013 = scalar_lea.hbm %s6, %s2012
      %s2014 = sshll.u32 [#allocation11], 4
      %s2015 = int_to_ptr.vmem [resolvable:$true] %s2014
      %2020 = dma.vmem_to_hbm [thread:$0]  %s2015, 1024, %s2013, [#allocation8], 128, 128, 8
    $region41: #{tpu_custom_call.1} parent=1 // pred_fallthru
      _
    // Predicated region
    $region42: #{tpu_custom_call.1} parent=1 // pred_check
      _
    $region43: #{tpu_custom_call.1} parent=1 // pred_check_branch
      %2022 = sbr.rel (0) target = $region45
    $region44: #{tpu_custom_call.1} parent=1 // pred_region
      %2023 = dma.done [#allocation8], 1024
    $region45: #{tpu_custom_call.1} parent=1 // pred_fallthru
      _
    %2024 = vsyncpa [#allocation7], 1
    %2025 = vsyncpa [#allocation10], 1
    %2026 = vsyncpa [#allocation8], 1

// kernel: tpu_custom_call.1
$region0: #{tpu_custom_call.1}
  #allocation0 [shape = 'u32[]', space=smem, size = 0x4, offset = 0x4, fixed_abs, tag = 'smem constant byte address 0x4 - core index']
  #allocation1 [shape = 'u32[144,128]{1,0:T(1,128)}', space=vmem, size = 0x12000, scoped, tag = 'internal scratch']
  #allocation2 [shape = 'f32[8,128]{1,0:T(8,128)}', space=vmem, size = 0x1000, scoped, tag = 'scratch operand']
  #allocation3 [shape = 'f32[8,128]{1,0:T(8,128)}', space=vmem, size = 0x1000, scoped, tag = 'scratch operand']
  #allocation4 [shape = 'f32[64,128]{1,0:T(8,128)}', space=vmem, size = 0x8000, scoped, tag = 'scratch operand']
  #allocation5 [shape = 'f32[64,512]{1,0:T(8,128)}', space=vmem, size = 0x20000, scoped, tag = 'scratch operand']
  %s0 = inlined_call_operand.vmem [shape: f32[64,4], index: 0, kind: input, shape index: {}]
  %s1 = inlined_call_operand.vmem [shape: f32[4,512], index: 1, kind: input, shape index: {}]
  %s2 = inlined_call_operand.hbm [shape: f32[128,512], index: 2, kind: input, shape index: {}]
  %s3 = inlined_call_operand.vmem [shape: f32[1,512], index: 3, kind: input, shape index: {}]
  %s4 = inlined_call_operand.hbm [shape: f32[128,128], index: 4, kind: input, shape index: {}]
  %s5 = inlined_call_operand.vmem [shape: f32[1,128], index: 5, kind: input, shape index: {}]
  %s6 = inlined_call_operand.hbm [shape: f32[64,128], index: 6, kind: output, shape index: {}]
  %s7 = sld [smem:[#allocation0]]
  $region46: #{tpu_custom_call.1} parent=0
    _
  %s9 = ssub.s32 1, %s7
  %s10 = scalar_select 0, %s9, %s7
  $region1: #{tpu_custom_call.1} parent=0
    #allocation6 [shape = 'u8[262144]{0}', space=vmem, size = 0x40000, scoped, tag = 'input window, operand 2, single buffered']
    #allocation7 [shape = 's32[1]{0}', space=sflag, size = 0x4, scoped, tag = 'scoped memory for tpu_custom_call.1']
    #allocation8 [shape = 's32[1]{0}', space=sflag, size = 0x4, scoped, tag = 'scoped memory for tpu_custom_call.1']
    #allocation9 [shape = 'u8[65536]{0}', space=vmem, size = 0x10000, scoped, tag = 'input window, operand 4, single buffered']
    #allocation10 [shape = 's32[1]{0}', space=sflag, size = 0x4, scoped, tag = 'scoped memory for tpu_custom_call.1']
    #allocation11 [shape = 'u8[32768]{0}', space=vmem, size = 0x8000, scoped, tag = 'output window, operand 0, single buffered']
    %11 = vsyncpa [#allocation7], 0
    %12 = vsyncpa [#allocation10], 0
    %13 = vsyncpa [#allocation8], 0
    // Predicated region
    $region2: #{tpu_custom_call.1} parent=1 // pred_check
      _
    $region3: #{tpu_custom_call.1} parent=1 // pred_check_branch
      %15 = sbr.rel (0) target = $region5
    $region4: #{tpu_custom_call.1} parent=1 // pred_region
      %s16 = sadd.s32 0, 0
      %s17 = smul.u32 8, %s16
      %p18 = scmp.lt.s32.totalorder %s17, 7
      %s19 = scalar_select %p18, %s17, 7
      %s20 = smul.addr %s19, 8
      %s21 = scalar_lea.vmem %s0, %s20
      %s22 = sadd.s32 0, 0
      %s23 = smul.u32 8, %s22
    $region5: #{tpu_custom_call.1} parent=1 // pred_fallthru
      _
    // Predicated region
    $region6: #{tpu_custom_call.1} parent=1 // pred_check
      _
    $region7: #{tpu_custom_call.1} parent=1 // pred_check_branch
      %25 = sbr.rel (0) target = $region9
    $region8: #{tpu_custom_call.1} parent=1 // pred_region
      _
    $region9: #{tpu_custom_call.1} parent=1 // pred_fallthru
      _
    // Predicated region
    $region10: #{tpu_custom_call.1} parent=1 // pred_check
      _
    $region11: #{tpu_custom_call.1} parent=1 // pred_check_branch
      %27 = sbr.rel (0) target = $region13
    $region12: #{tpu_custom_call.1} parent=1 // pred_region
      %s29 = ssub.s32 8192, 8192
      %30 = vsyncadd [#allocation7], %s29
      %s31 = sshll.u32 [#allocation6], 4
      %s32 = int_to_ptr.vmem [resolvable:$true] %s31
      %37 = dma.hbm_to_vmem [thread:$0]  %s2, 8192, %s32, [#allocation7], 512, 512, 32
    $region13: #{tpu_custom_call.1} parent=1 // pred_fallthru
      _
    // Predicated region
    $region14: #{tpu_custom_call.1} parent=1 // pred_check
      _
    $region15: #{tpu_custom_call.1} parent=1 // pred_check_branch
      %39 = sbr.rel (0) target = $region17
    $region16: #{tpu_custom_call.1} parent=1 // pred_region
      _
    $region17: #{tpu_custom_call.1} parent=1 // pred_fallthru
      _
    // Predicated region
    $region18: #{tpu_custom_call.1} parent=1 // pred_check
      _
    $region19: #{tpu_custom_call.1} parent=1 // pred_check_branch
      %41 = sbr.rel (0) target = $region21
    $region20: #{tpu_custom_call.1} parent=1 // pred_region
      %s43 = ssub.s32 2048, 2048
      %44 = vsyncadd [#allocation10], %s43
      %s45 = sshll.u32 [#allocation9], 4
      %s46 = int_to_ptr.vmem [resolvable:$true] %s45
      %51 = dma.hbm_to_vmem [thread:$0]  %s4, 2048, %s46, [#allocation10], 128, 128, 8
    $region21: #{tpu_custom_call.1} parent=1 // pred_fallthru
      _
    // Predicated region
    $region22: #{tpu_custom_call.1} parent=1 // pred_check
      _
    $region23: #{tpu_custom_call.1} parent=1 // pred_check_branch
      %53 = sbr.rel (0) target = $region25
    $region24: #{tpu_custom_call.1} parent=1 // pred_region
      _
    $region25: #{tpu_custom_call.1} parent=1 // pred_fallthru
      _
    // Predicated region
    $region26: #{tpu_custom_call.1} parent=1 // pred_check
      _
    $region27: #{tpu_custom_call.1} parent=1 // pred_check_branch
      %55 = sbr.rel (0) target = $region29
    $region28: #{tpu_custom_call.1} parent=1 // pred_region
      %56 = dma.done [#allocation7], 8192
    $region29: #{tpu_custom_call.1} parent=1 // pred_fallthru
      _
    // Predicated region
    $region30: #{tpu_custom_call.1} parent=1 // pred_check
      _
    $region31: #{tpu_custom_call.1} parent=1 // pred_check_branch
      %58 = sbr.rel (0) target = $region33
    $region32: #{tpu_custom_call.1} parent=1 // pred_region
      %59 = dma.done [#allocation10], 2048
    $region33: #{tpu_custom_call.1} parent=1 // pred_fallthru
      _
    %s60 = sadd.s32 0, 0
    %s61 = smul.u32 8, %s60
    %p62 = scmp.lt.s32.totalorder %s61, 7
    %s63 = scalar_select %p62, %s61, 7
    %s64 = smul.addr %s63, 8
    %s65 = scalar_lea.vmem %s0, %s64
    %s66 = sadd.s32 0, 0
    %s67 = smul.u32 8, %s66
    %p68 = scmp.lt.s32.totalorder %s67, 7
    %s69 = scalar_select %p68, %s67, 7
    %s70 = smul.addr %s69, 8
    %s71 = scalar_lea.vmem %s0, %s70
    %s72 = sadd.s32 0, 0
    %s73 = smul.u32 8, %s72
    %s74 = sadd.s32 0, 0
    %s75 = smul.u32 8, %s74
    %p76 = scmp.eq.s32.totalorder 0, 0
    // Predicated region
    $region34: #{tpu_custom_call.1} parent=1 // pred_check
      %p77 = pneg %p76
    $region35: #{tpu_custom_call.1} parent=1 // pred_check_branch
      %79 = sbr.rel (%p77) target = $region37
    $region36: #{tpu_custom_call.1} parent=1 // pred_region
      %80 = vst [vmem:[#allocation2] sm:$0xff] 0.0
      %81 = vst [vmem:[#allocation3] sm:$0xff] 0.0
    $region37: #{tpu_custom_call.1} parent=1 // pred_fallthru
      _
    %v82 = vld [vmem:[%s71] sm:$0xff]
    %v83 = vld [vmem:[%s71 + $0x8] sm:$0xff]
    %v84 = vld [vmem:[%s71 + $0x10] sm:$0xff]
    %v85 = vld [vmem:[%s71 + $0x18] sm:$0xff]
    %v86 = vld [vmem:[%s71 + $0x20] sm:$0xff]
    %v87 = vld [vmem:[%s71 + $0x28] sm:$0xff]
    %v88 = vld [vmem:[%s71 + $0x30] sm:$0xff]
    %v89 = vld [vmem:[%s71 + $0x38] sm:$0xff]
    %v90 = vld [vmem:[%s1] sm:$0xff]
    %v91 = vld [vmem:[%s1 + $0x8] sm:$0xff]
    %v92 = vld [vmem:[%s3] sm:$0xf]
    %v94 = vlaneseq
    %v95 = vshrl.u32 %v94, 7
    %v96 = vsub.s32 0, %v95
    %v97 = vrot.slane %v92, %v96
    %v98 = vlaneseq
    %v99 = vshrl.u32 %v98, 7
    %v100 = vsub.s32 1, %v99
    %v101 = vrot.slane %v92, %v100
    %v102 = vlaneseq
    %v103 = vshrl.u32 %v102, 7
    %v104 = vsub.s32 2, %v103
    %v105 = vrot.slane %v92, %v104
    %v106 = vlaneseq
    %v107 = vshrl.u32 %v106, 7
    %v108 = vsub.s32 3, %v107
    %v109 = vrot.slane %v92, %v108
    %v116 = vcombine.high %v90, %v90
    %v117 = vcombine.high %v91, %v91
    %vm118 = vcmask 31744
    %v120 = vsel %vm118, %v82, 0
    %v123 = vsel %vm118, %v83, 0
    %v126 = vsel %vm118, %v84, 0
    %v129 = vsel %vm118, %v85, 0
    %v132 = vsel %vm118, %v86, 0
    %v135 = vsel %vm118, %v87, 0
    %v138 = vsel %vm118, %v88, 0
    %v141 = vsel %vm118, %v89, 0
    %vm143 = vcmask 1043456
    %v144 = vsel %vm143, %v90, 0
    %v146 = vsel %vm143, %v116, 0
    %v148 = vsel %vm143, %v91, 0
    %v150 = vsel %vm143, %v117, 0
    %152 = vmatprep.subr.mxu0 %v146
    %153 = vmatpush1.msra.mxu0 %v144
    %154 = vmatprep.subr.mxu0 0.0
    %155 = vmatpush1.msra.mxu0 0.0
    %156 = vmatprep.subr.mxu0 0.0
    %157 = vmatpush1.msra.mxu0 0.0
    %158 = vmatprep.subr.mxu0 0.0
    %159 = vmatpush1.msra.mxu0 0.0
    %160 = vmatprep.subr.mxu0 0.0
    %161 = vmatpush1.msra.mxu0 0.0
    %162 = vmatprep.subr.mxu0 0.0
    %163 = vmatpush1.msra.mxu0 0.0
    %164 = vmatprep.subr.mxu0 0.0
    %165 = vmatpush1.msra.mxu0 0.0
    %166 = vmatprep.subr.mxu0 0.0
    %167 = vmatpush1.msra.mxu0 0.0
    %168 = vmatprep.subr.mxu0 0.0
    %169 = vmatpush1.msra.mxu0 0.0
    %170 = vmatprep.subr.mxu0 0.0
    %171 = vmatpush1.msra.mxu0 0.0
    %172 = vmatprep.subr.mxu0 0.0
    %173 = vmatpush1.msra.mxu0 0.0
    %174 = vmatprep.subr.mxu0 0.0
    %175 = vmatpush1.msra.mxu0 0.0
    %176 = vmatprep.subr.mxu0 0.0
    %177 = vmatpush1.msra.mxu0 0.0
    %178 = vmatprep.subr.mxu0 0.0
    %179 = vmatpush1.msra.mxu0 0.0
    %180 = vmatprep.subr.mxu0 0.0
    %181 = vmatpush1.msra.mxu0 0.0
    %182 = vmatprep.subr.mxu0 0.0
    %183 = vmatpush1.msra.mxu0 0.0
    %184 = vmatprep.subr.mxu0 0.0
    %185 = vmatpush1.msra.mxu0 0.0
    %186 = vmatprep.subr.mxu0 0.0
    %187 = vmatpush1.msra.mxu0 0.0
    %188 = vmatprep.subr.mxu0 0.0
    %189 = vmatpush1.msra.mxu0 0.0
    %190 = vmatprep.subr.mxu0 0.0
    %191 = vmatpush1.msra.mxu0 0.0
    %192 = vmatprep.subr.mxu0 0.0
    %193 = vmatpush1.msra.mxu0 0.0
    %194 = vmatprep.subr.mxu0 0.0
    %195 = vmatpush1.msra.mxu0 0.0
    %196 = vmatprep.subr.mxu0 0.0
    %197 = vmatpush1.msra.mxu0 0.0
    %198 = vmatprep.subr.mxu0 0.0
    %199 = vmatpush1.msra.mxu0 0.0
    %200 = vmatprep.subr.mxu0 0.0
    %201 = vmatpush1.msra.mxu0 0.0
    %202 = vmatprep.subr.mxu0 0.0
    %203 = vmatpush1.msra.mxu0 0.0
    %204 = vmatprep.subr.mxu0 0.0
    %205 = vmatpush1.msra.mxu0 0.0
    %206 = vmatprep.subr.mxu0 0.0
    %207 = vmatpush1.msra.mxu0 0.0
    %208 = vmatprep.subr.mxu0 0.0
    %209 = vmatpush1.msra.mxu0 0.0
    %210 = vmatprep.subr.mxu0 0.0
    %211 = vmatpush1.msra.mxu0 0.0
    %212 = vmatprep.subr.mxu0 0.0
    %213 = vmatpush1.msra.mxu0 0.0
    %214 = vmatprep.subr.mxu0 0.0
    %215 = vmatpush1.msra.mxu0 0.0
    %216 = vmatprep.mubr.f32.mxu0 0.0
    %217 = vmatmul.mubr.f32.gmra.mrb[0].mxu0 %v120
    %v218 = vpop.f32.mrb[0].mxu0
    %v219 = vadd.f32 %v97, %v218
    %v220 = vpop.f32.mrb[0].mxu0
    %v221 = vadd.f32 %v101, %v220
    %222 = vmatprep.mubr.f32.mxu0 0.0
    %223 = vmatmul.mubr.f32.gmra.mrb[0].mxu0 %v123
    %v224 = vpop.f32.mrb[0].mxu0
    %v225 = vadd.f32 %v97, %v224
    %v226 = vpop.f32.mrb[0].mxu0
    %v227 = vadd.f32 %v101, %v226
    %228 = vmatprep.mubr.f32.mxu0 0.0
    %229 = vmatmul.mubr.f32.gmra.mrb[0].mxu0 %v126
    %v230 = vpop.f32.mrb[0].mxu0
    %v231 = vadd.f32 %v97, %v230
    %v232 = vpop.f32.mrb[0].mxu0
    %v233 = vadd.f32 %v101, %v232
    %234 = vmatprep.mubr.f32.mxu0 0.0
    %235 = vmatmul.mubr.f32.gmra.mrb[0].mxu0 %v129
    %v236 = vpop.f32.mrb[0].mxu0
    %v237 = vadd.f32 %v97, %v236
    %v238 = vpop.f32.mrb[0].mxu0
    %v239 = vadd.f32 %v101, %v238
    %240 = vmatprep.mubr.f32.mxu0 0.0
    %241 = vmatmul.mubr.f32.gmra.mrb[0].mxu0 %v132
    %v242 = vpop.f32.mrb[0].mxu0
    %v243 = vadd.f32 %v97, %v242
    %v244 = vpop.f32.mrb[0].mxu0
    %v245 = vadd.f32 %v101, %v244
    %246 = vmatprep.mubr.f32.mxu0 0.0
    %247 = vmatmul.mubr.f32.gmra.mrb[0].mxu0 %v135
    %v248 = vpop.f32.mrb[0].mxu0
    %v249 = vadd.f32 %v97, %v248
    %v250 = vpop.f32.mrb[0].mxu0
    %v251 = vadd.f32 %v101, %v250
    %252 = vmatprep.mubr.f32.mxu0 0.0
    %253 = vmatmul.mubr.f32.gmra.mrb[0].mxu0 %v138
    %v254 = vpop.f32.mrb[0].mxu0
    %v255 = vadd.f32 %v97, %v254
    %v256 = vpop.f32.mrb[0].mxu0
    %v257 = vadd.f32 %v101, %v256
    %258 = vmatprep.mubr.f32.mxu0 0.0
    %259 = vmatmul.mubr.f32.gmra.mrb[0].mxu0 %v141
    %v260 = vpop.f32.mrb[0].mxu0
    %v261 = vadd.f32 %v97, %v260
    %v262 = vpop.f32.mrb[0].mxu0
    %v263 = vadd.f32 %v101, %v262
    %264 = vdwg.mxu0
    %265 = vmatprep.subr.mxu0 %v150
    %266 = vmatpush1.msra.mxu0 %v148
    %267 = vmatprep.subr.mxu0 0.0
    %268 = vmatpush1.msra.mxu0 0.0
    %269 = vmatprep.subr.mxu0 0.0
    %270 = vmatpush1.msra.mxu0 0.0
    %271 = vmatprep.subr.mxu0 0.0
    %272 = vmatpush1.msra.mxu0 0.0
    %273 = vmatprep.subr.mxu0 0.0
    %274 = vmatpush1.msra.mxu0 0.0
    %275 = vmatprep.subr.mxu0 0.0
    %276 = vmatpush1.msra.mxu0 0.0
    %277 = vmatprep.subr.mxu0 0.0
    %278 = vmatpush1.msra.mxu0 0.0
    %279 = vmatprep.subr.mxu0 0.0
    %280 = vmatpush1.msra.mxu0 0.0
    %281 = vmatprep.subr.mxu0 0.0
    %282 = vmatpush1.msra.mxu0 0.0
    %283 = vmatprep.subr.mxu0 0.0
    %284 = vmatpush1.msra.mxu0 0.0
    %285 = vmatprep.subr.mxu0 0.0
    %286 = vmatpush1.msra.mxu0 0.0
    %287 = vmatprep.subr.mxu0 0.0
    %288 = vmatpush1.msra.mxu0 0.0
    %289 = vmatprep.subr.mxu0 0.0
    %290 = vmatpush1.msra.mxu0 0.0
    %291 = vmatprep.subr.mxu0 0.0
    %292 = vmatpush1.msra.mxu0 0.0
    %293 = vmatprep.subr.mxu0 0.0
    %294 = vmatpush1.msra.mxu0 0.0
    %295 = vmatprep.subr.mxu0 0.0
    %296 = vmatpush1.msra.mxu0 0.0
    %297 = vmatprep.subr.mxu0 0.0
    %298 = vmatpush1.msra.mxu0 0.0
    %299 = vmatprep.subr.mxu0 0.0
    %300 = vmatpush1.msra.mxu0 0.0
    %301 = vmatprep.subr.mxu0 0.0
    %302 = vmatpush1.msra.mxu0 0.0
    %303 = vmatprep.subr.mxu0 0.0
    %304 = vmatpush1.msra.mxu0 0.0
    %305 = vmatprep.subr.mxu0 0.0
    %306 = vmatpush1.msra.mxu0 0.0
    %307 = vmatprep.subr.mxu0 0.0
    %308 = vmatpush1.msra.mxu0 0.0
    %309 = vmatprep.subr.mxu0 0.0
    %310 = vmatpush1.msra.mxu0 0.0
    %311 = vmatprep.subr.mxu0 0.0
    %312 = vmatpush1.msra.mxu0 0.0
    %313 = vmatprep.subr.mxu0 0.0
    %314 = vmatpush1.msra.mxu0 0.0
    %315 = vmatprep.subr.mxu0 0.0
    %316 = vmatpush1.msra.mxu0 0.0
    %317 = vmatprep.subr.mxu0 0.0
    %318 = vmatpush1.msra.mxu0 0.0
    %319 = vmatprep.subr.mxu0 0.0
    %320 = vmatpush1.msra.mxu0 0.0
    %321 = vmatprep.subr.mxu0 0.0
    %322 = vmatpush1.msra.mxu0 0.0
    %323 = vmatprep.subr.mxu0 0.0
    %324 = vmatpush1.msra.mxu0 0.0
    %325 = vmatprep.subr.mxu0 0.0
    %326 = vmatpush1.msra.mxu0 0.0
    %327 = vmatprep.subr.mxu0 0.0
    %328 = vmatpush1.msra.mxu0 0.0
    %329 = vmatprep.mubr.f32.mxu0 0.0
    %330 = vmatmul.mubr.f32.gmra.mrb[0].mxu0 %v120
    %v331 = vpop.f32.mrb[0].mxu0
    %v332 = vadd.f32 %v105, %v331
    %v333 = vpop.f32.mrb[0].mxu0
    %v334 = vadd.f32 %v109, %v333
    %335 = vmatprep.mubr.f32.mxu0 0.0
    %336 = vmatmul.mubr.f32.gmra.mrb[0].mxu0 %v123
    %v337 = vpop.f32.mrb[0].mxu0
    %v338 = vadd.f32 %v105, %v337
    %v339 = vpop.f32.mrb[0].mxu0
    %v340 = vadd.f32 %v109, %v339
    %341 = vmatprep.mubr.f32.mxu0 0.0
    %342 = vmatmul.mubr.f32.gmra.mrb[0].mxu0 %v126
    %v343 = vpop.f32.mrb[0].mxu0
    %v344 = vadd.f32 %v105, %v343
    %v345 = vpop.f32.mrb[0].mxu0
    %v346 = vadd.f32 %v109, %v345
    %347 = vmatprep.mubr.f32.mxu0 0.0
    %348 = vmatmul.mubr.f32.gmra.mrb[0].mxu0 %v129
    %v349 = vpop.f32.mrb[0].mxu0
    %v350 = vadd.f32 %v105, %v349
    %v351 = vpop.f32.mrb[0].mxu0
    %v352 = vadd.f32 %v109, %v351
    %353 = vmatprep.mubr.f32.mxu0 0.0
    %354 = vmatmul.mubr.f32.gmra.mrb[0].mxu0 %v132
    %v355 = vpop.f32.mrb[0].mxu0
    %v356 = vadd.f32 %v105, %v355
    %v357 = vpop.f32.mrb[0].mxu0
    %v358 = vadd.f32 %v109, %v357
    %359 = vmatprep.mubr.f32.mxu0 0.0
    %360 = vmatmul.mubr.f32.gmra.mrb[0].mxu0 %v135
    %v361 = vpop.f32.mrb[0].mxu0
    %v362 = vadd.f32 %v105, %v361
    %v363 = vpop.f32.mrb[0].mxu0
    %v364 = vadd.f32 %v109, %v363
    %365 = vmatprep.mubr.f32.mxu0 0.0
    %366 = vmatmul.mubr.f32.gmra.mrb[0].mxu0 %v138
    %v367 = vpop.f32.mrb[0].mxu0
    %v368 = vadd.f32 %v105, %v367
    %v369 = vpop.f32.mrb[0].mxu0
    %v370 = vadd.f32 %v109, %v369
    %371 = vmatprep.mubr.f32.mxu0 0.0
    %372 = vmatmul.mubr.f32.gmra.mrb[0].mxu0 %v141
    %v373 = vpop.f32.mrb[0].mxu0
    %v374 = vadd.f32 %v105, %v373
    %v375 = vpop.f32.mrb[0].mxu0
    %v376 = vadd.f32 %v109, %v375
    %377 = vdwg.mxu0
    %378 = vst [vmem:[#allocation5] sm:$0xff] %v219
    %379 = vst [vmem:[#allocation5 + $0x8] sm:$0xff] %v221
    %380 = vst [vmem:[#allocation5 + $0x10] sm:$0xff] %v332
    %381 = vst [vmem:[#allocation5 + $0x18] sm:$0xff] %v334
    %382 = vst [vmem:[#allocation5 + $0x20] sm:$0xff] %v225
    %383 = vst [vmem:[#allocation5 + $0x28] sm:$0xff] %v227
    %384 = vst [vmem:[#allocation5 + $0x30] sm:$0xff] %v338
    %385 = vst [vmem:[#allocation5 + $0x38] sm:$0xff] %v340
    %386 = vst [vmem:[#allocation5 + $0x40] sm:$0xff] %v231
    %387 = vst [vmem:[#allocation5 + $0x48] sm:$0xff] %v233
    %388 = vst [vmem:[#allocation5 + $0x50] sm:$0xff] %v344
    %389 = vst [vmem:[#allocation5 + $0x58] sm:$0xff] %v346
    %390 = vst [vmem:[#allocation5 + $0x60] sm:$0xff] %v237
    %391 = vst [vmem:[#allocation5 + $0x68] sm:$0xff] %v239
    %392 = vst [vmem:[#allocation5 + $0x70] sm:$0xff] %v350
    %393 = vst [vmem:[#allocation5 + $0x78] sm:$0xff] %v352
    %394 = vst [vmem:[#allocation5 + $0x80] sm:$0xff] %v243
    %395 = vst [vmem:[#allocation5 + $0x88] sm:$0xff] %v245
    %396 = vst [vmem:[#allocation5 + $0x90] sm:$0xff] %v356
    %397 = vst [vmem:[#allocation5 + $0x98] sm:$0xff] %v358
    %398 = vst [vmem:[#allocation5 + $0xa0] sm:$0xff] %v249
    %399 = vst [vmem:[#allocation5 + $0xa8] sm:$0xff] %v251
    %400 = vst [vmem:[#allocation5 + $0xb0] sm:$0xff] %v362
    %401 = vst [vmem:[#allocation5 + $0xb8] sm:$0xff] %v364
    %402 = vst [vmem:[#allocation5 + $0xc0] sm:$0xff] %v255
    %403 = vst [vmem:[#allocation5 + $0xc8] sm:$0xff] %v257
    %404 = vst [vmem:[#allocation5 + $0xd0] sm:$0xff] %v368
    %405 = vst [vmem:[#allocation5 + $0xd8] sm:$0xff] %v370
    %406 = vst [vmem:[#allocation5 + $0xe0] sm:$0xff] %v261
    %407 = vst [vmem:[#allocation5 + $0xe8] sm:$0xff] %v263
    %408 = vst [vmem:[#allocation5 + $0xf0] sm:$0xff] %v374
    %409 = vst [vmem:[#allocation5 + $0xf8] sm:$0xff] %v376
    %v410 = vld [vmem:[#allocation6] sm:$0xff]
    %v411 = vld [vmem:[#allocation6 + $0x8] sm:$0xff]
    %v412 = vld [vmem:[#allocation6 + $0x10] sm:$0xff]
    %v413 = vld [vmem:[#allocation6 + $0x18] sm:$0xff]
    %v414 = vld [vmem:[#allocation6 + $0x20] sm:$0xff]
    %v415 = vld [vmem:[#allocation6 + $0x28] sm:$0xff]
    %v416 = vld [vmem:[#allocation6 + $0x30] sm:$0xff]
    %v417 = vld [vmem:[#allocation6 + $0x38] sm:$0xff]
    %v418 = vld [vmem:[#allocation6 + $0x40] sm:$0xff]
    %v419 = vld [vmem:[#allocation6 + $0x48] sm:$0xff]
    %v420 = vld [vmem:[#allocation6 + $0x50] sm:$0xff]
    %v421 = vld [vmem:[#allocation6 + $0x58] sm:$0xff]
    %v422 = vld [vmem:[#allocation6 + $0x60] sm:$0xff]
    %v423 = vld [vmem:[#allocation6 + $0x68] sm:$0xff]
    %v424 = vld [vmem:[#allocation6 + $0x70] sm:$0xff]
    %v425 = vld [vmem:[#allocation6 + $0x78] sm:$0xff]
    %v426 = vld [vmem:[#allocation6 + $0x80] sm:$0xff]
    %v427 = vld [vmem:[#allocation6 + $0x88] sm:$0xff]
    %v428 = vld [vmem:[#allocation6 + $0x90] sm:$0xff]
    %v429 = vld [vmem:[#allocation6 + $0x98] sm:$0xff]
    %v430 = vld [vmem:[#allocation6 + $0xa0] sm:$0xff]
    %v431 = vld [vmem:[#allocation6 + $0xa8] sm:$0xff]
    %v432 = vld [vmem:[#allocation6 + $0xb0] sm:$0xff]
    %v433 = vld [vmem:[#allocation6 + $0xb8] sm:$0xff]
    %v434 = vld [vmem:[#allocation6 + $0xc0] sm:$0xff]
    %v435 = vld [vmem:[#allocation6 + $0xc8] sm:$0xff]
    %v436 = vld [vmem:[#allocation6 + $0xd0] sm:$0xff]
    %v437 = vld [vmem:[#allocation6 + $0xd8] sm:$0xff]
    %v438 = vld [vmem:[#allocation6 + $0xe0] sm:$0xff]
    %v439 = vld [vmem:[#allocation6 + $0xe8] sm:$0xff]
    %v440 = vld [vmem:[#allocation6 + $0xf0] sm:$0xff]
    %v441 = vld [vmem:[#allocation6 + $0xf8] sm:$0xff]
    %v442 = vld [vmem:[#allocation6 + $0x100] sm:$0xff]
    %v443 = vld [vmem:[#allocation6 + $0x108] sm:$0xff]
    %v444 = vld [vmem:[#allocation6 + $0x110] sm:$0xff]
    %v445 = vld [vmem:[#allocation6 + $0x118] sm:$0xff]
    %v446 = vld [vmem:[#allocation6 + $0x120] sm:$0xff]
    %v447 = vld [vmem:[#allocation6 + $0x128] sm:$0xff]
    %v448 = vld [vmem:[#allocation6 + $0x130] sm:$0xff]
    %v449 = vld [vmem:[#allocation6 + $0x138] sm:$0xff]
    %v450 = vld [vmem:[#allocation6 + $0x140] sm:$0xff]
    %v451 = vld [vmem:[#allocation6 + $0x148] sm:$0xff]
    %v452 = vld [vmem:[#allocation6 + $0x150] sm:$0xff]
    %v453 = vld [vmem:[#allocation6 + $0x158] sm:$0xff]
    %v454 = vld [vmem:[#allocation6 + $0x160] sm:$0xff]
    %v455 = vld [vmem:[#allocation6 + $0x168] sm:$0xff]
    %v456 = vld [vmem:[#allocation6 + $0x170] sm:$0xff]
    %v457 = vld [vmem:[#allocation6 + $0x178] sm:$0xff]
    %v458 = vld [vmem:[#allocation6 + $0x180] sm:$0xff]
    %v459 = vld [vmem:[#allocation6 + $0x188] sm:$0xff]
    %v460 = vld [vmem:[#allocation6 + $0x190] sm:$0xff]
    %v461 = vld [vmem:[#allocation6 + $0x198] sm:$0xff]
    %v462 = vld [vmem:[#allocation6 + $0x1a0] sm:$0xff]
    %v463 = vld [vmem:[#allocation6 + $0x1a8] sm:$0xff]
    %v464 = vld [vmem:[#allocation6 + $0x1b0] sm:$0xff]
    %v465 = vld [vmem:[#allocation6 + $0x1b8] sm:$0xff]
    %v466 = vld [vmem:[#allocation6 + $0x1c0] sm:$0xff]
    %v467 = vld [vmem:[#allocation6 + $0x1c8] sm:$0xff]
    %v468 = vld [vmem:[#allocation6 + $0x1d0] sm:$0xff]
    %v469 = vld [vmem:[#allocation6 + $0x1d8] sm:$0xff]
    %v470 = vld [vmem:[#allocation6 + $0x1e0] sm:$0xff]
    %v471 = vld [vmem:[#allocation6 + $0x1e8] sm:$0xff]
    %v472 = vld [vmem:[#allocation6 + $0x1f0] sm:$0xff]
    %v473 = vld [vmem:[#allocation6 + $0x1f8] sm:$0xff]
    %v474 = vld [vmem:[#allocation2] sm:$0xff]
    %v475 = vld [vmem:[#allocation3] sm:$0xff]
    %s476 = smul.u32 0, 4
    %s477 = smul.addr %s476, 8
    %s478 = scalar_lea.vmem [#allocation5], %s477
    %v479 = vld [vmem:[%s478] sm:$0xff]
    %v480 = vld [vmem:[%s478 + $0x8] sm:$0xff]
    %v481 = vld [vmem:[%s478 + $0x10] sm:$0xff]
    %v482 = vld [vmem:[%s478 + $0x18] sm:$0xff]
    %483 = vmatprep.subr.mxu0 %v411
    %484 = vmatpush1.msra.mxu0 %v410
    %485 = vmatprep.subr.mxu0 %v415
    %486 = vmatpush1.msra.mxu0 %v414
    %487 = vmatprep.subr.mxu0 %v419
    %488 = vmatpush1.msra.mxu0 %v418
    %489 = vmatprep.subr.mxu0 %v423
    %490 = vmatpush1.msra.mxu0 %v422
    %491 = vmatprep.subr.mxu0 %v427
    %492 = vmatpush1.msra.mxu0 %v426
    %493 = vmatprep.subr.mxu0 %v431
    %494 = vmatpush1.msra.mxu0 %v430
    %495 = vmatprep.subr.mxu0 %v435
    %496 = vmatpush1.msra.mxu0 %v434
    %497 = vmatprep.subr.mxu0 %v439
    %498 = vmatpush1.msra.mxu0 %v438
    %499 = vmatprep.subr.mxu0 %v443
    %500 = vmatpush1.msra.mxu0 %v442
    %501 = vmatprep.subr.mxu0 %v447
    %502 = vmatpush1.msra.mxu0 %v446
    %503 = vmatprep.subr.mxu0 %v451
    %504 = vmatpush1.msra.mxu0 %v450
    %505 = vmatprep.subr.mxu0 %v455
    %506 = vmatpush1.msra.mxu0 %v454
    %507 = vmatprep.subr.mxu0 %v459
    %508 = vmatpush1.msra.mxu0 %v458
    %509 = vmatprep.subr.mxu0 %v463
    %510 = vmatpush1.msra.mxu0 %v462
    %511 = vmatprep.subr.mxu0 %v467
    %512 = vmatpush1.msra.mxu0 %v466
    %513 = vmatprep.subr.mxu0 %v471
    %514 = vmatpush1.msra.mxu0 %v470
    %515 = vmatprep.subr.mxu0 0.0
    %516 = vmatpush1.msra.mxu0 0.0
    %517 = vmatprep.subr.mxu0 0.0
    %518 = vmatpush1.msra.mxu0 0.0
    %519 = vmatprep.subr.mxu0 0.0
    %520 = vmatpush1.msra.mxu0 0.0
    %521 = vmatprep.subr.mxu0 0.0
    %522 = vmatpush1.msra.mxu0 0.0
    %523 = vmatprep.subr.mxu0 0.0
    %524 = vmatpush1.msra.mxu0 0.0
    %525 = vmatprep.subr.mxu0 0.0
    %526 = vmatpush1.msra.mxu0 0.0
    %527 = vmatprep.subr.mxu0 0.0
    %528 = vmatpush1.msra.mxu0 0.0
    %529 = vmatprep.subr.mxu0 0.0
    %530 = vmatpush1.msra.mxu0 0.0
    %531 = vmatprep.subr.mxu0 0.0
    %532 = vmatpush1.msra.mxu0 0.0
    %533 = vmatprep.subr.mxu0 0.0
    %534 = vmatpush1.msra.mxu0 0.0
    %535 = vmatprep.subr.mxu0 0.0
    %536 = vmatpush1.msra.mxu0 0.0
    %537 = vmatprep.subr.mxu0 0.0
    %538 = vmatpush1.msra.mxu0 0.0
    %539 = vmatprep.subr.mxu0 0.0
    %540 = vmatpush1.msra.mxu0 0.0
    %541 = vmatprep.subr.mxu0 0.0
    %542 = vmatpush1.msra.mxu0 0.0
    %543 = vmatprep.subr.mxu0 0.0
    %544 = vmatpush1.msra.mxu0 0.0
    %545 = vmatprep.subr.mxu0 0.0
    %546 = vmatpush1.msra.mxu0 0.0
    %547 = vmatprep.mubr.f32.mxu0 0.0
    %548 = vmatmul.mubr.f32.gmra.mrb[0].mxu0 %v474
    %v549 = vpop.f32.mrb[0].mxu0
    %v550 = vadd.f32 0.0, %v549
    %v551 = vpop.f32.mrb[0].mxu0
    %v552 = vadd.f32 0.0, %v551
    %553 = vdwg.mxu0
    %554 = vmatprep.subr.mxu0 %v413
    %555 = vmatpush1.msra.mxu0 %v412
    %556 = vmatprep.subr.mxu0 %v417
    %557 = vmatpush1.msra.mxu0 %v416
    %558 = vmatprep.subr.mxu0 %v421
    %559 = vmatpush1.msra.mxu0 %v420
    %560 = vmatprep.subr.mxu0 %v425
    %561 = vmatpush1.msra.mxu0 %v424
    %562 = vmatprep.subr.mxu0 %v429
    %563 = vmatpush1.msra.mxu0 %v428
    %564 = vmatprep.subr.mxu0 %v433
    %565 = vmatpush1.msra.mxu0 %v432
    %566 = vmatprep.subr.mxu0 %v437
    %567 = vmatpush1.msra.mxu0 %v436
    %568 = vmatprep.subr.mxu0 %v441
    %569 = vmatpush1.msra.mxu0 %v440
    %570 = vmatprep.subr.mxu0 %v445
    %571 = vmatpush1.msra.mxu0 %v444
    %572 = vmatprep.subr.mxu0 %v449
    %573 = vmatpush1.msra.mxu0 %v448
    %574 = vmatprep.subr.mxu0 %v453
    %575 = vmatpush1.msra.mxu0 %v452
    %576 = vmatprep.subr.mxu0 %v457
    %577 = vmatpush1.msra.mxu0 %v456
    %578 = vmatprep.subr.mxu0 %v461
    %579 = vmatpush1.msra.mxu0 %v460
    %580 = vmatprep.subr.mxu0 %v465
    %581 = vmatpush1.msra.mxu0 %v464
    %582 = vmatprep.subr.mxu0 %v469
    %583 = vmatpush1.msra.mxu0 %v468
    %584 = vmatprep.subr.mxu0 %v473
    %585 = vmatpush1.msra.mxu0 %v472
    %586 = vmatprep.subr.mxu0 0.0
    %587 = vmatpush1.msra.mxu0 0.0
    %588 = vmatprep.subr.mxu0 0.0
    %589 = vmatpush1.msra.mxu0 0.0
    %590 = vmatprep.subr.mxu0 0.0
    %591 = vmatpush1.msra.mxu0 0.0
    %592 = vmatprep.subr.mxu0 0.0
    %593 = vmatpush1.msra.mxu0 0.0
    %594 = vmatprep.subr.mxu0 0.0
    %595 = vmatpush1.msra.mxu0 0.0
    %596 = vmatprep.subr.mxu0 0.0
    %597 = vmatpush1.msra.mxu0 0.0
    %598 = vmatprep.subr.mxu0 0.0
    %599 = vmatpush1.msra.mxu0 0.0
    %600 = vmatprep.subr.mxu0 0.0
    %601 = vmatpush1.msra.mxu0 0.0
    %602 = vmatprep.subr.mxu0 0.0
    %603 = vmatpush1.msra.mxu0 0.0
    %604 = vmatprep.subr.mxu0 0.0
    %605 = vmatpush1.msra.mxu0 0.0
    %606 = vmatprep.subr.mxu0 0.0
    %607 = vmatpush1.msra.mxu0 0.0
    %608 = vmatprep.subr.mxu0 0.0
    %609 = vmatpush1.msra.mxu0 0.0
    %610 = vmatprep.subr.mxu0 0.0
    %611 = vmatpush1.msra.mxu0 0.0
    %612 = vmatprep.subr.mxu0 0.0
    %613 = vmatpush1.msra.mxu0 0.0
    %614 = vmatprep.subr.mxu0 0.0
    %615 = vmatpush1.msra.mxu0 0.0
    %616 = vmatprep.subr.mxu0 0.0
    %617 = vmatpush1.msra.mxu0 0.0
    %618 = vmatprep.mubr.f32.mxu0 0.0
    %619 = vmatmul.mubr.f32.gmra.mrb[0].mxu0 %v474
    %v620 = vpop.f32.mrb[0].mxu0
    %v621 = vadd.f32 0.0, %v620
    %v622 = vpop.f32.mrb[0].mxu0
    %v623 = vadd.f32 0.0, %v622
    %624 = vdwg.mxu0
    %v625 = vadd.f32 %v479, %v550
    %v626 = vadd.f32 %v480, %v552
    %v627 = vadd.f32 %v481, %v621
    %v628 = vadd.f32 %v482, %v623
    %v629 = vmul.f32 %v625, 0.5
    %v630 = vtanh.pop %v629
    %v631 = vmul.f32 %v630, 0.5
    %v632 = vadd.f32 %v631, 0.5
    %v633 = vmul.f32 %v626, 0.5
    %v634 = vtanh.pop %v633
    %v635 = vmul.f32 %v634, 0.5
    %v636 = vadd.f32 %v635, 0.5
    %v637 = vtanh.pop %v627
    %v638 = vmul.f32 %v636, %v475
    %v639 = vmul.f32 %v632, %v637
    %v640 = vadd.f32 %v638, %v639
    %v641 = vmul.f32 %v628, 0.5
    %v642 = vtanh.pop %v641
    %v643 = vmul.f32 %v642, 0.5
    %v644 = vadd.f32 %v643, 0.5
    %v645 = vtanh.pop %v640
    %v646 = vmul.f32 %v644, %v645
    %647 = vst [vmem:[#allocation4] sm:$0xff] %v646
    %s648 = smul.u32 1, 4
    %s649 = smul.addr %s648, 8
    %s650 = scalar_lea.vmem [#allocation5], %s649
    %v651 = vld [vmem:[%s650] sm:$0xff]
    %v652 = vld [vmem:[%s650 + $0x8] sm:$0xff]
    %v653 = vld [vmem:[%s650 + $0x10] sm:$0xff]
    %v654 = vld [vmem:[%s650 + $0x18] sm:$0xff]
    %655 = vmatprep.subr.mxu0 %v411
    %656 = vmatpush1.msra.mxu0 %v410
    %657 = vmatprep.subr.mxu0 %v415
    %658 = vmatpush1.msra.mxu0 %v414
    %659 = vmatprep.subr.mxu0 %v419
    %660 = vmatpush1.msra.mxu0 %v418
    %661 = vmatprep.subr.mxu0 %v423
    %662 = vmatpush1.msra.mxu0 %v422
    %663 = vmatprep.subr.mxu0 %v427
    %664 = vmatpush1.msra.mxu0 %v426
    %665 = vmatprep.subr.mxu0 %v431
    %666 = vmatpush1.msra.mxu0 %v430
    %667 = vmatprep.subr.mxu0 %v435
    %668 = vmatpush1.msra.mxu0 %v434
    %669 = vmatprep.subr.mxu0 %v439
    %670 = vmatpush1.msra.mxu0 %v438
    %671 = vmatprep.subr.mxu0 %v443
    %672 = vmatpush1.msra.mxu0 %v442
    %673 = vmatprep.subr.mxu0 %v447
    %674 = vmatpush1.msra.mxu0 %v446
    %675 = vmatprep.subr.mxu0 %v451
    %676 = vmatpush1.msra.mxu0 %v450
    %677 = vmatprep.subr.mxu0 %v455
    %678 = vmatpush1.msra.mxu0 %v454
    %679 = vmatprep.subr.mxu0 %v459
    %680 = vmatpush1.msra.mxu0 %v458
    %681 = vmatprep.subr.mxu0 %v463
    %682 = vmatpush1.msra.mxu0 %v462
    %683 = vmatprep.subr.mxu0 %v467
    %684 = vmatpush1.msra.mxu0 %v466
    %685 = vmatprep.subr.mxu0 %v471
    %686 = vmatpush1.msra.mxu0 %v470
    %687 = vmatprep.subr.mxu0 0.0
    %688 = vmatpush1.msra.mxu0 0.0
    %689 = vmatprep.subr.mxu0 0.0
    %690 = vmatpush1.msra.mxu0 0.0
    %691 = vmatprep.subr.mxu0 0.0
    %692 = vmatpush1.msra.mxu0 0.0
    %693 = vmatprep.subr.mxu0 0.0
    %694 = vmatpush1.msra.mxu0 0.0
    %695 = vmatprep.subr.mxu0 0.0
    %696 = vmatpush1.msra.mxu0 0.0
    %697 = vmatprep.subr.mxu0 0.0
    %698 = vmatpush1.msra.mxu0 0.0
    %699 = vmatprep.subr.mxu0 0.0
    %700 = vmatpush1.msra.mxu0 0.0
    %701 = vmatprep.subr.mxu0 0.0
    %702 = vmatpush1.msra.mxu0 0.0
    %703 = vmatprep.subr.mxu0 0.0
    %704 = vmatpush1.msra.mxu0 0.0
    %705 = vmatprep.subr.mxu0 0.0
    %706 = vmatpush1.msra.mxu0 0.0
    %707 = vmatprep.subr.mxu0 0.0
    %708 = vmatpush1.msra.mxu0 0.0
    %709 = vmatprep.subr.mxu0 0.0
    %710 = vmatpush1.msra.mxu0 0.0
    %711 = vmatprep.subr.mxu0 0.0
    %712 = vmatpush1.msra.mxu0 0.0
    %713 = vmatprep.subr.mxu0 0.0
    %714 = vmatpush1.msra.mxu0 0.0
    %715 = vmatprep.subr.mxu0 0.0
    %716 = vmatpush1.msra.mxu0 0.0
    %717 = vmatprep.subr.mxu0 0.0
    %718 = vmatpush1.msra.mxu0 0.0
    %719 = vmatprep.mubr.f32.mxu0 0.0
    %720 = vmatmul.mubr.f32.gmra.mrb[0].mxu0 %v646
    %v721 = vpop.f32.mrb[0].mxu0
    %v722 = vadd.f32 0.0, %v721
    %v723 = vpop.f32.mrb[0].mxu0
    %v724 = vadd.f32 0.0, %v723
    %725 = vdwg.mxu0
    %726 = vmatprep.subr.mxu0 %v413
    %727 = vmatpush1.msra.mxu0 %v412
    %728 = vmatprep.subr.mxu0 %v417
    %729 = vmatpush1.msra.mxu0 %v416
    %730 = vmatprep.subr.mxu0 %v421
    %731 = vmatpush1.msra.mxu0 %v420
    %732 = vmatprep.subr.mxu0 %v425
    %733 = vmatpush1.msra.mxu0 %v424
    %734 = vmatprep.subr.mxu0 %v429
    %735 = vmatpush1.msra.mxu0 %v428
    %736 = vmatprep.subr.mxu0 %v433
    %737 = vmatpush1.msra.mxu0 %v432
    %738 = vmatprep.subr.mxu0 %v437
    %739 = vmatpush1.msra.mxu0 %v436
    %740 = vmatprep.subr.mxu0 %v441
    %741 = vmatpush1.msra.mxu0 %v440
    %742 = vmatprep.subr.mxu0 %v445
    %743 = vmatpush1.msra.mxu0 %v444
    %744 = vmatprep.subr.mxu0 %v449
    %745 = vmatpush1.msra.mxu0 %v448
    %746 = vmatprep.subr.mxu0 %v453
    %747 = vmatpush1.msra.mxu0 %v452
    %748 = vmatprep.subr.mxu0 %v457
    %749 = vmatpush1.msra.mxu0 %v456
    %750 = vmatprep.subr.mxu0 %v461
    %751 = vmatpush1.msra.mxu0 %v460
    %752 = vmatprep.subr.mxu0 %v465
    %753 = vmatpush1.msra.mxu0 %v464
    %754 = vmatprep.subr.mxu0 %v469
    %755 = vmatpush1.msra.mxu0 %v468
    %756 = vmatprep.subr.mxu0 %v473
    %757 = vmatpush1.msra.mxu0 %v472
    %758 = vmatprep.subr.mxu0 0.0
    %759 = vmatpush1.msra.mxu0 0.0
    %760 = vmatprep.subr.mxu0 0.0
    %761 = vmatpush1.msra.mxu0 0.0
    %762 = vmatprep.subr.mxu0 0.0
    %763 = vmatpush1.msra.mxu0 0.0
    %764 = vmatprep.subr.mxu0 0.0
    %765 = vmatpush1.msra.mxu0 0.0
    %766 = vmatprep.subr.mxu0 0.0
    %767 = vmatpush1.msra.mxu0 0.0
    %768 = vmatprep.subr.mxu0 0.0
    %769 = vmatpush1.msra.mxu0 0.0
    %770 = vmatprep.subr.mxu0 0.0
    %771 = vmatpush1.msra.mxu0 0.0
    %772 = vmatprep.subr.mxu0 0.0
    %773 = vmatpush1.msra.mxu0 0.0
    %774 = vmatprep.subr.mxu0 0.0
    %775 = vmatpush1.msra.mxu0 0.0
    %776 = vmatprep.subr.mxu0 0.0
    %777 = vmatpush1.msra.mxu0 0.0
    %778 = vmatprep.subr.mxu0 0.0
    %779 = vmatpush1.msra.mxu0 0.0
    %780 = vmatprep.subr.mxu0 0.0
    %781 = vmatpush1.msra.mxu0 0.0
    %782 = vmatprep.subr.mxu0 0.0
    %783 = vmatpush1.msra.mxu0 0.0
    %784 = vmatprep.subr.mxu0 0.0
    %785 = vmatpush1.msra.mxu0 0.0
    %786 = vmatprep.subr.mxu0 0.0
    %787 = vmatpush1.msra.mxu0 0.0
    %788 = vmatprep.subr.mxu0 0.0
    %789 = vmatpush1.msra.mxu0 0.0
    %790 = vmatprep.mubr.f32.mxu0 0.0
    %791 = vmatmul.mubr.f32.gmra.mrb[0].mxu0 %v646
    %v792 = vpop.f32.mrb[0].mxu0
    %v793 = vadd.f32 0.0, %v792
    %v794 = vpop.f32.mrb[0].mxu0
    %v795 = vadd.f32 0.0, %v794
    %796 = vdwg.mxu0
    %v797 = vadd.f32 %v651, %v722
    %v798 = vadd.f32 %v652, %v724
    %v799 = vadd.f32 %v653, %v793
    %v800 = vadd.f32 %v654, %v795
    %v801 = vmul.f32 %v797, 0.5
    %v802 = vtanh.pop %v801
    %v803 = vmul.f32 %v802, 0.5
    %v804 = vadd.f32 %v803, 0.5
    %v805 = vmul.f32 %v798, 0.5
    %v806 = vtanh.pop %v805
    %v807 = vmul.f32 %v806, 0.5
    %v808 = vadd.f32 %v807, 0.5
    %v809 = vtanh.pop %v799
    %v810 = vmul.f32 %v808, %v640
    %v811 = vmul.f32 %v804, %v809
    %v812 = vadd.f32 %v810, %v811
    %v813 = vmul.f32 %v800, 0.5
    %v814 = vtanh.pop %v813
    %v815 = vmul.f32 %v814, 0.5
    %v816 = vadd.f32 %v815, 0.5
    %v817 = vtanh.pop %v812
    %v818 = vmul.f32 %v816, %v817
    %s819 = scalar_lea.vmem [#allocation4], 8
    %820 = vst [vmem:[%s819] sm:$0xff] %v818
    %s821 = smul.u32 2, 4
    %s822 = smul.addr %s821, 8
    %s823 = scalar_lea.vmem [#allocation5], %s822
    %v824 = vld [vmem:[%s823] sm:$0xff]
    %v825 = vld [vmem:[%s823 + $0x8] sm:$0xff]
    %v826 = vld [vmem:[%s823 + $0x10] sm:$0xff]
    %v827 = vld [vmem:[%s823 + $0x18] sm:$0xff]
    %828 = vmatprep.subr.mxu0 %v411
    %829 = vmatpush1.msra.mxu0 %v410
    %830 = vmatprep.subr.mxu0 %v415
    %831 = vmatpush1.msra.mxu0 %v414
    %832 = vmatprep.subr.mxu0 %v419
    %833 = vmatpush1.msra.mxu0 %v418
    %834 = vmatprep.subr.mxu0 %v423
    %835 = vmatpush1.msra.mxu0 %v422
    %836 = vmatprep.subr.mxu0 %v427
    %837 = vmatpush1.msra.mxu0 %v426
    %838 = vmatprep.subr.mxu0 %v431
    %839 = vmatpush1.msra.mxu0 %v430
    %840 = vmatprep.subr.mxu0 %v435
    %841 = vmatpush1.msra.mxu0 %v434
    %842 = vmatprep.subr.mxu0 %v439
    %843 = vmatpush1.msra.mxu0 %v438
    %844 = vmatprep.subr.mxu0 %v443
    %845 = vmatpush1.msra.mxu0 %v442
    %846 = vmatprep.subr.mxu0 %v447
    %847 = vmatpush1.msra.mxu0 %v446
    %848 = vmatprep.subr.mxu0 %v451
    %849 = vmatpush1.msra.mxu0 %v450
    %850 = vmatprep.subr.mxu0 %v455
    %851 = vmatpush1.msra.mxu0 %v454
    %852 = vmatprep.subr.mxu0 %v459
    %853 = vmatpush1.msra.mxu0 %v458
    %854 = vmatprep.subr.mxu0 %v463
    %855 = vmatpush1.msra.mxu0 %v462
    %856 = vmatprep.subr.mxu0 %v467
    %857 = vmatpush1.msra.mxu0 %v466
    %858 = vmatprep.subr.mxu0 %v471
    %859 = vmatpush1.msra.mxu0 %v470
    %860 = vmatprep.subr.mxu0 0.0
    %861 = vmatpush1.msra.mxu0 0.0
    %862 = vmatprep.subr.mxu0 0.0
    %863 = vmatpush1.msra.mxu0 0.0
    %864 = vmatprep.subr.mxu0 0.0
    %865 = vmatpush1.msra.mxu0 0.0
    %866 = vmatprep.subr.mxu0 0.0
    %867 = vmatpush1.msra.mxu0 0.0
    %868 = vmatprep.subr.mxu0 0.0
    %869 = vmatpush1.msra.mxu0 0.0
    %870 = vmatprep.subr.mxu0 0.0
    %871 = vmatpush1.msra.mxu0 0.0
    %872 = vmatprep.subr.mxu0 0.0
    %873 = vmatpush1.msra.mxu0 0.0
    %874 = vmatprep.subr.mxu0 0.0
    %875 = vmatpush1.msra.mxu0 0.0
    %876 = vmatprep.subr.mxu0 0.0
    %877 = vmatpush1.msra.mxu0 0.0
    %878 = vmatprep.subr.mxu0 0.0
    %879 = vmatpush1.msra.mxu0 0.0
    %880 = vmatprep.subr.mxu0 0.0
    %881 = vmatpush1.msra.mxu0 0.0
    %882 = vmatprep.subr.mxu0 0.0
    %883 = vmatpush1.msra.mxu0 0.0
    %884 = vmatprep.subr.mxu0 0.0
    %885 = vmatpush1.msra.mxu0 0.0
    %886 = vmatprep.subr.mxu0 0.0
    %887 = vmatpush1.msra.mxu0 0.0
    %888 = vmatprep.subr.mxu0 0.0
    %889 = vmatpush1.msra.mxu0 0.0
    %890 = vmatprep.subr.mxu0 0.0
    %891 = vmatpush1.msra.mxu0 0.0
    %892 = vmatprep.mubr.f32.mxu0 0.0
    %893 = vmatmul.mubr.f32.gmra.mrb[0].mxu0 %v818
    %v894 = vpop.f32.mrb[0].mxu0
    %v895 = vadd.f32 0.0, %v894
    %v896 = vpop.f32.mrb[0].mxu0
    %v897 = vadd.f32 0.0, %v896
    %898 = vdwg.mxu0
    %899 = vmatprep.subr.mxu0 %v413
    %900 = vmatpush1.msra.mxu0 %v412
    %901 = vmatprep.subr.mxu0 %v417
    %902 = vmatpush1.msra.mxu0 %v416
    %903 = vmatprep.subr.mxu0 %v421
    %904 = vmatpush1.msra.mxu0 %v420
    %905 = vmatprep.subr.mxu0 %v425
    %906 = vmatpush1.msra.mxu0 %v424
    %907 = vmatprep.subr.mxu0 %v429
    %908 = vmatpush1.msra.mxu0 %v428
    %909 = vmatprep.subr.mxu0 %v433
    %910 = vmatpush1.msra.mxu0 %v432
    %911 = vmatprep.subr.mxu0 %v437
    %912 = vmatpush1.msra.mxu0 %v436
    %913 = vmatprep.subr.mxu0 %v441
    %914 = vmatpush1.msra.mxu0 %v440
    %915 = vmatprep.subr.mxu0 %v445
    %916 = vmatpush1.msra.mxu0 %v444
    %917 = vmatprep.subr.mxu0 %v449
    %918 = vmatpush1.msra.mxu0 %v448
    %919 = vmatprep.subr.mxu0 %v453
    %920 = vmatpush1.msra.mxu0 %v452
    %921 = vmatprep.subr.mxu0 %v457
    %922 = vmatpush1.msra.mxu0 %v456
    %923 = vmatprep.subr.mxu0 %v461
    %924 = vmatpush1.msra.mxu0 %v460
    %925 = vmatprep.subr.mxu0 %v465
    %926 = vmatpush1.msra.mxu0 %v464
    %927 = vmatprep.subr.mxu0 %v469
    %928 = vmatpush1.msra.mxu0 %v468
    %929 = vmatprep.subr.mxu0 %v473
    %930 = vmatpush1.msra.mxu0 %v472
    %931 = vmatprep.subr.mxu0 0.0
    %932 = vmatpush1.msra.mxu0 0.0
    %933 = vmatprep.subr.mxu0 0.0
    %934 = vmatpush1.msra.mxu0 0.0
    %935 = vmatprep.subr.mxu0 0.0
    %936 = vmatpush1.msra.mxu0 0.0
    %937 = vmatprep.subr.mxu0 0.0
    %938 = vmatpush1.msra.mxu0 0.0
    %939 = vmatprep.subr.mxu0 0.0
    %940 = vmatpush1.msra.mxu0 0.0
    %941 = vmatprep.subr.mxu0 0.0
    %942 = vmatpush1.msra.mxu0 0.0
    %943 = vmatprep.subr.mxu0 0.0
    %944 = vmatpush1.msra.mxu0 0.0
    %945 = vmatprep.subr.mxu0 0.0
    %946 = vmatpush1.msra.mxu0 0.0
    %947 = vmatprep.subr.mxu0 0.0
    %948 = vmatpush1.msra.mxu0 0.0
    %949 = vmatprep.subr.mxu0 0.0
    %950 = vmatpush1.msra.mxu0 0.0
    %951 = vmatprep.subr.mxu0 0.0
    %952 = vmatpush1.msra.mxu0 0.0
    %953 = vmatprep.subr.mxu0 0.0
    %954 = vmatpush1.msra.mxu0 0.0
    %955 = vmatprep.subr.mxu0 0.0
    %956 = vmatpush1.msra.mxu0 0.0
    %957 = vmatprep.subr.mxu0 0.0
    %958 = vmatpush1.msra.mxu0 0.0
    %959 = vmatprep.subr.mxu0 0.0
    %960 = vmatpush1.msra.mxu0 0.0
    %961 = vmatprep.subr.mxu0 0.0
    %962 = vmatpush1.msra.mxu0 0.0
    %963 = vmatprep.mubr.f32.mxu0 0.0
    %964 = vmatmul.mubr.f32.gmra.mrb[0].mxu0 %v818
    %v965 = vpop.f32.mrb[0].mxu0
    %v966 = vadd.f32 0.0, %v965
    %v967 = vpop.f32.mrb[0].mxu0
    %v968 = vadd.f32 0.0, %v967
    %969 = vdwg.mxu0
    %v970 = vadd.f32 %v824, %v895
    %v971 = vadd.f32 %v825, %v897
    %v972 = vadd.f32 %v826, %v966
    %v973 = vadd.f32 %v827, %v968
    %v974 = vmul.f32 %v970, 0.5
    %v975 = vtanh.pop %v974
    %v976 = vmul.f32 %v975, 0.5
    %v977 = vadd.f32 %v976, 0.5
    %v978 = vmul.f32 %v971, 0.5
    %v979 = vtanh.pop %v978
    %v980 = vmul.f32 %v979, 0.5
    %v981 = vadd.f32 %v980, 0.5
    %v982 = vtanh.pop %v972
    %v983 = vmul.f32 %v981, %v812
    %v984 = vmul.f32 %v977, %v982
    %v985 = vadd.f32 %v983, %v984
    %v986 = vmul.f32 %v973, 0.5
    %v987 = vtanh.pop %v986
    %v988 = vmul.f32 %v987, 0.5
    %v989 = vadd.f32 %v988, 0.5
    %v990 = vtanh.pop %v985
    %v991 = vmul.f32 %v989, %v990
    %s992 = scalar_lea.vmem [#allocation4], 16
    %993 = vst [vmem:[%s992] sm:$0xff] %v991
    %s994 = smul.u32 3, 4
    %s995 = smul.addr %s994, 8
    %s996 = scalar_lea.vmem [#allocation5], %s995
    %v997 = vld [vmem:[%s996] sm:$0xff]
    %v998 = vld [vmem:[%s996 + $0x8] sm:$0xff]
    %v999 = vld [vmem:[%s996 + $0x10] sm:$0xff]
    %v1000 = vld [vmem:[%s996 + $0x18] sm:$0xff]
    %1001 = vmatprep.subr.mxu0 %v411
    %1002 = vmatpush1.msra.mxu0 %v410
    %1003 = vmatprep.subr.mxu0 %v415
    %1004 = vmatpush1.msra.mxu0 %v414
    %1005 = vmatprep.subr.mxu0 %v419
    %1006 = vmatpush1.msra.mxu0 %v418
    %1007 = vmatprep.subr.mxu0 %v423
    %1008 = vmatpush1.msra.mxu0 %v422
    %1009 = vmatprep.subr.mxu0 %v427
    %1010 = vmatpush1.msra.mxu0 %v426
    %1011 = vmatprep.subr.mxu0 %v431
    %1012 = vmatpush1.msra.mxu0 %v430
    %1013 = vmatprep.subr.mxu0 %v435
    %1014 = vmatpush1.msra.mxu0 %v434
    %1015 = vmatprep.subr.mxu0 %v439
    %1016 = vmatpush1.msra.mxu0 %v438
    %1017 = vmatprep.subr.mxu0 %v443
    %1018 = vmatpush1.msra.mxu0 %v442
    %1019 = vmatprep.subr.mxu0 %v447
    %1020 = vmatpush1.msra.mxu0 %v446
    %1021 = vmatprep.subr.mxu0 %v451
    %1022 = vmatpush1.msra.mxu0 %v450
    %1023 = vmatprep.subr.mxu0 %v455
    %1024 = vmatpush1.msra.mxu0 %v454
    %1025 = vmatprep.subr.mxu0 %v459
    %1026 = vmatpush1.msra.mxu0 %v458
    %1027 = vmatprep.subr.mxu0 %v463
    %1028 = vmatpush1.msra.mxu0 %v462
    %1029 = vmatprep.subr.mxu0 %v467
    %1030 = vmatpush1.msra.mxu0 %v466
    %1031 = vmatprep.subr.mxu0 %v471
    %1032 = vmatpush1.msra.mxu0 %v470
    %1033 = vmatprep.subr.mxu0 0.0
    %1034 = vmatpush1.msra.mxu0 0.0
    %1035 = vmatprep.subr.mxu0 0.0
    %1036 = vmatpush1.msra.mxu0 0.0
    %1037 = vmatprep.subr.mxu0 0.0
    %1038 = vmatpush1.msra.mxu0 0.0
    %1039 = vmatprep.subr.mxu0 0.0
    %1040 = vmatpush1.msra.mxu0 0.0
    %1041 = vmatprep.subr.mxu0 0.0
    %1042 = vmatpush1.msra.mxu0 0.0
    %1043 = vmatprep.subr.mxu0 0.0
    %1044 = vmatpush1.msra.mxu0 0.0
    %1045 = vmatprep.subr.mxu0 0.0
    %1046 = vmatpush1.msra.mxu0 0.0
    %1047 = vmatprep.subr.mxu0 0.0
    %1048 = vmatpush1.msra.mxu0 0.0
    %1049 = vmatprep.subr.mxu0 0.0
    %1050 = vmatpush1.msra.mxu0 0.0
    %1051 = vmatprep.subr.mxu0 0.0
    %1052 = vmatpush1.msra.mxu0 0.0
    %1053 = vmatprep.subr.mxu0 0.0
    %1054 = vmatpush1.msra.mxu0 0.0
    %1055 = vmatprep.subr.mxu0 0.0
    %1056 = vmatpush1.msra.mxu0 0.0
    %1057 = vmatprep.subr.mxu0 0.0
    %1058 = vmatpush1.msra.mxu0 0.0
    %1059 = vmatprep.subr.mxu0 0.0
    %1060 = vmatpush1.msra.mxu0 0.0
    %1061 = vmatprep.subr.mxu0 0.0
    %1062 = vmatpush1.msra.mxu0 0.0
    %1063 = vmatprep.subr.mxu0 0.0
    %1064 = vmatpush1.msra.mxu0 0.0
    %1065 = vmatprep.mubr.f32.mxu0 0.0
    %1066 = vmatmul.mubr.f32.gmra.mrb[0].mxu0 %v991
    %v1067 = vpop.f32.mrb[0].mxu0
    %v1068 = vadd.f32 0.0, %v1067
    %v1069 = vpop.f32.mrb[0].mxu0
    %v1070 = vadd.f32 0.0, %v1069
    %1071 = vdwg.mxu0
    %1072 = vmatprep.subr.mxu0 %v413
    %1073 = vmatpush1.msra.mxu0 %v412
    %1074 = vmatprep.subr.mxu0 %v417
    %1075 = vmatpush1.msra.mxu0 %v416
    %1076 = vmatprep.subr.mxu0 %v421
    %1077 = vmatpush1.msra.mxu0 %v420
    %1078 = vmatprep.subr.mxu0 %v425
    %1079 = vmatpush1.msra.mxu0 %v424
    %1080 = vmatprep.subr.mxu0 %v429
    %1081 = vmatpush1.msra.mxu0 %v428
    %1082 = vmatprep.subr.mxu0 %v433
    %1083 = vmatpush1.msra.mxu0 %v432
    %1084 = vmatprep.subr.mxu0 %v437
    %1085 = vmatpush1.msra.mxu0 %v436
    %1086 = vmatprep.subr.mxu0 %v441
    %1087 = vmatpush1.msra.mxu0 %v440
    %1088 = vmatprep.subr.mxu0 %v445
    %1089 = vmatpush1.msra.mxu0 %v444
    %1090 = vmatprep.subr.mxu0 %v449
    %1091 = vmatpush1.msra.mxu0 %v448
    %1092 = vmatprep.subr.mxu0 %v453
    %1093 = vmatpush1.msra.mxu0 %v452
    %1094 = vmatprep.subr.mxu0 %v457
    %1095 = vmatpush1.msra.mxu0 %v456
    %1096 = vmatprep.subr.mxu0 %v461
    %1097 = vmatpush1.msra.mxu0 %v460
    %1098 = vmatprep.subr.mxu0 %v465
    %1099 = vmatpush1.msra.mxu0 %v464
    %1100 = vmatprep.subr.mxu0 %v469
    %1101 = vmatpush1.msra.mxu0 %v468
    %1102 = vmatprep.subr.mxu0 %v473
    %1103 = vmatpush1.msra.mxu0 %v472
    %1104 = vmatprep.subr.mxu0 0.0
    %1105 = vmatpush1.msra.mxu0 0.0
    %1106 = vmatprep.subr.mxu0 0.0
    %1107 = vmatpush1.msra.mxu0 0.0
    %1108 = vmatprep.subr.mxu0 0.0
    %1109 = vmatpush1.msra.mxu0 0.0
    %1110 = vmatprep.subr.mxu0 0.0
    %1111 = vmatpush1.msra.mxu0 0.0
    %1112 = vmatprep.subr.mxu0 0.0
    %1113 = vmatpush1.msra.mxu0 0.0
    %1114 = vmatprep.subr.mxu0 0.0
    %1115 = vmatpush1.msra.mxu0 0.0
    %1116 = vmatprep.subr.mxu0 0.0
    %1117 = vmatpush1.msra.mxu0 0.0
    %1118 = vmatprep.subr.mxu0 0.0
    %1119 = vmatpush1.msra.mxu0 0.0
    %1120 = vmatprep.subr.mxu0 0.0
    %1121 = vmatpush1.msra.mxu0 0.0
    %1122 = vmatprep.subr.mxu0 0.0
    %1123 = vmatpush1.msra.mxu0 0.0
    %1124 = vmatprep.subr.mxu0 0.0
    %1125 = vmatpush1.msra.mxu0 0.0
    %1126 = vmatprep.subr.mxu0 0.0
    %1127 = vmatpush1.msra.mxu0 0.0
    %1128 = vmatprep.subr.mxu0 0.0
    %1129 = vmatpush1.msra.mxu0 0.0
    %1130 = vmatprep.subr.mxu0 0.0
    %1131 = vmatpush1.msra.mxu0 0.0
    %1132 = vmatprep.subr.mxu0 0.0
    %1133 = vmatpush1.msra.mxu0 0.0
    %1134 = vmatprep.subr.mxu0 0.0
    %1135 = vmatpush1.msra.mxu0 0.0
    %1136 = vmatprep.mubr.f32.mxu0 0.0
    %1137 = vmatmul.mubr.f32.gmra.mrb[0].mxu0 %v991
    %v1138 = vpop.f32.mrb[0].mxu0
    %v1139 = vadd.f32 0.0, %v1138
    %v1140 = vpop.f32.mrb[0].mxu0
    %v1141 = vadd.f32 0.0, %v1140
    %1142 = vdwg.mxu0
    %v1143 = vadd.f32 %v997, %v1068
    %v1144 = vadd.f32 %v998, %v1070
    %v1145 = vadd.f32 %v999, %v1139
    %v1146 = vadd.f32 %v1000, %v1141
    %v1147 = vmul.f32 %v1143, 0.5
    %v1148 = vtanh.pop %v1147
    %v1149 = vmul.f32 %v1148, 0.5
    %v1150 = vadd.f32 %v1149, 0.5
    %v1151 = vmul.f32 %v1144, 0.5
    %v1152 = vtanh.pop %v1151
    %v1153 = vmul.f32 %v1152, 0.5
    %v1154 = vadd.f32 %v1153, 0.5
    %v1155 = vtanh.pop %v1145
    %v1156 = vmul.f32 %v1154, %v985
    %v1157 = vmul.f32 %v1150, %v1155
    %v1158 = vadd.f32 %v1156, %v1157
    %v1159 = vmul.f32 %v1146, 0.5
    %v1160 = vtanh.pop %v1159
    %v1161 = vmul.f32 %v1160, 0.5
    %v1162 = vadd.f32 %v1161, 0.5
    %v1163 = vtanh.pop %v1158
    %v1164 = vmul.f32 %v1162, %v1163
    %s1165 = scalar_lea.vmem [#allocation4], 24
    %1166 = vst [vmem:[%s1165] sm:$0xff] %v1164
    %s1167 = smul.u32 4, 4
    %s1168 = smul.addr %s1167, 8
    %s1169 = scalar_lea.vmem [#allocation5], %s1168
    %v1170 = vld [vmem:[%s1169] sm:$0xff]
    %v1171 = vld [vmem:[%s1169 + $0x8] sm:$0xff]
    %v1172 = vld [vmem:[%s1169 + $0x10] sm:$0xff]
    %v1173 = vld [vmem:[%s1169 + $0x18] sm:$0xff]
    %1174 = vmatprep.subr.mxu0 %v411
    %1175 = vmatpush1.msra.mxu0 %v410
    %1176 = vmatprep.subr.mxu0 %v415
    %1177 = vmatpush1.msra.mxu0 %v414
    %1178 = vmatprep.subr.mxu0 %v419
    %1179 = vmatpush1.msra.mxu0 %v418
    %1180 = vmatprep.subr.mxu0 %v423
    %1181 = vmatpush1.msra.mxu0 %v422
    %1182 = vmatprep.subr.mxu0 %v427
    %1183 = vmatpush1.msra.mxu0 %v426
    %1184 = vmatprep.subr.mxu0 %v431
    %1185 = vmatpush1.msra.mxu0 %v430
    %1186 = vmatprep.subr.mxu0 %v435
    %1187 = vmatpush1.msra.mxu0 %v434
    %1188 = vmatprep.subr.mxu0 %v439
    %1189 = vmatpush1.msra.mxu0 %v438
    %1190 = vmatprep.subr.mxu0 %v443
    %1191 = vmatpush1.msra.mxu0 %v442
    %1192 = vmatprep.subr.mxu0 %v447
    %1193 = vmatpush1.msra.mxu0 %v446
    %1194 = vmatprep.subr.mxu0 %v451
    %1195 = vmatpush1.msra.mxu0 %v450
    %1196 = vmatprep.subr.mxu0 %v455
    %1197 = vmatpush1.msra.mxu0 %v454
    %1198 = vmatprep.subr.mxu0 %v459
    %1199 = vmatpush1.msra.mxu0 %v458
    %1200 = vmatprep.subr.mxu0 %v463
    %1201 = vmatpush1.msra.mxu0 %v462
    %1202 = vmatprep.subr.mxu0 %v467
    %1203 = vmatpush1.msra.mxu0 %v466
    %1204 = vmatprep.subr.mxu0 %v471
    %1205 = vmatpush1.msra.mxu0 %v470
    %1206 = vmatprep.subr.mxu0 0.0
    %1207 = vmatpush1.msra.mxu0 0.0
    %1208 = vmatprep.subr.mxu0 0.0
    %1209 = vmatpush1.msra.mxu0 0.0
    %1210 = vmatprep.subr.mxu0 0.0
    %1211 = vmatpush1.msra.mxu0 0.0
    %1212 = vmatprep.subr.mxu0 0.0
    %1213 = vmatpush1.msra.mxu0 0.0
    %1214 = vmatprep.subr.mxu0 0.0
    %1215 = vmatpush1.msra.mxu0 0.0
    %1216 = vmatprep.subr.mxu0 0.0
    %1217 = vmatpush1.msra.mxu0 0.0
    %1218 = vmatprep.subr.mxu0 0.0
    %1219 = vmatpush1.msra.mxu0 0.0
    %1220 = vmatprep.subr.mxu0 0.0
    %1221 = vmatpush1.msra.mxu0 0.0
    %1222 = vmatprep.subr.mxu0 0.0
    %1223 = vmatpush1.msra.mxu0 0.0
    %1224 = vmatprep.subr.mxu0 0.0
    %1225 = vmatpush1.msra.mxu0 0.0
    %1226 = vmatprep.subr.mxu0 0.0
    %1227 = vmatpush1.msra.mxu0 0.0
    %1228 = vmatprep.subr.mxu0 0.0
    %1229 = vmatpush1.msra.mxu0 0.0
    %1230 = vmatprep.subr.mxu0 0.0
    %1231 = vmatpush1.msra.mxu0 0.0
    %1232 = vmatprep.subr.mxu0 0.0
    %1233 = vmatpush1.msra.mxu0 0.0
    %1234 = vmatprep.subr.mxu0 0.0
    %1235 = vmatpush1.msra.mxu0 0.0
    %1236 = vmatprep.subr.mxu0 0.0
    %1237 = vmatpush1.msra.mxu0 0.0
    %1238 = vmatprep.mubr.f32.mxu0 0.0
    %1239 = vmatmul.mubr.f32.gmra.mrb[0].mxu0 %v1164
    %v1240 = vpop.f32.mrb[0].mxu0
    %v1241 = vadd.f32 0.0, %v1240
    %v1242 = vpop.f32.mrb[0].mxu0
    %v1243 = vadd.f32 0.0, %v1242
    %1244 = vdwg.mxu0
    %1245 = vmatprep.subr.mxu0 %v413
    %1246 = vmatpush1.msra.mxu0 %v412
    %1247 = vmatprep.subr.mxu0 %v417
    %1248 = vmatpush1.msra.mxu0 %v416
    %1249 = vmatprep.subr.mxu0 %v421
    %1250 = vmatpush1.msra.mxu0 %v420
    %1251 = vmatprep.subr.mxu0 %v425
    %1252 = vmatpush1.msra.mxu0 %v424
    %1253 = vmatprep.subr.mxu0 %v429
    %1254 = vmatpush1.msra.mxu0 %v428
    %1255 = vmatprep.subr.mxu0 %v433
    %1256 = vmatpush1.msra.mxu0 %v432
    %1257 = vmatprep.subr.mxu0 %v437
    %1258 = vmatpush1.msra.mxu0 %v436
    %1259 = vmatprep.subr.mxu0 %v441
    %1260 = vmatpush1.msra.mxu0 %v440
    %1261 = vmatprep.subr.mxu0 %v445
    %1262 = vmatpush1.msra.mxu0 %v444
    %1263 = vmatprep.subr.mxu0 %v449
    %1264 = vmatpush1.msra.mxu0 %v448
    %1265 = vmatprep.subr.mxu0 %v453
    %1266 = vmatpush1.msra.mxu0 %v452
    %1267 = vmatprep.subr.mxu0 %v457
    %1268 = vmatpush1.msra.mxu0 %v456
    %1269 = vmatprep.subr.mxu0 %v461
    %1270 = vmatpush1.msra.mxu0 %v460
    %1271 = vmatprep.subr.mxu0 %v465
    %1272 = vmatpush1.msra.mxu0 %v464
    %1273 = vmatprep.subr.mxu0 %v469
    %1274 = vmatpush1.msra.mxu0 %v468
    %1275 = vmatprep.subr.mxu0 %v473
    %1276 = vmatpush1.msra.mxu0 %v472
    %1277 = vmatprep.subr.mxu0 0.0
    %1278 = vmatpush1.msra.mxu0 0.0
    %1279 = vmatprep.subr.mxu0 0.0
    %1280 = vmatpush1.msra.mxu0 0.0
    %1281 = vmatprep.subr.mxu0 0.0
    %1282 = vmatpush1.msra.mxu0 0.0
    %1283 = vmatprep.subr.mxu0 0.0
    %1284 = vmatpush1.msra.mxu0 0.0
    %1285 = vmatprep.subr.mxu0 0.0
    %1286 = vmatpush1.msra.mxu0 0.0
    %1287 = vmatprep.subr.mxu0 0.0
    %1288 = vmatpush1.msra.mxu0 0.0
    %1289 = vmatprep.subr.mxu0 0.0
    %1290 = vmatpush1.msra.mxu0 0.0
    %1291 = vmatprep.subr.mxu0 0.0
    %1292 = vmatpush1.msra.mxu0 0.0
    %1293 = vmatprep.subr.mxu0 0.0
    %1294 = vmatpush1.msra.mxu0 0.0
    %1295 = vmatprep.subr.mxu0 0.0
    %1296 = vmatpush1.msra.mxu0 0.0
    %1297 = vmatprep.subr.mxu0 0.0
    %1298 = vmatpush1.msra.mxu0 0.0
    %1299 = vmatprep.subr.mxu0 0.0
    %1300 = vmatpush1.msra.mxu0 0.0
    %1301 = vmatprep.subr.mxu0 0.0
    %1302 = vmatpush1.msra.mxu0 0.0
    %1303 = vmatprep.subr.mxu0 0.0
    %1304 = vmatpush1.msra.mxu0 0.0
    %1305 = vmatprep.subr.mxu0 0.0
    %1306 = vmatpush1.msra.mxu0 0.0
    %1307 = vmatprep.subr.mxu0 0.0
    %1308 = vmatpush1.msra.mxu0 0.0
    %1309 = vmatprep.mubr.f32.mxu0 0.0
    %1310 = vmatmul.mubr.f32.gmra.mrb[0].mxu0 %v1164
    %v1311 = vpop.f32.mrb[0].mxu0
    %v1312 = vadd.f32 0.0, %v1311
    %v1313 = vpop.f32.mrb[0].mxu0
    %v1314 = vadd.f32 0.0, %v1313
    %1315 = vdwg.mxu0
    %v1316 = vadd.f32 %v1170, %v1241
    %v1317 = vadd.f32 %v1171, %v1243
    %v1318 = vadd.f32 %v1172, %v1312
    %v1319 = vadd.f32 %v1173, %v1314
    %v1320 = vmul.f32 %v1316, 0.5
    %v1321 = vtanh.pop %v1320
    %v1322 = vmul.f32 %v1321, 0.5
    %v1323 = vadd.f32 %v1322, 0.5
    %v1324 = vmul.f32 %v1317, 0.5
    %v1325 = vtanh.pop %v1324
    %v1326 = vmul.f32 %v1325, 0.5
    %v1327 = vadd.f32 %v1326, 0.5
    %v1328 = vtanh.pop %v1318
    %v1329 = vmul.f32 %v1327, %v1158
    %v1330 = vmul.f32 %v1323, %v1328
    %v1331 = vadd.f32 %v1329, %v1330
    %v1332 = vmul.f32 %v1319, 0.5
    %v1333 = vtanh.pop %v1332
    %v1334 = vmul.f32 %v1333, 0.5
    %v1335 = vadd.f32 %v1334, 0.5
    %v1336 = vtanh.pop %v1331
    %v1337 = vmul.f32 %v1335, %v1336
    %s1338 = scalar_lea.vmem [#allocation4], 32
    %1339 = vst [vmem:[%s1338] sm:$0xff] %v1337
    %s1340 = smul.u32 5, 4
    %s1341 = smul.addr %s1340, 8
    %s1342 = scalar_lea.vmem [#allocation5], %s1341
    %v1343 = vld [vmem:[%s1342] sm:$0xff]
    %v1344 = vld [vmem:[%s1342 + $0x8] sm:$0xff]
    %v1345 = vld [vmem:[%s1342 + $0x10] sm:$0xff]
    %v1346 = vld [vmem:[%s1342 + $0x18] sm:$0xff]
    %1347 = vmatprep.subr.mxu0 %v411
    %1348 = vmatpush1.msra.mxu0 %v410
    %1349 = vmatprep.subr.mxu0 %v415
    %1350 = vmatpush1.msra.mxu0 %v414
    %1351 = vmatprep.subr.mxu0 %v419
    %1352 = vmatpush1.msra.mxu0 %v418
    %1353 = vmatprep.subr.mxu0 %v423
    %1354 = vmatpush1.msra.mxu0 %v422
    %1355 = vmatprep.subr.mxu0 %v427
    %1356 = vmatpush1.msra.mxu0 %v426
    %1357 = vmatprep.subr.mxu0 %v431
    %1358 = vmatpush1.msra.mxu0 %v430
    %1359 = vmatprep.subr.mxu0 %v435
    %1360 = vmatpush1.msra.mxu0 %v434
    %1361 = vmatprep.subr.mxu0 %v439
    %1362 = vmatpush1.msra.mxu0 %v438
    %1363 = vmatprep.subr.mxu0 %v443
    %1364 = vmatpush1.msra.mxu0 %v442
    %1365 = vmatprep.subr.mxu0 %v447
    %1366 = vmatpush1.msra.mxu0 %v446
    %1367 = vmatprep.subr.mxu0 %v451
    %1368 = vmatpush1.msra.mxu0 %v450
    %1369 = vmatprep.subr.mxu0 %v455
    %1370 = vmatpush1.msra.mxu0 %v454
    %1371 = vmatprep.subr.mxu0 %v459
    %1372 = vmatpush1.msra.mxu0 %v458
    %1373 = vmatprep.subr.mxu0 %v463
    %1374 = vmatpush1.msra.mxu0 %v462
    %1375 = vmatprep.subr.mxu0 %v467
    %1376 = vmatpush1.msra.mxu0 %v466
    %1377 = vmatprep.subr.mxu0 %v471
    %1378 = vmatpush1.msra.mxu0 %v470
    %1379 = vmatprep.subr.mxu0 0.0
    %1380 = vmatpush1.msra.mxu0 0.0
    %1381 = vmatprep.subr.mxu0 0.0
    %1382 = vmatpush1.msra.mxu0 0.0
    %1383 = vmatprep.subr.mxu0 0.0
    %1384 = vmatpush1.msra.mxu0 0.0
    %1385 = vmatprep.subr.mxu0 0.0
    %1386 = vmatpush1.msra.mxu0 0.0
    %1387 = vmatprep.subr.mxu0 0.0
    %1388 = vmatpush1.msra.mxu0 0.0
    %1389 = vmatprep.subr.mxu0 0.0
    %1390 = vmatpush1.msra.mxu0 0.0
    %1391 = vmatprep.subr.mxu0 0.0
    %1392 = vmatpush1.msra.mxu0 0.0
    %1393 = vmatprep.subr.mxu0 0.0
    %1394 = vmatpush1.msra.mxu0 0.0
    %1395 = vmatprep.subr.mxu0 0.0
    %1396 = vmatpush1.msra.mxu0 0.0
    %1397 = vmatprep.subr.mxu0 0.0
    %1398 = vmatpush1.msra.mxu0 0.0
    %1399 = vmatprep.subr.mxu0 0.0
    %1400 = vmatpush1.msra.mxu0 0.0
    %1401 = vmatprep.subr.mxu0 0.0
    %1402 = vmatpush1.msra.mxu0 0.0
    %1403 = vmatprep.subr.mxu0 0.0
    %1404 = vmatpush1.msra.mxu0 0.0
    %1405 = vmatprep.subr.mxu0 0.0
    %1406 = vmatpush1.msra.mxu0 0.0
    %1407 = vmatprep.subr.mxu0 0.0
    %1408 = vmatpush1.msra.mxu0 0.0
    %1409 = vmatprep.subr.mxu0 0.0
    %1410 = vmatpush1.msra.mxu0 0.0
    %1411 = vmatprep.mubr.f32.mxu0 0.0
    %1412 = vmatmul.mubr.f32.gmra.mrb[0].mxu0 %v1337
    %v1413 = vpop.f32.mrb[0].mxu0
    %v1414 = vadd.f32 0.0, %v1413
    %v1415 = vpop.f32.mrb[0].mxu0
    %v1416 = vadd.f32 0.0, %v1415
    %1417 = vdwg.mxu0
    %1418 = vmatprep.subr.mxu0 %v413
    %1419 = vmatpush1.msra.mxu0 %v412
    %1420 = vmatprep.subr.mxu0 %v417
    %1421 = vmatpush1.msra.mxu0 %v416
    %1422 = vmatprep.subr.mxu0 %v421
    %1423 = vmatpush1.msra.mxu0 %v420
    %1424 = vmatprep.subr.mxu0 %v425
    %1425 = vmatpush1.msra.mxu0 %v424
    %1426 = vmatprep.subr.mxu0 %v429
    %1427 = vmatpush1.msra.mxu0 %v428
    %1428 = vmatprep.subr.mxu0 %v433
    %1429 = vmatpush1.msra.mxu0 %v432
    %1430 = vmatprep.subr.mxu0 %v437
    %1431 = vmatpush1.msra.mxu0 %v436
    %1432 = vmatprep.subr.mxu0 %v441
    %1433 = vmatpush1.msra.mxu0 %v440
    %1434 = vmatprep.subr.mxu0 %v445
    %1435 = vmatpush1.msra.mxu0 %v444
    %1436 = vmatprep.subr.mxu0 %v449
    %1437 = vmatpush1.msra.mxu0 %v448
    %1438 = vmatprep.subr.mxu0 %v453
    %1439 = vmatpush1.msra.mxu0 %v452
    %1440 = vmatprep.subr.mxu0 %v457
    %1441 = vmatpush1.msra.mxu0 %v456
    %1442 = vmatprep.subr.mxu0 %v461
    %1443 = vmatpush1.msra.mxu0 %v460
    %1444 = vmatprep.subr.mxu0 %v465
    %1445 = vmatpush1.msra.mxu0 %v464
    %1446 = vmatprep.subr.mxu0 %v469
    %1447 = vmatpush1.msra.mxu0 %v468
    %1448 = vmatprep.subr.mxu0 %v473
    %1449 = vmatpush1.msra.mxu0 %v472
    %1450 = vmatprep.subr.mxu0 0.0
    %1451 = vmatpush1.msra.mxu0 0.0
    %1452 = vmatprep.subr.mxu0 0.0
    %1453 = vmatpush1.msra.mxu0 0.0
    %1454 = vmatprep.subr.mxu0 0.0
    %1455 = vmatpush1.msra.mxu0 0.0
    %1456 = vmatprep.subr.mxu0 0.0
    %1457 = vmatpush1.msra.mxu0 0.0
    %1458 = vmatprep.subr.mxu0 0.0
    %1459 = vmatpush1.msra.mxu0 0.0
    %1460 = vmatprep.subr.mxu0 0.0
    %1461 = vmatpush1.msra.mxu0 0.0
    %1462 = vmatprep.subr.mxu0 0.0
    %1463 = vmatpush1.msra.mxu0 0.0
    %1464 = vmatprep.subr.mxu0 0.0
    %1465 = vmatpush1.msra.mxu0 0.0
    %1466 = vmatprep.subr.mxu0 0.0
    %1467 = vmatpush1.msra.mxu0 0.0
    %1468 = vmatprep.subr.mxu0 0.0
    %1469 = vmatpush1.msra.mxu0 0.0
    %1470 = vmatprep.subr.mxu0 0.0
    %1471 = vmatpush1.msra.mxu0 0.0
    %1472 = vmatprep.subr.mxu0 0.0
    %1473 = vmatpush1.msra.mxu0 0.0
    %1474 = vmatprep.subr.mxu0 0.0
    %1475 = vmatpush1.msra.mxu0 0.0
    %1476 = vmatprep.subr.mxu0 0.0
    %1477 = vmatpush1.msra.mxu0 0.0
    %1478 = vmatprep.subr.mxu0 0.0
    %1479 = vmatpush1.msra.mxu0 0.0
    %1480 = vmatprep.subr.mxu0 0.0
    %1481 = vmatpush1.msra.mxu0 0.0
    %1482 = vmatprep.mubr.f32.mxu0 0.0
    %1483 = vmatmul.mubr.f32.gmra.mrb[0].mxu0 %v1337
    %v1484 = vpop.f32.mrb[0].mxu0
    %v1485 = vadd.f32 0.0, %v1484
    %v1486 = vpop.f32.mrb[0].mxu0
    %v1487 = vadd.f32 0.0, %v1486
    %1488 = vdwg.mxu0
    %v1489 = vadd.f32 %v1343, %v1414
    %v1490 = vadd.f32 %v1344, %v1416
    %v1491 = vadd.f32 %v1345, %v1485
    %v1492 = vadd.f32 %v1346, %v1487
    %v1493 = vmul.f32 %v1489, 0.5
    %v1494 = vtanh.pop %v1493
    %v1495 = vmul.f32 %v1494, 0.5
    %v1496 = vadd.f32 %v1495, 0.5
    %v1497 = vmul.f32 %v1490, 0.5
    %v1498 = vtanh.pop %v1497
    %v1499 = vmul.f32 %v1498, 0.5
    %v1500 = vadd.f32 %v1499, 0.5
    %v1501 = vtanh.pop %v1491
    %v1502 = vmul.f32 %v1500, %v1331
    %v1503 = vmul.f32 %v1496, %v1501
    %v1504 = vadd.f32 %v1502, %v1503
    %v1505 = vmul.f32 %v1492, 0.5
    %v1506 = vtanh.pop %v1505
    %v1507 = vmul.f32 %v1506, 0.5
    %v1508 = vadd.f32 %v1507, 0.5
    %v1509 = vtanh.pop %v1504
    %v1510 = vmul.f32 %v1508, %v1509
    %s1511 = scalar_lea.vmem [#allocation4], 40
    %1512 = vst [vmem:[%s1511] sm:$0xff] %v1510
    %s1513 = smul.u32 6, 4
    %s1514 = smul.addr %s1513, 8
    %s1515 = scalar_lea.vmem [#allocation5], %s1514
    %v1516 = vld [vmem:[%s1515] sm:$0xff]
    %v1517 = vld [vmem:[%s1515 + $0x8] sm:$0xff]
    %v1518 = vld [vmem:[%s1515 + $0x10] sm:$0xff]
    %v1519 = vld [vmem:[%s1515 + $0x18] sm:$0xff]
    %1520 = vmatprep.subr.mxu0 %v411
    %1521 = vmatpush1.msra.mxu0 %v410
    %1522 = vmatprep.subr.mxu0 %v415
    %1523 = vmatpush1.msra.mxu0 %v414
    %1524 = vmatprep.subr.mxu0 %v419
    %1525 = vmatpush1.msra.mxu0 %v418
    %1526 = vmatprep.subr.mxu0 %v423
    %1527 = vmatpush1.msra.mxu0 %v422
    %1528 = vmatprep.subr.mxu0 %v427
    %1529 = vmatpush1.msra.mxu0 %v426
    %1530 = vmatprep.subr.mxu0 %v431
    %1531 = vmatpush1.msra.mxu0 %v430
    %1532 = vmatprep.subr.mxu0 %v435
    %1533 = vmatpush1.msra.mxu0 %v434
    %1534 = vmatprep.subr.mxu0 %v439
    %1535 = vmatpush1.msra.mxu0 %v438
    %1536 = vmatprep.subr.mxu0 %v443
    %1537 = vmatpush1.msra.mxu0 %v442
    %1538 = vmatprep.subr.mxu0 %v447
    %1539 = vmatpush1.msra.mxu0 %v446
    %1540 = vmatprep.subr.mxu0 %v451
    %1541 = vmatpush1.msra.mxu0 %v450
    %1542 = vmatprep.subr.mxu0 %v455
    %1543 = vmatpush1.msra.mxu0 %v454
    %1544 = vmatprep.subr.mxu0 %v459
    %1545 = vmatpush1.msra.mxu0 %v458
    %1546 = vmatprep.subr.mxu0 %v463
    %1547 = vmatpush1.msra.mxu0 %v462
    %1548 = vmatprep.subr.mxu0 %v467
    %1549 = vmatpush1.msra.mxu0 %v466
    %1550 = vmatprep.subr.mxu0 %v471
    %1551 = vmatpush1.msra.mxu0 %v470
    %1552 = vmatprep.subr.mxu0 0.0
    %1553 = vmatpush1.msra.mxu0 0.0
    %1554 = vmatprep.subr.mxu0 0.0
    %1555 = vmatpush1.msra.mxu0 0.0
    %1556 = vmatprep.subr.mxu0 0.0
    %1557 = vmatpush1.msra.mxu0 0.0
    %1558 = vmatprep.subr.mxu0 0.0
    %1559 = vmatpush1.msra.mxu0 0.0
    %1560 = vmatprep.subr.mxu0 0.0
    %1561 = vmatpush1.msra.mxu0 0.0
    %1562 = vmatprep.subr.mxu0 0.0
    %1563 = vmatpush1.msra.mxu0 0.0
    %1564 = vmatprep.subr.mxu0 0.0
    %1565 = vmatpush1.msra.mxu0 0.0
    %1566 = vmatprep.subr.mxu0 0.0
    %1567 = vmatpush1.msra.mxu0 0.0
    %1568 = vmatprep.subr.mxu0 0.0
    %1569 = vmatpush1.msra.mxu0 0.0
    %1570 = vmatprep.subr.mxu0 0.0
    %1571 = vmatpush1.msra.mxu0 0.0
    %1572 = vmatprep.subr.mxu0 0.0
    %1573 = vmatpush1.msra.mxu0 0.0
    %1574 = vmatprep.subr.mxu0 0.0
    %1575 = vmatpush1.msra.mxu0 0.0
    %1576 = vmatprep.subr.mxu0 0.0
    %1577 = vmatpush1.msra.mxu0 0.0
    %1578 = vmatprep.subr.mxu0 0.0
    %1579 = vmatpush1.msra.mxu0 0.0
    %1580 = vmatprep.subr.mxu0 0.0
    %1581 = vmatpush1.msra.mxu0 0.0
    %1582 = vmatprep.subr.mxu0 0.0
    %1583 = vmatpush1.msra.mxu0 0.0
    %1584 = vmatprep.mubr.f32.mxu0 0.0
    %1585 = vmatmul.mubr.f32.gmra.mrb[0].mxu0 %v1510
    %v1586 = vpop.f32.mrb[0].mxu0
    %v1587 = vadd.f32 0.0, %v1586
    %v1588 = vpop.f32.mrb[0].mxu0
    %v1589 = vadd.f32 0.0, %v1588
    %1590 = vdwg.mxu0
    %1591 = vmatprep.subr.mxu0 %v413
    %1592 = vmatpush1.msra.mxu0 %v412
    %1593 = vmatprep.subr.mxu0 %v417
    %1594 = vmatpush1.msra.mxu0 %v416
    %1595 = vmatprep.subr.mxu0 %v421
    %1596 = vmatpush1.msra.mxu0 %v420
    %1597 = vmatprep.subr.mxu0 %v425
    %1598 = vmatpush1.msra.mxu0 %v424
    %1599 = vmatprep.subr.mxu0 %v429
    %1600 = vmatpush1.msra.mxu0 %v428
    %1601 = vmatprep.subr.mxu0 %v433
    %1602 = vmatpush1.msra.mxu0 %v432
    %1603 = vmatprep.subr.mxu0 %v437
    %1604 = vmatpush1.msra.mxu0 %v436
    %1605 = vmatprep.subr.mxu0 %v441
    %1606 = vmatpush1.msra.mxu0 %v440
    %1607 = vmatprep.subr.mxu0 %v445
    %1608 = vmatpush1.msra.mxu0 %v444
    %1609 = vmatprep.subr.mxu0 %v449
    %1610 = vmatpush1.msra.mxu0 %v448
    %1611 = vmatprep.subr.mxu0 %v453
    %1612 = vmatpush1.msra.mxu0 %v452
    %1613 = vmatprep.subr.mxu0 %v457
    %1614 = vmatpush1.msra.mxu0 %v456
    %1615 = vmatprep.subr.mxu0 %v461
    %1616 = vmatpush1.msra.mxu0 %v460
    %1617 = vmatprep.subr.mxu0 %v465
    %1618 = vmatpush1.msra.mxu0 %v464
    %1619 = vmatprep.subr.mxu0 %v469
    %1620 = vmatpush1.msra.mxu0 %v468
    %1621 = vmatprep.subr.mxu0 %v473
    %1622 = vmatpush1.msra.mxu0 %v472
    %1623 = vmatprep.subr.mxu0 0.0
    %1624 = vmatpush1.msra.mxu0 0.0
    %1625 = vmatprep.subr.mxu0 0.0
    %1626 = vmatpush1.msra.mxu0 0.0
    %1627 = vmatprep.subr.mxu0 0.0
    %1628 = vmatpush1.msra.mxu0 0.0
    %1629 = vmatprep.subr.mxu0 0.0
    %1630 = vmatpush1.msra.mxu0 0.0
    %1631 = vmatprep.subr.mxu0 0.0
    %1632 = vmatpush1.msra.mxu0 0.0
    %1633 = vmatprep.subr.mxu0 0.0
    %1634 = vmatpush1.msra.mxu0 0.0
    %1635 = vmatprep.subr.mxu0 0.0
    %1636 = vmatpush1.msra.mxu0 0.0
    %1637 = vmatprep.subr.mxu0 0.0
    %1638 = vmatpush1.msra.mxu0 0.0
    %1639 = vmatprep.subr.mxu0 0.0
    %1640 = vmatpush1.msra.mxu0 0.0
    %1641 = vmatprep.subr.mxu0 0.0
    %1642 = vmatpush1.msra.mxu0 0.0
    %1643 = vmatprep.subr.mxu0 0.0
    %1644 = vmatpush1.msra.mxu0 0.0
    %1645 = vmatprep.subr.mxu0 0.0
    %1646 = vmatpush1.msra.mxu0 0.0
    %1647 = vmatprep.subr.mxu0 0.0
    %1648 = vmatpush1.msra.mxu0 0.0
    %1649 = vmatprep.subr.mxu0 0.0
    %1650 = vmatpush1.msra.mxu0 0.0
    %1651 = vmatprep.subr.mxu0 0.0
    %1652 = vmatpush1.msra.mxu0 0.0
    %1653 = vmatprep.subr.mxu0 0.0
    %1654 = vmatpush1.msra.mxu0 0.0
    %1655 = vmatprep.mubr.f32.mxu0 0.0
    %1656 = vmatmul.mubr.f32.gmra.mrb[0].mxu0 %v1510
    %v1657 = vpop.f32.mrb[0].mxu0
    %v1658 = vadd.f32 0.0, %v1657
    %v1659 = vpop.f32.mrb[0].mxu0
    %v1660 = vadd.f32 0.0, %v1659
    %1661 = vdwg.mxu0
    %v1662 = vadd.f32 %v1516, %v1587
    %v1663 = vadd.f32 %v1517, %v1589
    %v1664 = vadd.f32 %v1518, %v1658
    %v1665 = vadd.f32 %v1519, %v1660
    %v1666 = vmul.f32 %v1662, 0.5
    %v1667 = vtanh.pop %v1666
    %v1668 = vmul.f32 %v1667, 0.5
    %v1669 = vadd.f32 %v1668, 0.5
    %v1670 = vmul.f32 %v1663, 0.5
    %v1671 = vtanh.pop %v1670
    %v1672 = vmul.f32 %v1671, 0.5
    %v1673 = vadd.f32 %v1672, 0.5
    %v1674 = vtanh.pop %v1664
    %v1675 = vmul.f32 %v1673, %v1504
    %v1676 = vmul.f32 %v1669, %v1674
    %v1677 = vadd.f32 %v1675, %v1676
    %v1678 = vmul.f32 %v1665, 0.5
    %v1679 = vtanh.pop %v1678
    %v1680 = vmul.f32 %v1679, 0.5
    %v1681 = vadd.f32 %v1680, 0.5
    %v1682 = vtanh.pop %v1677
    %v1683 = vmul.f32 %v1681, %v1682
    %s1684 = scalar_lea.vmem [#allocation4], 48
    %1685 = vst [vmem:[%s1684] sm:$0xff] %v1683
    %s1686 = smul.u32 7, 4
    %s1687 = smul.addr %s1686, 8
    %s1688 = scalar_lea.vmem [#allocation5], %s1687
    %v1689 = vld [vmem:[%s1688] sm:$0xff]
    %v1690 = vld [vmem:[%s1688 + $0x8] sm:$0xff]
    %v1691 = vld [vmem:[%s1688 + $0x10] sm:$0xff]
    %v1692 = vld [vmem:[%s1688 + $0x18] sm:$0xff]
    %1693 = vmatprep.subr.mxu0 %v411
    %1694 = vmatpush1.msra.mxu0 %v410
    %1695 = vmatprep.subr.mxu0 %v415
    %1696 = vmatpush1.msra.mxu0 %v414
    %1697 = vmatprep.subr.mxu0 %v419
    %1698 = vmatpush1.msra.mxu0 %v418
    %1699 = vmatprep.subr.mxu0 %v423
    %1700 = vmatpush1.msra.mxu0 %v422
    %1701 = vmatprep.subr.mxu0 %v427
    %1702 = vmatpush1.msra.mxu0 %v426
    %1703 = vmatprep.subr.mxu0 %v431
    %1704 = vmatpush1.msra.mxu0 %v430
    %1705 = vmatprep.subr.mxu0 %v435
    %1706 = vmatpush1.msra.mxu0 %v434
    %1707 = vmatprep.subr.mxu0 %v439
    %1708 = vmatpush1.msra.mxu0 %v438
    %1709 = vmatprep.subr.mxu0 %v443
    %1710 = vmatpush1.msra.mxu0 %v442
    %1711 = vmatprep.subr.mxu0 %v447
    %1712 = vmatpush1.msra.mxu0 %v446
    %1713 = vmatprep.subr.mxu0 %v451
    %1714 = vmatpush1.msra.mxu0 %v450
    %1715 = vmatprep.subr.mxu0 %v455
    %1716 = vmatpush1.msra.mxu0 %v454
    %1717 = vmatprep.subr.mxu0 %v459
    %1718 = vmatpush1.msra.mxu0 %v458
    %1719 = vmatprep.subr.mxu0 %v463
    %1720 = vmatpush1.msra.mxu0 %v462
    %1721 = vmatprep.subr.mxu0 %v467
    %1722 = vmatpush1.msra.mxu0 %v466
    %1723 = vmatprep.subr.mxu0 %v471
    %1724 = vmatpush1.msra.mxu0 %v470
    %1725 = vmatprep.subr.mxu0 0.0
    %1726 = vmatpush1.msra.mxu0 0.0
    %1727 = vmatprep.subr.mxu0 0.0
    %1728 = vmatpush1.msra.mxu0 0.0
    %1729 = vmatprep.subr.mxu0 0.0
    %1730 = vmatpush1.msra.mxu0 0.0
    %1731 = vmatprep.subr.mxu0 0.0
    %1732 = vmatpush1.msra.mxu0 0.0
    %1733 = vmatprep.subr.mxu0 0.0
    %1734 = vmatpush1.msra.mxu0 0.0
    %1735 = vmatprep.subr.mxu0 0.0
    %1736 = vmatpush1.msra.mxu0 0.0
    %1737 = vmatprep.subr.mxu0 0.0
    %1738 = vmatpush1.msra.mxu0 0.0
    %1739 = vmatprep.subr.mxu0 0.0
    %1740 = vmatpush1.msra.mxu0 0.0
    %1741 = vmatprep.subr.mxu0 0.0
    %1742 = vmatpush1.msra.mxu0 0.0
    %1743 = vmatprep.subr.mxu0 0.0
    %1744 = vmatpush1.msra.mxu0 0.0
    %1745 = vmatprep.subr.mxu0 0.0
    %1746 = vmatpush1.msra.mxu0 0.0
    %1747 = vmatprep.subr.mxu0 0.0
    %1748 = vmatpush1.msra.mxu0 0.0
    %1749 = vmatprep.subr.mxu0 0.0
    %1750 = vmatpush1.msra.mxu0 0.0
    %1751 = vmatprep.subr.mxu0 0.0
    %1752 = vmatpush1.msra.mxu0 0.0
    %1753 = vmatprep.subr.mxu0 0.0
    %1754 = vmatpush1.msra.mxu0 0.0
    %1755 = vmatprep.subr.mxu0 0.0
    %1756 = vmatpush1.msra.mxu0 0.0
    %1757 = vmatprep.mubr.f32.mxu0 0.0
    %1758 = vmatmul.mubr.f32.gmra.mrb[0].mxu0 %v1683
    %v1759 = vpop.f32.mrb[0].mxu0
    %v1760 = vadd.f32 0.0, %v1759
    %v1761 = vpop.f32.mrb[0].mxu0
    %v1762 = vadd.f32 0.0, %v1761
    %1763 = vdwg.mxu0
    %1764 = vmatprep.subr.mxu0 %v413
    %1765 = vmatpush1.msra.mxu0 %v412
    %1766 = vmatprep.subr.mxu0 %v417
    %1767 = vmatpush1.msra.mxu0 %v416
    %1768 = vmatprep.subr.mxu0 %v421
    %1769 = vmatpush1.msra.mxu0 %v420
    %1770 = vmatprep.subr.mxu0 %v425
    %1771 = vmatpush1.msra.mxu0 %v424
    %1772 = vmatprep.subr.mxu0 %v429
    %1773 = vmatpush1.msra.mxu0 %v428
    %1774 = vmatprep.subr.mxu0 %v433
    %1775 = vmatpush1.msra.mxu0 %v432
    %1776 = vmatprep.subr.mxu0 %v437
    %1777 = vmatpush1.msra.mxu0 %v436
    %1778 = vmatprep.subr.mxu0 %v441
    %1779 = vmatpush1.msra.mxu0 %v440
    %1780 = vmatprep.subr.mxu0 %v445
    %1781 = vmatpush1.msra.mxu0 %v444
    %1782 = vmatprep.subr.mxu0 %v449
    %1783 = vmatpush1.msra.mxu0 %v448
    %1784 = vmatprep.subr.mxu0 %v453
    %1785 = vmatpush1.msra.mxu0 %v452
    %1786 = vmatprep.subr.mxu0 %v457
    %1787 = vmatpush1.msra.mxu0 %v456
    %1788 = vmatprep.subr.mxu0 %v461
    %1789 = vmatpush1.msra.mxu0 %v460
    %1790 = vmatprep.subr.mxu0 %v465
    %1791 = vmatpush1.msra.mxu0 %v464
    %1792 = vmatprep.subr.mxu0 %v469
    %1793 = vmatpush1.msra.mxu0 %v468
    %1794 = vmatprep.subr.mxu0 %v473
    %1795 = vmatpush1.msra.mxu0 %v472
    %1796 = vmatprep.subr.mxu0 0.0
    %1797 = vmatpush1.msra.mxu0 0.0
    %1798 = vmatprep.subr.mxu0 0.0
    %1799 = vmatpush1.msra.mxu0 0.0
    %1800 = vmatprep.subr.mxu0 0.0
    %1801 = vmatpush1.msra.mxu0 0.0
    %1802 = vmatprep.subr.mxu0 0.0
    %1803 = vmatpush1.msra.mxu0 0.0
    %1804 = vmatprep.subr.mxu0 0.0
    %1805 = vmatpush1.msra.mxu0 0.0
    %1806 = vmatprep.subr.mxu0 0.0
    %1807 = vmatpush1.msra.mxu0 0.0
    %1808 = vmatprep.subr.mxu0 0.0
    %1809 = vmatpush1.msra.mxu0 0.0
    %1810 = vmatprep.subr.mxu0 0.0
    %1811 = vmatpush1.msra.mxu0 0.0
    %1812 = vmatprep.subr.mxu0 0.0
    %1813 = vmatpush1.msra.mxu0 0.0
    %1814 = vmatprep.subr.mxu0 0.0
    %1815 = vmatpush1.msra.mxu0 0.0
    %1816 = vmatprep.subr.mxu0 0.0
    %1817 = vmatpush1.msra.mxu0 0.0
    %1818 = vmatprep.subr.mxu0 0.0
    %1819 = vmatpush1.msra.mxu0 0.0
    %1820 = vmatprep.subr.mxu0 0.0
    %1821 = vmatpush1.msra.mxu0 0.0
    %1822 = vmatprep.subr.mxu0 0.0
    %1823 = vmatpush1.msra.mxu0 0.0
    %1824 = vmatprep.subr.mxu0 0.0
    %1825 = vmatpush1.msra.mxu0 0.0
    %1826 = vmatprep.subr.mxu0 0.0
    %1827 = vmatpush1.msra.mxu0 0.0
    %1828 = vmatprep.mubr.f32.mxu0 0.0
    %1829 = vmatmul.mubr.f32.gmra.mrb[0].mxu0 %v1683
    %v1830 = vpop.f32.mrb[0].mxu0
    %v1831 = vadd.f32 0.0, %v1830
    %v1832 = vpop.f32.mrb[0].mxu0
    %v1833 = vadd.f32 0.0, %v1832
    %1834 = vdwg.mxu0
    %v1835 = vadd.f32 %v1689, %v1760
    %v1836 = vadd.f32 %v1690, %v1762
    %v1837 = vadd.f32 %v1691, %v1831
    %v1838 = vadd.f32 %v1692, %v1833
    %v1839 = vmul.f32 %v1835, 0.5
    %v1840 = vtanh.pop %v1839
    %v1841 = vmul.f32 %v1840, 0.5
    %v1842 = vadd.f32 %v1841, 0.5
    %v1843 = vmul.f32 %v1836, 0.5
    %v1844 = vtanh.pop %v1843
    %v1845 = vmul.f32 %v1844, 0.5
    %v1846 = vadd.f32 %v1845, 0.5
    %v1847 = vtanh.pop %v1837
    %v1848 = vmul.f32 %v1846, %v1677
    %v1849 = vmul.f32 %v1842, %v1847
    %v1850 = vadd.f32 %v1848, %v1849
    %v1851 = vmul.f32 %v1838, 0.5
    %v1852 = vtanh.pop %v1851
    %v1853 = vmul.f32 %v1852, 0.5
    %v1854 = vadd.f32 %v1853, 0.5
    %v1855 = vtanh.pop %v1850
    %v1856 = vmul.f32 %v1854, %v1855
    %s1857 = scalar_lea.vmem [#allocation4], 56
    %1858 = vst [vmem:[%s1857] sm:$0xff] %v1856
    %1859 = vst [vmem:[#allocation2] sm:$0xff] %v1856
    %1860 = vst [vmem:[#allocation3] sm:$0xff] %v1850
    %v1861 = vld [vmem:[#allocation4] sm:$0xff]
    %v1862 = vld [vmem:[#allocation4 + $0x8] sm:$0xff]
    %v1863 = vld [vmem:[#allocation4 + $0x10] sm:$0xff]
    %v1864 = vld [vmem:[#allocation4 + $0x18] sm:$0xff]
    %v1865 = vld [vmem:[#allocation4 + $0x20] sm:$0xff]
    %v1866 = vld [vmem:[#allocation4 + $0x28] sm:$0xff]
    %v1867 = vld [vmem:[#allocation4 + $0x30] sm:$0xff]
    %v1868 = vld [vmem:[#allocation4 + $0x38] sm:$0xff]
    %v1869 = vld [vmem:[#allocation9] sm:$0xff]
    %v1870 = vld [vmem:[#allocation9 + $0x8] sm:$0xff]
    %v1871 = vld [vmem:[#allocation9 + $0x10] sm:$0xff]
    %v1872 = vld [vmem:[#allocation9 + $0x18] sm:$0xff]
    %v1873 = vld [vmem:[#allocation9 + $0x20] sm:$0xff]
    %v1874 = vld [vmem:[#allocation9 + $0x28] sm:$0xff]
    %v1875 = vld [vmem:[#allocation9 + $0x30] sm:$0xff]
    %v1876 = vld [vmem:[#allocation9 + $0x38] sm:$0xff]
    %v1877 = vld [vmem:[#allocation9 + $0x40] sm:$0xff]
    %v1878 = vld [vmem:[#allocation9 + $0x48] sm:$0xff]
    %v1879 = vld [vmem:[#allocation9 + $0x50] sm:$0xff]
    %v1880 = vld [vmem:[#allocation9 + $0x58] sm:$0xff]
    %v1881 = vld [vmem:[#allocation9 + $0x60] sm:$0xff]
    %v1882 = vld [vmem:[#allocation9 + $0x68] sm:$0xff]
    %v1883 = vld [vmem:[#allocation9 + $0x70] sm:$0xff]
    %v1884 = vld [vmem:[#allocation9 + $0x78] sm:$0xff]
    %v1885 = vld [vmem:[%s5] sm:$0x1]
    %v1887 = vlaneseq
    %v1888 = vshrl.u32 %v1887, 7
    %v1889 = vsub.s32 0, %v1888
    %v1890 = vrot.slane %v1885, %v1889
    %1892 = vmatprep.subr.mxu0 0.0
    %1893 = vmatpush1.msra.mxu0 %v1869
    %1894 = vmatprep.subr.mxu0 0.0
    %1895 = vmatpush1.msra.mxu0 %v1870
    %1896 = vmatprep.subr.mxu0 0.0
    %1897 = vmatpush1.msra.mxu0 %v1871
    %1898 = vmatprep.subr.mxu0 0.0
    %1899 = vmatpush1.msra.mxu0 %v1872
    %1900 = vmatprep.subr.mxu0 0.0
    %1901 = vmatpush1.msra.mxu0 %v1873
    %1902 = vmatprep.subr.mxu0 0.0
    %1903 = vmatpush1.msra.mxu0 %v1874
    %1904 = vmatprep.subr.mxu0 0.0
    %1905 = vmatpush1.msra.mxu0 %v1875
    %1906 = vmatprep.subr.mxu0 0.0
    %1907 = vmatpush1.msra.mxu0 %v1876
    %1908 = vmatprep.subr.mxu0 0.0
    %1909 = vmatpush1.msra.mxu0 %v1877
    %1910 = vmatprep.subr.mxu0 0.0
    %1911 = vmatpush1.msra.mxu0 %v1878
    %1912 = vmatprep.subr.mxu0 0.0
    %1913 = vmatpush1.msra.mxu0 %v1879
    %1914 = vmatprep.subr.mxu0 0.0
    %1915 = vmatpush1.msra.mxu0 %v1880
    %1916 = vmatprep.subr.mxu0 0.0
    %1917 = vmatpush1.msra.mxu0 %v1881
    %1918 = vmatprep.subr.mxu0 0.0
    %1919 = vmatpush1.msra.mxu0 %v1882
    %1920 = vmatprep.subr.mxu0 0.0
    %1921 = vmatpush1.msra.mxu0 %v1883
    %1922 = vmatprep.subr.mxu0 0.0
    %1923 = vmatpush1.msra.mxu0 %v1884
    %1924 = vmatprep.subr.mxu0 0.0
    %1925 = vmatpush1.msra.mxu0 0.0
    %1926 = vmatprep.subr.mxu0 0.0
    %1927 = vmatpush1.msra.mxu0 0.0
    %1928 = vmatprep.subr.mxu0 0.0
    %1929 = vmatpush1.msra.mxu0 0.0
    %1930 = vmatprep.subr.mxu0 0.0
    %1931 = vmatpush1.msra.mxu0 0.0
    %1932 = vmatprep.subr.mxu0 0.0
    %1933 = vmatpush1.msra.mxu0 0.0
    %1934 = vmatprep.subr.mxu0 0.0
    %1935 = vmatpush1.msra.mxu0 0.0
    %1936 = vmatprep.subr.mxu0 0.0
    %1937 = vmatpush1.msra.mxu0 0.0
    %1938 = vmatprep.subr.mxu0 0.0
    %1939 = vmatpush1.msra.mxu0 0.0
    %1940 = vmatprep.subr.mxu0 0.0
    %1941 = vmatpush1.msra.mxu0 0.0
    %1942 = vmatprep.subr.mxu0 0.0
    %1943 = vmatpush1.msra.mxu0 0.0
    %1944 = vmatprep.subr.mxu0 0.0
    %1945 = vmatpush1.msra.mxu0 0.0
    %1946 = vmatprep.subr.mxu0 0.0
    %1947 = vmatpush1.msra.mxu0 0.0
    %1948 = vmatprep.subr.mxu0 0.0
    %1949 = vmatpush1.msra.mxu0 0.0
    %1950 = vmatprep.subr.mxu0 0.0
    %1951 = vmatpush1.msra.mxu0 0.0
    %1952 = vmatprep.subr.mxu0 0.0
    %1953 = vmatpush1.msra.mxu0 0.0
    %1954 = vmatprep.subr.mxu0 0.0
    %1955 = vmatpush1.msra.mxu0 0.0
    %1956 = vmatprep.mubr.f32.mxu0 0.0
    %1957 = vmatmul.mubr.f32.gmra.mrb[0].mxu0 %v1861
    %v1958 = vpop.f32.mrb[0].mxu0
    %v1959 = vadd.f32 %v1890, %v1958
    %v1960 = vpop.f32.mrb[0].mxu0
    %1961 = vmatprep.mubr.f32.mxu0 0.0
    %1962 = vmatmul.mubr.f32.gmra.mrb[0].mxu0 %v1862
    %v1963 = vpop.f32.mrb[0].mxu0
    %v1964 = vadd.f32 %v1890, %v1963
    %v1965 = vpop.f32.mrb[0].mxu0
    %1966 = vmatprep.mubr.f32.mxu0 0.0
    %1967 = vmatmul.mubr.f32.gmra.mrb[0].mxu0 %v1863
    %v1968 = vpop.f32.mrb[0].mxu0
    %v1969 = vadd.f32 %v1890, %v1968
    %v1970 = vpop.f32.mrb[0].mxu0
    %1971 = vmatprep.mubr.f32.mxu0 0.0
    %1972 = vmatmul.mubr.f32.gmra.mrb[0].mxu0 %v1864
    %v1973 = vpop.f32.mrb[0].mxu0
    %v1974 = vadd.f32 %v1890, %v1973
    %v1975 = vpop.f32.mrb[0].mxu0
    %1976 = vmatprep.mubr.f32.mxu0 0.0
    %1977 = vmatmul.mubr.f32.gmra.mrb[0].mxu0 %v1865
    %v1978 = vpop.f32.mrb[0].mxu0
    %v1979 = vadd.f32 %v1890, %v1978
    %v1980 = vpop.f32.mrb[0].mxu0
    %1981 = vmatprep.mubr.f32.mxu0 0.0
    %1982 = vmatmul.mubr.f32.gmra.mrb[0].mxu0 %v1866
    %v1983 = vpop.f32.mrb[0].mxu0
    %v1984 = vadd.f32 %v1890, %v1983
    %v1985 = vpop.f32.mrb[0].mxu0
    %1986 = vmatprep.mubr.f32.mxu0 0.0
    %1987 = vmatmul.mubr.f32.gmra.mrb[0].mxu0 %v1867
    %v1988 = vpop.f32.mrb[0].mxu0
    %v1989 = vadd.f32 %v1890, %v1988
    %v1990 = vpop.f32.mrb[0].mxu0
    %1991 = vmatprep.mubr.f32.mxu0 0.0
    %1992 = vmatmul.mubr.f32.gmra.mrb[0].mxu0 %v1868
    %v1993 = vpop.f32.mrb[0].mxu0
    %v1994 = vadd.f32 %v1890, %v1993
    %v1995 = vpop.f32.mrb[0].mxu0
    %1996 = vdwg.mxu0
    %1997 = vst [vmem:[#allocation11] sm:$0xff] %v1959
    %1998 = vst [vmem:[#allocation11 + $0x8] sm:$0xff] %v1964
    %1999 = vst [vmem:[#allocation11 + $0x10] sm:$0xff] %v1969
    %2000 = vst [vmem:[#allocation11 + $0x18] sm:$0xff] %v1974
    %2001 = vst [vmem:[#allocation11 + $0x20] sm:$0xff] %v1979
    %2002 = vst [vmem:[#allocation11 + $0x28] sm:$0xff] %v1984
    %2003 = vst [vmem:[#allocation11 + $0x30] sm:$0xff] %v1989
    %2004 = vst [vmem:[#allocation11 + $0x38] sm:$0xff] %v1994
    // Predicated region
    $region38: #{tpu_custom_call.1} parent=1 // pred_check
      _
    $region39: #{tpu_custom_call.1} parent=1 // pred_check_branch
      %2006 = sbr.rel (0) target = $region41
    $region40: #{tpu_custom_call.1} parent=1 // pred_region
      %s2007 = sadd.s32 0, 0
      %s2008 = smul.u32 8, %s2007
      %s2010 = ssub.s32 1024, 1024
      %2011 = vsyncadd [#allocation8], %s2010
      %s2012 = smul.addr %s2008, 128
      %s2013 = scalar_lea.hbm %s6, %s2012
      %s2014 = sshll.u32 [#allocation11], 4
      %s2015 = int_to_ptr.vmem [resolvable:$true] %s2014
      %2020 = dma.vmem_to_hbm [thread:$0]  %s2015, 1024, %s2013, [#allocation8], 128, 128, 8
    $region41: #{tpu_custom_call.1} parent=1 // pred_fallthru
      _
    // Predicated region
    $region42: #{tpu_custom_call.1} parent=1 // pred_check
      _
    $region43: #{tpu_custom_call.1} parent=1 // pred_check_branch
      %2022 = sbr.rel (0) target = $region45
    $region44: #{tpu_custom_call.1} parent=1 // pred_region
      %2023 = dma.done [#allocation8], 1024
    $region45: #{tpu_custom_call.1} parent=1 // pred_fallthru
      _
    %2024 = vsyncpa [#allocation7], 1
    %2025 = vsyncpa [#allocation10], 1
    %2026 = vsyncpa [#allocation8], 1

</llo_original>
